<compile_context>
chip_gen: v7x
topology: tpu7x:2x2x1
jax: 0.10.0
libtpu: 0.0.40
codegen_flags: <defaults>
</compile_context>

<pallas_src>
import jax
import jax.numpy as jnp
from jax import lax
from jax.experimental import pallas as pl
from jax.experimental.pallas import tpu as pltpu

# ----- module-consistent (small) sizes --------------------------------------
EMBEDDING_SIZE = 32      # word embedding dim
VOCAB_SIZE     = 50
SEQ_LEN        = 8
BATCH          = 2
REGIONS        = 49      # 7x7 VGG feature map -> 49 regions
FEAT           = 512     # VGG channel count (hard-coded by ImageEmbedding.fc)
EMB            = 128     # emb_size (d)
ATT_K          = 64      # att_ff_size (k)
OUT            = 10      # output_size
NUM_ATT_LAYERS = 1       # ModuleList([Attention]*n) repeats ONE module -> shared weights

BP = 8                   # LSTM batch rows padded to a full sublane group
BR = BATCH * REGIONS     # 98 flattened image regions (left unpadded; compiler masks)
H4 = 4 * EMB             # fused LSTM gate width


def _full_spec(shape):
    nd = len(shape)
    return pl.BlockSpec(shape, lambda i, nd=nd: (0,) * nd)


# ----------------------- fused SAN forward kernel ---------------------------
def _san_kernel(img_ref, tids_ref, wemb_ref,
                wfc_ref, bfc_ref,
                wih_ref, whh_ref, blstm_ref,
                wimg_ref, bimg_ref, wtxt_ref, btxt_ref, watt_ref, batt_ref,
                w1_ref, b1_ref, w2_ref, b2_ref,
                o_ref, xproj_ref):
    f32, bf16 = jnp.float32, jnp.bfloat16

    # ---- stage 1: image fc + tanh (whole batch, lane-dense) -----------------
    vi = jnp.tanh(
        jnp.dot(img_ref[...].astype(bf16), wfc_ref[...].astype(bf16),
                preferred_element_type=f32) + bfc_ref[...])            # (BR, EMB)

    # ---- stage 2: in-kernel embedding gather + hoisted LSTM input proj ------
    # One-hot matmul gather; pad token id == VOCAB_SIZE -> all-zero row.
    tids = tids_ref[...]                                               # (T*BP, 1) int32
    vocab_iota = lax.broadcasted_iota(jnp.int32, (SEQ_LEN * BP, VOCAB_SIZE), 1)
    onehot = jnp.where(vocab_iota == tids, 1.0, 0.0).astype(bf16)      # (T*BP, V)
    xemb = jnp.dot(onehot, wemb_ref[...].astype(bf16),
                   preferred_element_type=f32)                         # (T*BP, E)
    # x_t @ W_ih (+ fused bias) for all timesteps in a single matmul.
    xproj_ref[...] = (jnp.dot(xemb.astype(bf16), wih_ref[...].astype(bf16),
                              preferred_element_type=f32)
                      + blstm_ref[...])                                # (T*BP, 4H)

    # ---- stage 3: LSTM recurrence (only h @ W_hh is serial) -----------------
    whh = whh_ref[...].astype(bf16)

    def lstm_step(t, carry):
        h, c = carry
        start = pl.multiple_of(t * BP, BP)
        gates = xproj_ref[pl.ds(start, BP), :] + jnp.dot(
            h.astype(bf16), whh, preferred_element_type=f32)           # (BP, 4H)
        i_g = jax.nn.sigmoid(gates[:, 0:EMB])
        f_g = jax.nn.sigmoid(gates[:, EMB:2 * EMB])
        g_g = jnp.tanh(gates[:, 2 * EMB:3 * EMB])
        o_g = jax.nn.sigmoid(gates[:, 3 * EMB:4 * EMB])
        c = f_g * c + i_g * g_g
        h = o_g * jnp.tanh(c)
        return (h, c)

    h0 = jnp.zeros((BP, EMB), f32)
    c0 = jnp.zeros((BP, EMB), f32)
    h, _ = lax.fori_loop(0, SEQ_LEN, lstm_step, (h0, c0), unroll=True)
    u = h[:BATCH, :]                                                   # (B, EMB)

    # ---- stage 4: stacked attention (batched, lane-dense score path) --------
    # 0/1 segment (batch-selector) matrices built from iota; per-batch broadcast,
    # segmented softmax sums and weighted region sum are all MXU matmuls.
    i_l = lax.broadcasted_iota(jnp.int32, (BATCH, BR), 1)
    b_s = lax.broadcasted_iota(jnp.int32, (BATCH, BR), 0)
    seg_t = jnp.where((i_l >= b_s * REGIONS) & (i_l < (b_s + 1) * REGIONS),
                      1.0, 0.0)                                        # S^T (B, BR)
    i_s = lax.broadcasted_iota(jnp.int32, (BR, BATCH), 0)
    b_l = lax.broadcasted_iota(jnp.int32, (BR, BATCH), 1)
    seg = jnp.where((i_s >= b_l * REGIONS) & (i_s < (b_l + 1) * REGIONS),
                    1.0, 0.0)                                          # S (BR, B)

    wimg = wimg_ref[...].astype(bf16)
    wtxt = wtxt_ref[...].astype(bf16)
    watt = watt_ref[...]                                               # (1, K)
    hi = jnp.dot(vi.astype(bf16), wimg,
                 preferred_element_type=f32) + bimg_ref[...]           # (BR, K)

    def att_layer(_, u):
        hq = jnp.dot(u.astype(bf16), wtxt,
                     preferred_element_type=f32) + btxt_ref[...]       # (B, K)
        hq_flat = jnp.dot(seg, hq, preferred_element_type=f32)         # (BR, K) broadcast-by-matmul
        ha = jnp.tanh(hi + hq_flat)                                    # (BR, K); dropout = identity
        # Lane-dense scores: (1, K) . (BR, K)^T -> (1, BR), regions on the lane axis.
        scores = lax.dot_general(watt, ha, (((1,), (1,)), ((), ())),
                                 preferred_element_type=f32) + batt_ref[...]
        m = jnp.max(scores)                                            # shared shift (softmax-invariant)
        e = jnp.exp(scores - m)                                        # (1, BR)
        ssum = jnp.dot(e, seg, preferred_element_type=f32)             # (1, B)  per-batch sums
        denom = jnp.dot(ssum, seg_t, preferred_element_type=f32)       # (1, BR) back onto lanes
        pi = e * pl.reciprocal(denom, approx=True)                     # softmax over regions
        att_w = seg_t * pi                                             # (B, BR) block-diagonal weights
        vi_att = jnp.dot(att_w, vi, preferred_element_type=f32)        # (B, EMB) weighted region sum
        return vi_att + u

    u = lax.fori_loop(0, NUM_ATT_LAYERS, att_layer, u, unroll=True)

    # ---- stage 5: MLP head ---------------------------------------------------
    h1 = jnp.maximum(
        jnp.dot(u.astype(bf16), w1_ref[...].astype(bf16),
                preferred_element_type=f32) + b1_ref[...], 0.0)        # (B, 128); dropout = identity
    o_ref[...] = jnp.dot(h1.astype(bf16), w2_ref[...].astype(bf16),
                         preferred_element_type=f32) + b2_ref[...]     # (B, OUT)


def san_forward(image_feats, texts, p):
    B, R, C = image_feats.shape
    img_flat = image_feats.reshape(B * R, C)

    # Time-major, sublane-padded token ids; pad id VOCAB_SIZE -> zero one-hot row.
    tids = jnp.full((SEQ_LEN, BP), VOCAB_SIZE, jnp.int32)
    tids = tids.at[:, :B].set(texts.T.astype(jnp.int32))
    tids = tids.reshape(SEQ_LEN * BP, 1)

    watt_row = p['att_watt'].reshape(1, ATT_K)

    operands = (img_flat, tids, p['word_emb'],
                p['img_fc_w'], p['img_fc_b'],
                p['lstm_wih'], p['lstm_whh'], p['lstm_b'],
                p['att_wimg'], p['att_bimg'], p['att_wtxt'], p['att_btxt'],
                watt_row, p['att_batt'],
                p['mlp_w1'], p['mlp_b1'], p['mlp_w2'], p['mlp_b2'])

    return pl.pallas_call(
        _san_kernel,
        out_shape=jax.ShapeDtypeStruct((B, OUT), jnp.float32),
        grid=(1,),
        in_specs=[_full_spec(x.shape) for x in operands],
        out_specs=_full_spec((B, OUT)),
        scratch_shapes=[pltpu.VMEM((SEQ_LEN * BP, H4), jnp.float32)],
        compiler_params=pltpu.CompilerParams(dimension_semantics=("arbitrary",)),
    )(*operands)


# ----------------------- params / reference ---------------------------------
def init_params(key):
    ks = jax.random.split(key, 16)
    s = 0.05
    p = {}
    p['word_emb'] = jax.random.normal(ks[0], (VOCAB_SIZE, EMBEDDING_SIZE), jnp.float32) * s
    p['img_fc_w'] = jax.random.normal(ks[1], (FEAT, EMB), jnp.float32) * s
    p['img_fc_b'] = jax.random.normal(ks[2], (1, EMB), jnp.float32) * s
    p['lstm_wih'] = jax.random.normal(ks[3], (EMBEDDING_SIZE, 4 * EMB), jnp.float32) * s
    p['lstm_whh'] = jax.random.normal(ks[4], (EMB, 4 * EMB), jnp.float32) * s
    p['lstm_b']   = jax.random.normal(ks[5], (1, 4 * EMB), jnp.float32) * s  # = b_ih + b_hh fused
    p['att_wimg'] = jax.random.normal(ks[6], (EMB, ATT_K), jnp.float32) * s
    p['att_bimg'] = jax.random.normal(ks[7], (1, ATT_K), jnp.float32) * s
    p['att_wtxt'] = jax.random.normal(ks[8], (EMB, ATT_K), jnp.float32) * s
    p['att_btxt'] = jax.random.normal(ks[9], (1, ATT_K), jnp.float32) * s
    p['att_watt'] = jax.random.normal(ks[10], (ATT_K, 1), jnp.float32) * s
    p['att_batt'] = jax.random.normal(ks[11], (1, 1), jnp.float32) * s
    p['mlp_w1']   = jax.random.normal(ks[12], (EMB, 128), jnp.float32) * s
    p['mlp_b1']   = jax.random.normal(ks[13], (1, 128), jnp.float32) * s
    p['mlp_w2']   = jax.random.normal(ks[14], (128, OUT), jnp.float32) * s
    p['mlp_b2']   = jax.random.normal(ks[15], (1, OUT), jnp.float32) * s
    return p


def san_reference(image_feats, texts, p):
    """Pure-JAX fp32 reference mirroring the PyTorch forward (eval mode)."""
    B = image_feats.shape[0]
    vi = jnp.tanh(image_feats @ p['img_fc_w'] + p['img_fc_b'][0])
    embeds = jnp.take(p['word_emb'], texts, axis=0)
    x = jnp.transpose(embeds, (1, 0, 2))
    H = EMB
    h = jnp.zeros((B, H), jnp.float32)
    c = jnp.zeros((B, H), jnp.float32)
    for t in range(SEQ_LEN):
        gates = x[t] @ p['lstm_wih'] + h @ p['lstm_whh'] + p['lstm_b'][0]
        i_g = jax.nn.sigmoid(gates[:, :H])
        f_g = jax.nn.sigmoid(gates[:, H:2 * H])
        g_g = jnp.tanh(gates[:, 2 * H:3 * H])
        o_g = jax.nn.sigmoid(gates[:, 3 * H:4 * H])
        c = f_g * c + i_g * g_g
        h = o_g * jnp.tanh(c)
    u = h
    for _ in range(NUM_ATT_LAYERS):
        hi = vi @ p['att_wimg'] + p['att_bimg'][0]
        hq = (u @ p['att_wtxt'] + p['att_btxt'][0])[:, None, :]
        ha = jnp.tanh(hi + hq)
        scores = (ha @ p['att_watt'] + p['att_batt'][0])[..., 0]
        pi = jax.nn.softmax(scores, axis=1)
        vi_att = jnp.sum(pi[..., None] * vi, axis=1)
        u = vi_att + u
    h1 = jnp.maximum(u @ p['mlp_w1'] + p['mlp_b1'][0], 0.0)
    return h1 @ p['mlp_w2'] + p['mlp_b2'][0]


if __name__ == "__main__":
    key = jax.random.PRNGKey(0)
    k_img, k_txt, k_param = jax.random.split(key, 3)
    image_feats = jax.random.normal(k_img, (BATCH, REGIONS, FEAT), jnp.float32)
    texts = jax.random.randint(k_txt, (BATCH, SEQ_LEN), 0, VOCAB_SIZE, jnp.int32)
    params = init_params(k_param)

    fwd = jax.jit(san_forward)
    out = jax.block_until_ready(fwd(image_feats, texts, params))
    assert out.shape == (BATCH, OUT), out.shape

    ref = jax.block_until_ready(san_reference(image_feats, texts, params))
    # bf16 MXU operands (fp32 accumulation) vs. fp32 reference -> 2e-2 tolerance.
    assert jnp.allclose(out, ref, rtol=2e-2, atol=2e-2), (
        float(jnp.max(jnp.abs(out - ref))))

    print("KERNEL_OK")
</pallas_src>

<mosaic_0001>
module attributes {stable_mosaic.version = 11 : i64} {
  func.func @_san_kernel(%arg0: i32, %arg1: memref<98x512xf32, #tpu.memory_space<vmem>>, %arg2: memref<64x1xi32, #tpu.memory_space<vmem>>, %arg3: memref<50x32xf32, #tpu.memory_space<vmem>>, %arg4: memref<512x128xf32, #tpu.memory_space<vmem>>, %arg5: memref<1x128xf32, #tpu.memory_space<vmem>>, %arg6: memref<32x512xf32, #tpu.memory_space<vmem>>, %arg7: memref<128x512xf32, #tpu.memory_space<vmem>>, %arg8: memref<1x512xf32, #tpu.memory_space<vmem>>, %arg9: memref<128x64xf32, #tpu.memory_space<vmem>>, %arg10: memref<1x64xf32, #tpu.memory_space<vmem>>, %arg11: memref<128x64xf32, #tpu.memory_space<vmem>>, %arg12: memref<1x64xf32, #tpu.memory_space<vmem>>, %arg13: memref<1x64xf32, #tpu.memory_space<vmem>>, %arg14: memref<1x1xf32, #tpu.memory_space<vmem>>, %arg15: memref<128x128xf32, #tpu.memory_space<vmem>>, %arg16: memref<1x128xf32, #tpu.memory_space<vmem>>, %arg17: memref<128x10xf32, #tpu.memory_space<vmem>>, %arg18: memref<1x10xf32, #tpu.memory_space<vmem>>, %arg19: memref<2x10xf32, #tpu.memory_space<vmem>>, %arg20: memref<64x512xf32, #tpu.memory_space<vmem>>) attributes {dimension_semantics = [#tpu.dimension_semantics<arbitrary>], iteration_bounds = array<i64: 1>, scalar_prefetch = 0 : i64, scratch_operands = 1 : i64, tpu.core_type = #tpu.core_type<tc>, window_params = [{pipeline_mode = #tpu.pipeline_mode<synchronous>, transform_indices = @transform_0, window_bounds = array<i64: 98, 512>}, {pipeline_mode = #tpu.pipeline_mode<synchronous>, transform_indices = @transform_1, window_bounds = array<i64: 64, 1>}, {pipeline_mode = #tpu.pipeline_mode<synchronous>, transform_indices = @transform_2, window_bounds = array<i64: 50, 32>}, {pipeline_mode = #tpu.pipeline_mode<synchronous>, transform_indices = @transform_3, window_bounds = array<i64: 512, 128>}, {pipeline_mode = #tpu.pipeline_mode<synchronous>, transform_indices = @transform_4, window_bounds = array<i64: 1, 128>}, {pipeline_mode = #tpu.pipeline_mode<synchronous>, transform_indices = @transform_5, window_bounds = array<i64: 32, 512>}, {pipeline_mode = #tpu.pipeline_mode<synchronous>, transform_indices = @transform_6, window_bounds = array<i64: 128, 512>}, {pipeline_mode = #tpu.pipeline_mode<synchronous>, transform_indices = @transform_7, window_bounds = array<i64: 1, 512>}, {pipeline_mode = #tpu.pipeline_mode<synchronous>, transform_indices = @transform_8, window_bounds = array<i64: 128, 64>}, {pipeline_mode = #tpu.pipeline_mode<synchronous>, transform_indices = @transform_9, window_bounds = array<i64: 1, 64>}, {pipeline_mode = #tpu.pipeline_mode<synchronous>, transform_indices = @transform_10, window_bounds = array<i64: 128, 64>}, {pipeline_mode = #tpu.pipeline_mode<synchronous>, transform_indices = @transform_11, window_bounds = array<i64: 1, 64>}, {pipeline_mode = #tpu.pipeline_mode<synchronous>, transform_indices = @transform_12, window_bounds = array<i64: 1, 64>}, {pipeline_mode = #tpu.pipeline_mode<synchronous>, transform_indices = @transform_13, window_bounds = array<i64: 1, 1>}, {pipeline_mode = #tpu.pipeline_mode<synchronous>, transform_indices = @transform_14, window_bounds = array<i64: 128, 128>}, {pipeline_mode = #tpu.pipeline_mode<synchronous>, transform_indices = @transform_15, window_bounds = array<i64: 1, 128>}, {pipeline_mode = #tpu.pipeline_mode<synchronous>, transform_indices = @transform_16, window_bounds = array<i64: 128, 10>}, {pipeline_mode = #tpu.pipeline_mode<synchronous>, transform_indices = @transform_17, window_bounds = array<i64: 1, 10>}, {pipeline_mode = #tpu.pipeline_mode<synchronous>, transform_indices = @transform_18, window_bounds = array<i64: 2, 10>}]} {
    %c0 = arith.constant 0 : index
    %c0_0 = arith.constant 0 : index
    %0 = vector.load %arg1[%c0, %c0_0] : memref<98x512xf32, #tpu.memory_space<vmem>>, vector<98x512xf32>
    %1 = arith.truncf %0 : vector<98x512xf32> to vector<98x512xbf16>
    %c0_1 = arith.constant 0 : index
    %c0_2 = arith.constant 0 : index
    %2 = vector.load %arg4[%c0_1, %c0_2] : memref<512x128xf32, #tpu.memory_space<vmem>>, vector<512x128xf32>
    %3 = arith.truncf %2 : vector<512x128xf32> to vector<512x128xbf16>
    %cst = arith.constant dense<0.000000e+00> : vector<98x128xf32>
    %4 = tpu.matmul %1, %3, %cst {dimension_numbers = #tpu.dot_dimension_numbers<[1], [0], [0], [1], [0, 0, 1, 1], [], []>} : vector<98x512xbf16>, vector<512x128xbf16>, vector<98x128xf32> -> vector<98x128xf32>
    %c0_3 = arith.constant 0 : index
    %c0_4 = arith.constant 0 : index
    %5 = vector.load %arg5[%c0_3, %c0_4] : memref<1x128xf32, #tpu.memory_space<vmem>>, vector<1x128xf32>
    %6 = vector.broadcast %5 : vector<1x128xf32> to vector<98x128xf32>
    %7 = arith.addf %4, %6 : vector<98x128xf32>
    %8 = math.tanh %7 : vector<98x128xf32>
    %c0_5 = arith.constant 0 : index
    %c0_6 = arith.constant 0 : index
    %9 = vector.load %arg2[%c0_5, %c0_6] : memref<64x1xi32, #tpu.memory_space<vmem>>, vector<64x1xi32>
    %10 = tpu.iota {dimensions = array<i32: 1>} : vector<64x50xi32>
    %11 = vector.broadcast %9 : vector<64x1xi32> to vector<64x50xi32>
    %12 = arith.cmpi eq, %10, %11 : vector<64x50xi32>
    %cst_7 = arith.constant 1.000000e+00 : f32
    %cst_8 = arith.constant 0.000000e+00 : f32
    %13 = vector.broadcast %cst_7 : f32 to vector<64x50xf32>
    %14 = vector.broadcast %cst_8 : f32 to vector<64x50xf32>
    %15 = arith.select %12, %13, %14 : vector<64x50xi1>, vector<64x50xf32>
    %16 = arith.truncf %15 : vector<64x50xf32> to vector<64x50xbf16>
    %c0_9 = arith.constant 0 : index
    %c0_10 = arith.constant 0 : index
    %17 = vector.load %arg3[%c0_9, %c0_10] : memref<50x32xf32, #tpu.memory_space<vmem>>, vector<50x32xf32>
    %18 = arith.truncf %17 : vector<50x32xf32> to vector<50x32xbf16>
    %cst_11 = arith.constant dense<0.000000e+00> : vector<64x32xf32>
    %19 = tpu.matmul %16, %18, %cst_11 {dimension_numbers = #tpu.dot_dimension_numbers<[1], [0], [0], [1], [0, 0, 1, 1], [], []>} : vector<64x50xbf16>, vector<50x32xbf16>, vector<64x32xf32> -> vector<64x32xf32>
    %20 = arith.truncf %19 : vector<64x32xf32> to vector<64x32xbf16>
    %c0_12 = arith.constant 0 : index
    %c0_13 = arith.constant 0 : index
    %21 = vector.load %arg6[%c0_12, %c0_13] : memref<32x512xf32, #tpu.memory_space<vmem>>, vector<32x512xf32>
    %22 = arith.truncf %21 : vector<32x512xf32> to vector<32x512xbf16>
    %cst_14 = arith.constant dense<0.000000e+00> : vector<64x512xf32>
    %23 = tpu.matmul %20, %22, %cst_14 {dimension_numbers = #tpu.dot_dimension_numbers<[1], [0], [0], [1], [0, 0, 1, 1], [], []>} : vector<64x32xbf16>, vector<32x512xbf16>, vector<64x512xf32> -> vector<64x512xf32>
    %c0_15 = arith.constant 0 : index
    %c0_16 = arith.constant 0 : index
    %24 = vector.load %arg8[%c0_15, %c0_16] : memref<1x512xf32, #tpu.memory_space<vmem>>, vector<1x512xf32>
    %25 = vector.broadcast %24 : vector<1x512xf32> to vector<64x512xf32>
    %26 = arith.addf %23, %25 : vector<64x512xf32>
    %c0_17 = arith.constant 0 : index
    %c0_18 = arith.constant 0 : index
    %27 = vector.load %arg20[%c0_17, %c0_18] : memref<64x512xf32, #tpu.memory_space<vmem>>, vector<64x512xf32>
    tpu.vector_store %arg20[%c0_17, %c0_18], %26 {strides = array<i32>} : memref<64x512xf32, #tpu.memory_space<vmem>>, vector<64x512xf32>,
    %c0_19 = arith.constant 0 : index
    %c0_20 = arith.constant 0 : index
    %28 = vector.load %arg7[%c0_19, %c0_20] : memref<128x512xf32, #tpu.memory_space<vmem>>, vector<128x512xf32>
    %29 = arith.truncf %28 : vector<128x512xf32> to vector<128x512xbf16>
    %cst_21 = arith.constant 0.000000e+00 : f32
    %30 = vector.broadcast %cst_21 : f32 to vector<8x128xf32>
    %cst_22 = arith.constant 0.000000e+00 : f32
    %31 = vector.broadcast %cst_22 : f32 to vector<8x128xf32>
    %c0_i32 = arith.constant 0 : i32
    %c8_i32 = arith.constant 8 : i32
    %32 = arith.muli %c0_i32, %c8_i32 : i32
    %33 = tpu.assume_multiple %32, 8 : i32
    %34 = arith.index_cast %33 : i32 to index
    %c0_23 = arith.constant 0 : index
    %35 = vector.load %arg20[%34, %c0_23] : memref<64x512xf32, #tpu.memory_space<vmem>>, vector<8x512xf32>
    %36 = arith.truncf %30 : vector<8x128xf32> to vector<8x128xbf16>
    %cst_24 = arith.constant dense<0.000000e+00> : vector<8x512xf32>
    %37 = tpu.matmul %36, %29, %cst_24 {dimension_numbers = #tpu.dot_dimension_numbers<[1], [0], [0], [1], [0, 0, 1, 1], [], []>} : vector<8x128xbf16>, vector<128x512xbf16>, vector<8x512xf32> -> vector<8x512xf32>
    %38 = arith.addf %35, %37 : vector<8x512xf32>
    %39 = vector.extract_strided_slice %38 {offsets = [0, 0], sizes = [8, 128], strides = [1, 1]} : vector<8x512xf32> to vector<8x128xf32>
    %40 = arith.negf %39 : vector<8x128xf32>
    %41 = math.exp %40 : vector<8x128xf32>
    %cst_25 = arith.constant 1.000000e+00 : f32
    %42 = vector.broadcast %cst_25 : f32 to vector<8x128xf32>
    %43 = arith.addf %42, %41 : vector<8x128xf32>
    %44 = arith.divf %42, %43 : vector<8x128xf32>
    %45 = vector.extract_strided_slice %38 {offsets = [0, 128], sizes = [8, 128], strides = [1, 1]} : vector<8x512xf32> to vector<8x128xf32>
    %46 = arith.negf %45 : vector<8x128xf32>
    %47 = math.exp %46 : vector<8x128xf32>
    %cst_26 = arith.constant 1.000000e+00 : f32
    %48 = vector.broadcast %cst_26 : f32 to vector<8x128xf32>
    %49 = arith.addf %48, %47 : vector<8x128xf32>
    %50 = arith.divf %48, %49 : vector<8x128xf32>
    %51 = vector.extract_strided_slice %38 {offsets = [0, 256], sizes = [8, 128], strides = [1, 1]} : vector<8x512xf32> to vector<8x128xf32>
    %52 = math.tanh %51 : vector<8x128xf32>
    %53 = vector.extract_strided_slice %38 {offsets = [0, 384], sizes = [8, 128], strides = [1, 1]} : vector<8x512xf32> to vector<8x128xf32>
    %54 = arith.negf %53 : vector<8x128xf32>
    %55 = math.exp %54 : vector<8x128xf32>
    %cst_27 = arith.constant 1.000000e+00 : f32
    %56 = vector.broadcast %cst_27 : f32 to vector<8x128xf32>
    %57 = arith.addf %56, %55 : vector<8x128xf32>
    %58 = arith.divf %56, %57 : vector<8x128xf32>
    %59 = arith.mulf %50, %31 : vector<8x128xf32>
    %60 = arith.mulf %44, %52 : vector<8x128xf32>
    %61 = arith.addf %59, %60 : vector<8x128xf32>
    %62 = math.tanh %61 : vector<8x128xf32>
    %63 = arith.mulf %58, %62 : vector<8x128xf32>
    %c1_i32 = arith.constant 1 : i32
    %c8_i32_28 = arith.constant 8 : i32
    %64 = arith.muli %c1_i32, %c8_i32_28 : i32
    %65 = tpu.assume_multiple %64, 8 : i32
    %66 = arith.index_cast %65 : i32 to index
    %c0_29 = arith.constant 0 : index
    %67 = vector.load %arg20[%66, %c0_29] : memref<64x512xf32, #tpu.memory_space<vmem>>, vector<8x512xf32>
    %68 = arith.truncf %63 : vector<8x128xf32> to vector<8x128xbf16>
    %cst_30 = arith.constant dense<0.000000e+00> : vector<8x512xf32>
    %69 = tpu.matmul %68, %29, %cst_30 {dimension_numbers = #tpu.dot_dimension_numbers<[1], [0], [0], [1], [0, 0, 1, 1], [], []>} : vector<8x128xbf16>, vector<128x512xbf16>, vector<8x512xf32> -> vector<8x512xf32>
    %70 = arith.addf %67, %69 : vector<8x512xf32>
    %71 = vector.extract_strided_slice %70 {offsets = [0, 0], sizes = [8, 128], strides = [1, 1]} : vector<8x512xf32> to vector<8x128xf32>
    %72 = arith.negf %71 : vector<8x128xf32>
    %73 = math.exp %72 : vector<8x128xf32>
    %cst_31 = arith.constant 1.000000e+00 : f32
    %74 = vector.broadcast %cst_31 : f32 to vector<8x128xf32>
    %75 = arith.addf %74, %73 : vector<8x128xf32>
    %76 = arith.divf %74, %75 : vector<8x128xf32>
    %77 = vector.extract_strided_slice %70 {offsets = [0, 128], sizes = [8, 128], strides = [1, 1]} : vector<8x512xf32> to vector<8x128xf32>
    %78 = arith.negf %77 : vector<8x128xf32>
    %79 = math.exp %78 : vector<8x128xf32>
    %cst_32 = arith.constant 1.000000e+00 : f32
    %80 = vector.broadcast %cst_32 : f32 to vector<8x128xf32>
    %81 = arith.addf %80, %79 : vector<8x128xf32>
    %82 = arith.divf %80, %81 : vector<8x128xf32>
    %83 = vector.extract_strided_slice %70 {offsets = [0, 256], sizes = [8, 128], strides = [1, 1]} : vector<8x512xf32> to vector<8x128xf32>
    %84 = math.tanh %83 : vector<8x128xf32>
    %85 = vector.extract_strided_slice %70 {offsets = [0, 384], sizes = [8, 128], strides = [1, 1]} : vector<8x512xf32> to vector<8x128xf32>
    %86 = arith.negf %85 : vector<8x128xf32>
    %87 = math.exp %86 : vector<8x128xf32>
    %cst_33 = arith.constant 1.000000e+00 : f32
    %88 = vector.broadcast %cst_33 : f32 to vector<8x128xf32>
    %89 = arith.addf %88, %87 : vector<8x128xf32>
    %90 = arith.divf %88, %89 : vector<8x128xf32>
    %91 = arith.mulf %82, %61 : vector<8x128xf32>
    %92 = arith.mulf %76, %84 : vector<8x128xf32>
    %93 = arith.addf %91, %92 : vector<8x128xf32>
    %94 = math.tanh %93 : vector<8x128xf32>
    %95 = arith.mulf %90, %94 : vector<8x128xf32>
    %c2_i32 = arith.constant 2 : i32
    %c8_i32_34 = arith.constant 8 : i32
    %96 = arith.muli %c2_i32, %c8_i32_34 : i32
    %97 = tpu.assume_multiple %96, 8 : i32
    %98 = arith.index_cast %97 : i32 to index
    %c0_35 = arith.constant 0 : index
    %99 = vector.load %arg20[%98, %c0_35] : memref<64x512xf32, #tpu.memory_space<vmem>>, vector<8x512xf32>
    %100 = arith.truncf %95 : vector<8x128xf32> to vector<8x128xbf16>
    %cst_36 = arith.constant dense<0.000000e+00> : vector<8x512xf32>
    %101 = tpu.matmul %100, %29, %cst_36 {dimension_numbers = #tpu.dot_dimension_numbers<[1], [0], [0], [1], [0, 0, 1, 1], [], []>} : vector<8x128xbf16>, vector<128x512xbf16>, vector<8x512xf32> -> vector<8x512xf32>
    %102 = arith.addf %99, %101 : vector<8x512xf32>
    %103 = vector.extract_strided_slice %102 {offsets = [0, 0], sizes = [8, 128], strides = [1, 1]} : vector<8x512xf32> to vector<8x128xf32>
    %104 = arith.negf %103 : vector<8x128xf32>
    %105 = math.exp %104 : vector<8x128xf32>
    %cst_37 = arith.constant 1.000000e+00 : f32
    %106 = vector.broadcast %cst_37 : f32 to vector<8x128xf32>
    %107 = arith.addf %106, %105 : vector<8x128xf32>
    %108 = arith.divf %106, %107 : vector<8x128xf32>
    %109 = vector.extract_strided_slice %102 {offsets = [0, 128], sizes = [8, 128], strides = [1, 1]} : vector<8x512xf32> to vector<8x128xf32>
    %110 = arith.negf %109 : vector<8x128xf32>
    %111 = math.exp %110 : vector<8x128xf32>
    %cst_38 = arith.constant 1.000000e+00 : f32
    %112 = vector.broadcast %cst_38 : f32 to vector<8x128xf32>
    %113 = arith.addf %112, %111 : vector<8x128xf32>
    %114 = arith.divf %112, %113 : vector<8x128xf32>
    %115 = vector.extract_strided_slice %102 {offsets = [0, 256], sizes = [8, 128], strides = [1, 1]} : vector<8x512xf32> to vector<8x128xf32>
    %116 = math.tanh %115 : vector<8x128xf32>
    %117 = vector.extract_strided_slice %102 {offsets = [0, 384], sizes = [8, 128], strides = [1, 1]} : vector<8x512xf32> to vector<8x128xf32>
    %118 = arith.negf %117 : vector<8x128xf32>
    %119 = math.exp %118 : vector<8x128xf32>
    %cst_39 = arith.constant 1.000000e+00 : f32
    %120 = vector.broadcast %cst_39 : f32 to vector<8x128xf32>
    %121 = arith.addf %120, %119 : vector<8x128xf32>
    %122 = arith.divf %120, %121 : vector<8x128xf32>
    %123 = arith.mulf %114, %93 : vector<8x128xf32>
    %124 = arith.mulf %108, %116 : vector<8x128xf32>
    %125 = arith.addf %123, %124 : vector<8x128xf32>
    %126 = math.tanh %125 : vector<8x128xf32>
    %127 = arith.mulf %122, %126 : vector<8x128xf32>
    %c3_i32 = arith.constant 3 : i32
    %c8_i32_40 = arith.constant 8 : i32
    %128 = arith.muli %c3_i32, %c8_i32_40 : i32
    %129 = tpu.assume_multiple %128, 8 : i32
    %130 = arith.index_cast %129 : i32 to index
    %c0_41 = arith.constant 0 : index
    %131 = vector.load %arg20[%130, %c0_41] : memref<64x512xf32, #tpu.memory_space<vmem>>, vector<8x512xf32>
    %132 = arith.truncf %127 : vector<8x128xf32> to vector<8x128xbf16>
    %cst_42 = arith.constant dense<0.000000e+00> : vector<8x512xf32>
    %133 = tpu.matmul %132, %29, %cst_42 {dimension_numbers = #tpu.dot_dimension_numbers<[1], [0], [0], [1], [0, 0, 1, 1], [], []>} : vector<8x128xbf16>, vector<128x512xbf16>, vector<8x512xf32> -> vector<8x512xf32>
    %134 = arith.addf %131, %133 : vector<8x512xf32>
    %135 = vector.extract_strided_slice %134 {offsets = [0, 0], sizes = [8, 128], strides = [1, 1]} : vector<8x512xf32> to vector<8x128xf32>
    %136 = arith.negf %135 : vector<8x128xf32>
    %137 = math.exp %136 : vector<8x128xf32>
    %cst_43 = arith.constant 1.000000e+00 : f32
    %138 = vector.broadcast %cst_43 : f32 to vector<8x128xf32>
    %139 = arith.addf %138, %137 : vector<8x128xf32>
    %140 = arith.divf %138, %139 : vector<8x128xf32>
    %141 = vector.extract_strided_slice %134 {offsets = [0, 128], sizes = [8, 128], strides = [1, 1]} : vector<8x512xf32> to vector<8x128xf32>
    %142 = arith.negf %141 : vector<8x128xf32>
    %143 = math.exp %142 : vector<8x128xf32>
    %cst_44 = arith.constant 1.000000e+00 : f32
    %144 = vector.broadcast %cst_44 : f32 to vector<8x128xf32>
    %145 = arith.addf %144, %143 : vector<8x128xf32>
    %146 = arith.divf %144, %145 : vector<8x128xf32>
    %147 = vector.extract_strided_slice %134 {offsets = [0, 256], sizes = [8, 128], strides = [1, 1]} : vector<8x512xf32> to vector<8x128xf32>
    %148 = math.tanh %147 : vector<8x128xf32>
    %149 = vector.extract_strided_slice %134 {offsets = [0, 384], sizes = [8, 128], strides = [1, 1]} : vector<8x512xf32> to vector<8x128xf32>
    %150 = arith.negf %149 : vector<8x128xf32>
    %151 = math.exp %150 : vector<8x128xf32>
    %cst_45 = arith.constant 1.000000e+00 : f32
    %152 = vector.broadcast %cst_45 : f32 to vector<8x128xf32>
    %153 = arith.addf %152, %151 : vector<8x128xf32>
    %154 = arith.divf %152, %153 : vector<8x128xf32>
    %155 = arith.mulf %146, %125 : vector<8x128xf32>
    %156 = arith.mulf %140, %148 : vector<8x128xf32>
    %157 = arith.addf %155, %156 : vector<8x128xf32>
    %158 = math.tanh %157 : vector<8x128xf32>
    %159 = arith.mulf %154, %158 : vector<8x128xf32>
    %c4_i32 = arith.constant 4 : i32
    %c8_i32_46 = arith.constant 8 : i32
    %160 = arith.muli %c4_i32, %c8_i32_46 : i32
    %161 = tpu.assume_multiple %160, 8 : i32
    %162 = arith.index_cast %161 : i32 to index
    %c0_47 = arith.constant 0 : index
    %163 = vector.load %arg20[%162, %c0_47] : memref<64x512xf32, #tpu.memory_space<vmem>>, vector<8x512xf32>
    %164 = arith.truncf %159 : vector<8x128xf32> to vector<8x128xbf16>
    %cst_48 = arith.constant dense<0.000000e+00> : vector<8x512xf32>
    %165 = tpu.matmul %164, %29, %cst_48 {dimension_numbers = #tpu.dot_dimension_numbers<[1], [0], [0], [1], [0, 0, 1, 1], [], []>} : vector<8x128xbf16>, vector<128x512xbf16>, vector<8x512xf32> -> vector<8x512xf32>
    %166 = arith.addf %163, %165 : vector<8x512xf32>
    %167 = vector.extract_strided_slice %166 {offsets = [0, 0], sizes = [8, 128], strides = [1, 1]} : vector<8x512xf32> to vector<8x128xf32>
    %168 = arith.negf %167 : vector<8x128xf32>
    %169 = math.exp %168 : vector<8x128xf32>
    %cst_49 = arith.constant 1.000000e+00 : f32
    %170 = vector.broadcast %cst_49 : f32 to vector<8x128xf32>
    %171 = arith.addf %170, %169 : vector<8x128xf32>
    %172 = arith.divf %170, %171 : vector<8x128xf32>
    %173 = vector.extract_strided_slice %166 {offsets = [0, 128], sizes = [8, 128], strides = [1, 1]} : vector<8x512xf32> to vector<8x128xf32>
    %174 = arith.negf %173 : vector<8x128xf32>
    %175 = math.exp %174 : vector<8x128xf32>
    %cst_50 = arith.constant 1.000000e+00 : f32
    %176 = vector.broadcast %cst_50 : f32 to vector<8x128xf32>
    %177 = arith.addf %176, %175 : vector<8x128xf32>
    %178 = arith.divf %176, %177 : vector<8x128xf32>
    %179 = vector.extract_strided_slice %166 {offsets = [0, 256], sizes = [8, 128], strides = [1, 1]} : vector<8x512xf32> to vector<8x128xf32>
    %180 = math.tanh %179 : vector<8x128xf32>
    %181 = vector.extract_strided_slice %166 {offsets = [0, 384], sizes = [8, 128], strides = [1, 1]} : vector<8x512xf32> to vector<8x128xf32>
    %182 = arith.negf %181 : vector<8x128xf32>
    %183 = math.exp %182 : vector<8x128xf32>
    %cst_51 = arith.constant 1.000000e+00 : f32
    %184 = vector.broadcast %cst_51 : f32 to vector<8x128xf32>
    %185 = arith.addf %184, %183 : vector<8x128xf32>
    %186 = arith.divf %184, %185 : vector<8x128xf32>
    %187 = arith.mulf %178, %157 : vector<8x128xf32>
    %188 = arith.mulf %172, %180 : vector<8x128xf32>
    %189 = arith.addf %187, %188 : vector<8x128xf32>
    %190 = math.tanh %189 : vector<8x128xf32>
    %191 = arith.mulf %186, %190 : vector<8x128xf32>
    %c5_i32 = arith.constant 5 : i32
    %c8_i32_52 = arith.constant 8 : i32
    %192 = arith.muli %c5_i32, %c8_i32_52 : i32
    %193 = tpu.assume_multiple %192, 8 : i32
    %194 = arith.index_cast %193 : i32 to index
    %c0_53 = arith.constant 0 : index
    %195 = vector.load %arg20[%194, %c0_53] : memref<64x512xf32, #tpu.memory_space<vmem>>, vector<8x512xf32>
    %196 = arith.truncf %191 : vector<8x128xf32> to vector<8x128xbf16>
    %cst_54 = arith.constant dense<0.000000e+00> : vector<8x512xf32>
    %197 = tpu.matmul %196, %29, %cst_54 {dimension_numbers = #tpu.dot_dimension_numbers<[1], [0], [0], [1], [0, 0, 1, 1], [], []>} : vector<8x128xbf16>, vector<128x512xbf16>, vector<8x512xf32> -> vector<8x512xf32>
    %198 = arith.addf %195, %197 : vector<8x512xf32>
    %199 = vector.extract_strided_slice %198 {offsets = [0, 0], sizes = [8, 128], strides = [1, 1]} : vector<8x512xf32> to vector<8x128xf32>
    %200 = arith.negf %199 : vector<8x128xf32>
    %201 = math.exp %200 : vector<8x128xf32>
    %cst_55 = arith.constant 1.000000e+00 : f32
    %202 = vector.broadcast %cst_55 : f32 to vector<8x128xf32>
    %203 = arith.addf %202, %201 : vector<8x128xf32>
    %204 = arith.divf %202, %203 : vector<8x128xf32>
    %205 = vector.extract_strided_slice %198 {offsets = [0, 128], sizes = [8, 128], strides = [1, 1]} : vector<8x512xf32> to vector<8x128xf32>
    %206 = arith.negf %205 : vector<8x128xf32>
    %207 = math.exp %206 : vector<8x128xf32>
    %cst_56 = arith.constant 1.000000e+00 : f32
    %208 = vector.broadcast %cst_56 : f32 to vector<8x128xf32>
    %209 = arith.addf %208, %207 : vector<8x128xf32>
    %210 = arith.divf %208, %209 : vector<8x128xf32>
    %211 = vector.extract_strided_slice %198 {offsets = [0, 256], sizes = [8, 128], strides = [1, 1]} : vector<8x512xf32> to vector<8x128xf32>
    %212 = math.tanh %211 : vector<8x128xf32>
    %213 = vector.extract_strided_slice %198 {offsets = [0, 384], sizes = [8, 128], strides = [1, 1]} : vector<8x512xf32> to vector<8x128xf32>
    %214 = arith.negf %213 : vector<8x128xf32>
    %215 = math.exp %214 : vector<8x128xf32>
    %cst_57 = arith.constant 1.000000e+00 : f32
    %216 = vector.broadcast %cst_57 : f32 to vector<8x128xf32>
    %217 = arith.addf %216, %215 : vector<8x128xf32>
    %218 = arith.divf %216, %217 : vector<8x128xf32>
    %219 = arith.mulf %210, %189 : vector<8x128xf32>
    %220 = arith.mulf %204, %212 : vector<8x128xf32>
    %221 = arith.addf %219, %220 : vector<8x128xf32>
    %222 = math.tanh %221 : vector<8x128xf32>
    %223 = arith.mulf %218, %222 : vector<8x128xf32>
    %c6_i32 = arith.constant 6 : i32
    %c8_i32_58 = arith.constant 8 : i32
    %224 = arith.muli %c6_i32, %c8_i32_58 : i32
    %225 = tpu.assume_multiple %224, 8 : i32
    %226 = arith.index_cast %225 : i32 to index
    %c0_59 = arith.constant 0 : index
    %227 = vector.load %arg20[%226, %c0_59] : memref<64x512xf32, #tpu.memory_space<vmem>>, vector<8x512xf32>
    %228 = arith.truncf %223 : vector<8x128xf32> to vector<8x128xbf16>
    %cst_60 = arith.constant dense<0.000000e+00> : vector<8x512xf32>
    %229 = tpu.matmul %228, %29, %cst_60 {dimension_numbers = #tpu.dot_dimension_numbers<[1], [0], [0], [1], [0, 0, 1, 1], [], []>} : vector<8x128xbf16>, vector<128x512xbf16>, vector<8x512xf32> -> vector<8x512xf32>
    %230 = arith.addf %227, %229 : vector<8x512xf32>
    %231 = vector.extract_strided_slice %230 {offsets = [0, 0], sizes = [8, 128], strides = [1, 1]} : vector<8x512xf32> to vector<8x128xf32>
    %232 = arith.negf %231 : vector<8x128xf32>
    %233 = math.exp %232 : vector<8x128xf32>
    %cst_61 = arith.constant 1.000000e+00 : f32
    %234 = vector.broadcast %cst_61 : f32 to vector<8x128xf32>
    %235 = arith.addf %234, %233 : vector<8x128xf32>
    %236 = arith.divf %234, %235 : vector<8x128xf32>
    %237 = vector.extract_strided_slice %230 {offsets = [0, 128], sizes = [8, 128], strides = [1, 1]} : vector<8x512xf32> to vector<8x128xf32>
    %238 = arith.negf %237 : vector<8x128xf32>
    %239 = math.exp %238 : vector<8x128xf32>
    %cst_62 = arith.constant 1.000000e+00 : f32
    %240 = vector.broadcast %cst_62 : f32 to vector<8x128xf32>
    %241 = arith.addf %240, %239 : vector<8x128xf32>
    %242 = arith.divf %240, %241 : vector<8x128xf32>
    %243 = vector.extract_strided_slice %230 {offsets = [0, 256], sizes = [8, 128], strides = [1, 1]} : vector<8x512xf32> to vector<8x128xf32>
    %244 = math.tanh %243 : vector<8x128xf32>
    %245 = vector.extract_strided_slice %230 {offsets = [0, 384], sizes = [8, 128], strides = [1, 1]} : vector<8x512xf32> to vector<8x128xf32>
    %246 = arith.negf %245 : vector<8x128xf32>
    %247 = math.exp %246 : vector<8x128xf32>
    %cst_63 = arith.constant 1.000000e+00 : f32
    %248 = vector.broadcast %cst_63 : f32 to vector<8x128xf32>
    %249 = arith.addf %248, %247 : vector<8x128xf32>
    %250 = arith.divf %248, %249 : vector<8x128xf32>
    %251 = arith.mulf %242, %221 : vector<8x128xf32>
    %252 = arith.mulf %236, %244 : vector<8x128xf32>
    %253 = arith.addf %251, %252 : vector<8x128xf32>
    %254 = math.tanh %253 : vector<8x128xf32>
    %255 = arith.mulf %250, %254 : vector<8x128xf32>
    %c7_i32 = arith.constant 7 : i32
    %c8_i32_64 = arith.constant 8 : i32
    %256 = arith.muli %c7_i32, %c8_i32_64 : i32
    %257 = tpu.assume_multiple %256, 8 : i32
    %258 = arith.index_cast %257 : i32 to index
    %c0_65 = arith.constant 0 : index
    %259 = vector.load %arg20[%258, %c0_65] : memref<64x512xf32, #tpu.memory_space<vmem>>, vector<8x512xf32>
    %260 = arith.truncf %255 : vector<8x128xf32> to vector<8x128xbf16>
    %cst_66 = arith.constant dense<0.000000e+00> : vector<8x512xf32>
    %261 = tpu.matmul %260, %29, %cst_66 {dimension_numbers = #tpu.dot_dimension_numbers<[1], [0], [0], [1], [0, 0, 1, 1], [], []>} : vector<8x128xbf16>, vector<128x512xbf16>, vector<8x512xf32> -> vector<8x512xf32>
    %262 = arith.addf %259, %261 : vector<8x512xf32>
    %263 = vector.extract_strided_slice %262 {offsets = [0, 0], sizes = [8, 128], strides = [1, 1]} : vector<8x512xf32> to vector<8x128xf32>
    %264 = arith.negf %263 : vector<8x128xf32>
    %265 = math.exp %264 : vector<8x128xf32>
    %cst_67 = arith.constant 1.000000e+00 : f32
    %266 = vector.broadcast %cst_67 : f32 to vector<8x128xf32>
    %267 = arith.addf %266, %265 : vector<8x128xf32>
    %268 = arith.divf %266, %267 : vector<8x128xf32>
    %269 = vector.extract_strided_slice %262 {offsets = [0, 128], sizes = [8, 128], strides = [1, 1]} : vector<8x512xf32> to vector<8x128xf32>
    %270 = arith.negf %269 : vector<8x128xf32>
    %271 = math.exp %270 : vector<8x128xf32>
    %cst_68 = arith.constant 1.000000e+00 : f32
    %272 = vector.broadcast %cst_68 : f32 to vector<8x128xf32>
    %273 = arith.addf %272, %271 : vector<8x128xf32>
    %274 = arith.divf %272, %273 : vector<8x128xf32>
    %275 = vector.extract_strided_slice %262 {offsets = [0, 256], sizes = [8, 128], strides = [1, 1]} : vector<8x512xf32> to vector<8x128xf32>
    %276 = math.tanh %275 : vector<8x128xf32>
    %277 = vector.extract_strided_slice %262 {offsets = [0, 384], sizes = [8, 128], strides = [1, 1]} : vector<8x512xf32> to vector<8x128xf32>
    %278 = arith.negf %277 : vector<8x128xf32>
    %279 = math.exp %278 : vector<8x128xf32>
    %cst_69 = arith.constant 1.000000e+00 : f32
    %280 = vector.broadcast %cst_69 : f32 to vector<8x128xf32>
    %281 = arith.addf %280, %279 : vector<8x128xf32>
    %282 = arith.divf %280, %281 : vector<8x128xf32>
    %283 = arith.mulf %274, %253 : vector<8x128xf32>
    %284 = arith.mulf %268, %276 : vector<8x128xf32>
    %285 = arith.addf %283, %284 : vector<8x128xf32>
    %286 = math.tanh %285 : vector<8x128xf32>
    %287 = arith.mulf %282, %286 : vector<8x128xf32>
    %c8_i32_70 = arith.constant 8 : i32
    %288 = vector.extract_strided_slice %287 {offsets = [0, 0], sizes = [2, 128], strides = [1, 1]} : vector<8x128xf32> to vector<2x128xf32>
    %289 = tpu.iota {dimensions = array<i32: 1>} : vector<2x98xi32>
    %290 = tpu.iota {dimensions = array<i32: 0>} : vector<2x98xi32>
    %c49_i32 = arith.constant 49 : i32
    %291 = vector.broadcast %c49_i32 : i32 to vector<2x98xi32>
    %292 = arith.muli %290, %291 : vector<2x98xi32>
    %293 = arith.cmpi sge, %289, %292 : vector<2x98xi32>
    %c1_i32_71 = arith.constant 1 : i32
    %294 = vector.broadcast %c1_i32_71 : i32 to vector<2x98xi32>
    %295 = arith.addi %290, %294 : vector<2x98xi32>
    %c49_i32_72 = arith.constant 49 : i32
    %296 = vector.broadcast %c49_i32_72 : i32 to vector<2x98xi32>
    %297 = arith.muli %295, %296 : vector<2x98xi32>
    %298 = arith.cmpi slt, %289, %297 : vector<2x98xi32>
    %299 = arith.andi %293, %298 : vector<2x98xi1>
    %cst_73 = arith.constant 1.000000e+00 : f32
    %cst_74 = arith.constant 0.000000e+00 : f32
    %300 = vector.broadcast %cst_73 : f32 to vector<2x98xf32>
    %301 = vector.broadcast %cst_74 : f32 to vector<2x98xf32>
    %302 = arith.select %299, %300, %301 : vector<2x98xi1>, vector<2x98xf32>
    %303 = tpu.iota {dimensions = array<i32: 0>} : vector<98x2xi32>
    %304 = tpu.iota {dimensions = array<i32: 1>} : vector<98x2xi32>
    %c49_i32_75 = arith.constant 49 : i32
    %305 = vector.broadcast %c49_i32_75 : i32 to vector<98x2xi32>
    %306 = arith.muli %304, %305 : vector<98x2xi32>
    %307 = arith.cmpi sge, %303, %306 : vector<98x2xi32>
    %c1_i32_76 = arith.constant 1 : i32
    %308 = vector.broadcast %c1_i32_76 : i32 to vector<98x2xi32>
    %309 = arith.addi %304, %308 : vector<98x2xi32>
    %c49_i32_77 = arith.constant 49 : i32
    %310 = vector.broadcast %c49_i32_77 : i32 to vector<98x2xi32>
    %311 = arith.muli %309, %310 : vector<98x2xi32>
    %312 = arith.cmpi slt, %303, %311 : vector<98x2xi32>
    %313 = arith.andi %307, %312 : vector<98x2xi1>
    %cst_78 = arith.constant 1.000000e+00 : f32
    %cst_79 = arith.constant 0.000000e+00 : f32
    %314 = vector.broadcast %cst_78 : f32 to vector<98x2xf32>
    %315 = vector.broadcast %cst_79 : f32 to vector<98x2xf32>
    %316 = arith.select %313, %314, %315 : vector<98x2xi1>, vector<98x2xf32>
    %c0_80 = arith.constant 0 : index
    %c0_81 = arith.constant 0 : index
    %317 = vector.load %arg9[%c0_80, %c0_81] : memref<128x64xf32, #tpu.memory_space<vmem>>, vector<128x64xf32>
    %318 = arith.truncf %317 : vector<128x64xf32> to vector<128x64xbf16>
    %c0_82 = arith.constant 0 : index
    %c0_83 = arith.constant 0 : index
    %319 = vector.load %arg11[%c0_82, %c0_83] : memref<128x64xf32, #tpu.memory_space<vmem>>, vector<128x64xf32>
    %320 = arith.truncf %319 : vector<128x64xf32> to vector<128x64xbf16>
    %c0_84 = arith.constant 0 : index
    %c0_85 = arith.constant 0 : index
    %321 = vector.load %arg13[%c0_84, %c0_85] : memref<1x64xf32, #tpu.memory_space<vmem>>, vector<1x64xf32>
    %322 = arith.truncf %8 : vector<98x128xf32> to vector<98x128xbf16>
    %cst_86 = arith.constant dense<0.000000e+00> : vector<98x64xf32>
    %323 = tpu.matmul %322, %318, %cst_86 {dimension_numbers = #tpu.dot_dimension_numbers<[1], [0], [0], [1], [0, 0, 1, 1], [], []>} : vector<98x128xbf16>, vector<128x64xbf16>, vector<98x64xf32> -> vector<98x64xf32>
    %c0_87 = arith.constant 0 : index
    %c0_88 = arith.constant 0 : index
    %324 = vector.load %arg10[%c0_87, %c0_88] : memref<1x64xf32, #tpu.memory_space<vmem>>, vector<1x64xf32>
    %325 = vector.broadcast %324 : vector<1x64xf32> to vector<98x64xf32>
    %326 = arith.addf %323, %325 : vector<98x64xf32>
    %c0_i32_89 = arith.constant 0 : i32
    %327 = arith.truncf %288 : vector<2x128xf32> to vector<2x128xbf16>
    %cst_90 = arith.constant dense<0.000000e+00> : vector<2x64xf32>
    %328 = tpu.matmul %327, %320, %cst_90 {dimension_numbers = #tpu.dot_dimension_numbers<[1], [0], [0], [1], [0, 0, 1, 1], [], []>} : vector<2x128xbf16>, vector<128x64xbf16>, vector<2x64xf32> -> vector<2x64xf32>
    %c0_91 = arith.constant 0 : index
    %c0_92 = arith.constant 0 : index
    %329 = vector.load %arg12[%c0_91, %c0_92] : memref<1x64xf32, #tpu.memory_space<vmem>>, vector<1x64xf32>
    %330 = vector.broadcast %329 : vector<1x64xf32> to vector<2x64xf32>
    %331 = arith.addf %328, %330 : vector<2x64xf32>
    %cst_93 = arith.constant dense<0.000000e+00> : vector<98x64xf32>
    %332 = tpu.matmul %316, %331, %cst_93 {dimension_numbers = #tpu.dot_dimension_numbers<[1], [0], [0], [1], [0, 0, 1, 1], [], []>} : vector<98x2xf32>, vector<2x64xf32>, vector<98x64xf32> -> vector<98x64xf32>
    %333 = arith.addf %326, %332 : vector<98x64xf32>
    %334 = math.tanh %333 : vector<98x64xf32>
    %cst_94 = arith.constant dense<0.000000e+00> : vector<1x98xf32>
    %335 = tpu.matmul %321, %334, %cst_94 {dimension_numbers = #tpu.dot_dimension_numbers<[1], [1], [0], [0], [0, 0, 1, 0], [], []>} : vector<1x64xf32>, vector<98x64xf32>, vector<1x98xf32> -> vector<1x98xf32>
    %c0_95 = arith.constant 0 : index
    %c0_96 = arith.constant 0 : index
    %336 = vector.load %arg14[%c0_95, %c0_96] : memref<1x1xf32, #tpu.memory_space<vmem>>, vector<1x1xf32>
    %337 = vector.broadcast %336 : vector<1x1xf32> to vector<1x98xf32>
    %338 = arith.addf %335, %337 : vector<1x98xf32>
    %339 = vector.shape_cast %338 : vector<1x98xf32> to vector<1x1x98xf32>
    %cst_97 = arith.constant dense<0xFF800000> : vector<1xf32>
    %340 = vector.multi_reduction <maximumf>, %339, %cst_97 [1, 2] : vector<1x1x98xf32> to vector<1xf32>
    %341 = vector.shape_cast %340 : vector<1xf32> to vector<1x1x1xf32>
    %342 = vector.extract %341[0, 0, 0] : f32 from vector<1x1x1xf32>
    %343 = vector.broadcast %342 : f32 to vector<1x98xf32>
    %344 = arith.subf %338, %343 : vector<1x98xf32>
    %345 = math.exp %344 : vector<1x98xf32>
    %cst_98 = arith.constant dense<0.000000e+00> : vector<1x2xf32>
    %346 = tpu.matmul %345, %316, %cst_98 {dimension_numbers = #tpu.dot_dimension_numbers<[1], [0], [0], [1], [0, 0, 1, 1], [], []>} : vector<1x98xf32>, vector<98x2xf32>, vector<1x2xf32> -> vector<1x2xf32>
    %cst_99 = arith.constant dense<0.000000e+00> : vector<1x98xf32>
    %347 = tpu.matmul %346, %302, %cst_99 {dimension_numbers = #tpu.dot_dimension_numbers<[1], [0], [0], [1], [0, 0, 1, 1], [], []>} : vector<1x2xf32>, vector<2x98xf32>, vector<1x98xf32> -> vector<1x98xf32>
    %348 = tpu.reciprocal %347 {approx = true} : vector<1x98xf32> -> vector<1x98xf32>
    %349 = arith.mulf %345, %348 : vector<1x98xf32>
    %350 = vector.broadcast %349 : vector<1x98xf32> to vector<2x98xf32>
    %351 = arith.mulf %302, %350 : vector<2x98xf32>
    %cst_100 = arith.constant dense<0.000000e+00> : vector<2x128xf32>
    %352 = tpu.matmul %351, %8, %cst_100 {dimension_numbers = #tpu.dot_dimension_numbers<[1], [0], [0], [1], [0, 0, 1, 1], [], []>} : vector<2x98xf32>, vector<98x128xf32>, vector<2x128xf32> -> vector<2x128xf32>
    %353 = arith.addf %352, %288 : vector<2x128xf32>
    %354 = arith.truncf %353 : vector<2x128xf32> to vector<2x128xbf16>
    %c0_101 = arith.constant 0 : index
    %c0_102 = arith.constant 0 : index
    %355 = vector.load %arg15[%c0_101, %c0_102] : memref<128x128xf32, #tpu.memory_space<vmem>>, vector<128x128xf32>
    %356 = arith.truncf %355 : vector<128x128xf32> to vector<128x128xbf16>
    %cst_103 = arith.constant dense<0.000000e+00> : vector<2x128xf32>
    %357 = tpu.matmul %354, %356, %cst_103 {dimension_numbers = #tpu.dot_dimension_numbers<[1], [0], [0], [1], [0, 0, 1, 1], [], []>} : vector<2x128xbf16>, vector<128x128xbf16>, vector<2x128xf32> -> vector<2x128xf32>
    %c0_104 = arith.constant 0 : index
    %c0_105 = arith.constant 0 : index
    %358 = vector.load %arg16[%c0_104, %c0_105] : memref<1x128xf32, #tpu.memory_space<vmem>>, vector<1x128xf32>
    %359 = vector.broadcast %358 : vector<1x128xf32> to vector<2x128xf32>
    %360 = arith.addf %357, %359 : vector<2x128xf32>
    %cst_106 = arith.constant 0.000000e+00 : f32
    %361 = vector.broadcast %cst_106 : f32 to vector<2x128xf32>
    %362 = arith.maximumf %360, %361 : vector<2x128xf32>
    %363 = arith.truncf %362 : vector<2x128xf32> to vector<2x128xbf16>
    %c0_107 = arith.constant 0 : index
    %c0_108 = arith.constant 0 : index
    %364 = vector.load %arg17[%c0_107, %c0_108] : memref<128x10xf32, #tpu.memory_space<vmem>>, vector<128x10xf32>
    %365 = arith.truncf %364 : vector<128x10xf32> to vector<128x10xbf16>
    %cst_109 = arith.constant dense<0.000000e+00> : vector<2x10xf32>
    %366 = tpu.matmul %363, %365, %cst_109 {dimension_numbers = #tpu.dot_dimension_numbers<[1], [0], [0], [1], [0, 0, 1, 1], [], []>} : vector<2x128xbf16>, vector<128x10xbf16>, vector<2x10xf32> -> vector<2x10xf32>
    %c0_110 = arith.constant 0 : index
    %c0_111 = arith.constant 0 : index
    %367 = vector.load %arg18[%c0_110, %c0_111] : memref<1x10xf32, #tpu.memory_space<vmem>>, vector<1x10xf32>
    %368 = vector.broadcast %367 : vector<1x10xf32> to vector<2x10xf32>
    %369 = arith.addf %366, %368 : vector<2x10xf32>
    %c0_112 = arith.constant 0 : index
    %c0_113 = arith.constant 0 : index
    %370 = vector.load %arg19[%c0_112, %c0_113] : memref<2x10xf32, #tpu.memory_space<vmem>>, vector<2x10xf32>
    tpu.vector_store %arg19[%c0_112, %c0_113], %369 {strides = array<i32>} : memref<2x10xf32, #tpu.memory_space<vmem>>, vector<2x10xf32>,
    return
  }
  func.func @transform_0(%arg0: i32) -> (i32, i32) {
    %c0_i32 = arith.constant 0 : i32
    %c0_i32_0 = arith.constant 0 : i32
    %c0_i32_1 = arith.constant 0 : i32
    return %c0_i32, %c0_i32_0 : i32, i32
  }
  func.func @transform_1(%arg0: i32) -> (i32, i32) {
    %c0_i32 = arith.constant 0 : i32
    %c0_i32_0 = arith.constant 0 : i32
    %c0_i32_1 = arith.constant 0 : i32
    return %c0_i32, %c0_i32_0 : i32, i32
  }
  func.func @transform_2(%arg0: i32) -> (i32, i32) {
    %c0_i32 = arith.constant 0 : i32
    %c0_i32_0 = arith.constant 0 : i32
    %c0_i32_1 = arith.constant 0 : i32
    return %c0_i32, %c0_i32_0 : i32, i32
  }
  func.func @transform_3(%arg0: i32) -> (i32, i32) {
    %c0_i32 = arith.constant 0 : i32
    %c0_i32_0 = arith.constant 0 : i32
    %c0_i32_1 = arith.constant 0 : i32
    return %c0_i32, %c0_i32_0 : i32, i32
  }
  func.func @transform_4(%arg0: i32) -> (i32, i32) {
    %c0_i32 = arith.constant 0 : i32
    %c0_i32_0 = arith.constant 0 : i32
    %c0_i32_1 = arith.constant 0 : i32
    return %c0_i32, %c0_i32_0 : i32, i32
  }
  func.func @transform_5(%arg0: i32) -> (i32, i32) {
    %c0_i32 = arith.constant 0 : i32
    %c0_i32_0 = arith.constant 0 : i32
    %c0_i32_1 = arith.constant 0 : i32
    return %c0_i32, %c0_i32_0 : i32, i32
  }
  func.func @transform_6(%arg0: i32) -> (i32, i32) {
    %c0_i32 = arith.constant 0 : i32
    %c0_i32_0 = arith.constant 0 : i32
    %c0_i32_1 = arith.constant 0 : i32
    return %c0_i32, %c0_i32_0 : i32, i32
  }
  func.func @transform_7(%arg0: i32) -> (i32, i32) {
    %c0_i32 = arith.constant 0 : i32
    %c0_i32_0 = arith.constant 0 : i32
    %c0_i32_1 = arith.constant 0 : i32
    return %c0_i32, %c0_i32_0 : i32, i32
  }
  func.func @transform_8(%arg0: i32) -> (i32, i32) {
    %c0_i32 = arith.constant 0 : i32
    %c0_i32_0 = arith.constant 0 : i32
    %c0_i32_1 = arith.constant 0 : i32
    return %c0_i32, %c0_i32_0 : i32, i32
  }
  func.func @transform_9(%arg0: i32) -> (i32, i32) {
    %c0_i32 = arith.constant 0 : i32
    %c0_i32_0 = arith.constant 0 : i32
    %c0_i32_1 = arith.constant 0 : i32
    return %c0_i32, %c0_i32_0 : i32, i32
  }
  func.func @transform_10(%arg0: i32) -> (i32, i32) {
    %c0_i32 = arith.constant 0 : i32
    %c0_i32_0 = arith.constant 0 : i32
    %c0_i32_1 = arith.constant 0 : i32
    return %c0_i32, %c0_i32_0 : i32, i32
  }
  func.func @transform_11(%arg0: i32) -> (i32, i32) {
    %c0_i32 = arith.constant 0 : i32
    %c0_i32_0 = arith.constant 0 : i32
    %c0_i32_1 = arith.constant 0 : i32
    return %c0_i32, %c0_i32_0 : i32, i32
  }
  func.func @transform_12(%arg0: i32) -> (i32, i32) {
    %c0_i32 = arith.constant 0 : i32
    %c0_i32_0 = arith.constant 0 : i32
    %c0_i32_1 = arith.constant 0 : i32
    return %c0_i32, %c0_i32_0 : i32, i32
  }
  func.func @transform_13(%arg0: i32) -> (i32, i32) {
    %c0_i32 = arith.constant 0 : i32
    %c0_i32_0 = arith.constant 0 : i32
    %c0_i32_1 = arith.constant 0 : i32
    return %c0_i32, %c0_i32_0 : i32, i32
  }
  func.func @transform_14(%arg0: i32) -> (i32, i32) {
    %c0_i32 = arith.constant 0 : i32
    %c0_i32_0 = arith.constant 0 : i32
    %c0_i32_1 = arith.constant 0 : i32
    return %c0_i32, %c0_i32_0 : i32, i32
  }
  func.func @transform_15(%arg0: i32) -> (i32, i32) {
    %c0_i32 = arith.constant 0 : i32
    %c0_i32_0 = arith.constant 0 : i32
    %c0_i32_1 = arith.constant 0 : i32
    return %c0_i32, %c0_i32_0 : i32, i32
  }
  func.func @transform_16(%arg0: i32) -> (i32, i32) {
    %c0_i32 = arith.constant 0 : i32
    %c0_i32_0 = arith.constant 0 : i32
    %c0_i32_1 = arith.constant 0 : i32
    return %c0_i32, %c0_i32_0 : i32, i32
  }
  func.func @transform_17(%arg0: i32) -> (i32, i32) {
    %c0_i32 = arith.constant 0 : i32
    %c0_i32_0 = arith.constant 0 : i32
    %c0_i32_1 = arith.constant 0 : i32
    return %c0_i32, %c0_i32_0 : i32, i32
  }
  func.func @transform_18(%arg0: i32) -> (i32, i32) {
    %c0_i32 = arith.constant 0 : i32
    %c0_i32_0 = arith.constant 0 : i32
    %c0_i32_1 = arith.constant 0 : i32
    return %c0_i32, %c0_i32_0 : i32, i32
  }
}

</mosaic_0001>

<llo_original>
// kernel: san_forward.1
$region0: #{san_forward.1}
  #allocation0 [shape = 'u32[]', space=smem, size = 0x4, offset = 0x4, fixed_abs, tag = 'smem constant byte address 0x4 - core index']
  #allocation1 [shape = 'u32[144,128]{1,0:T(1,128)}', space=vmem, size = 0x12000, scoped, tag = 'internal scratch']
  #allocation2 [shape = 'f32[64,512]{1,0:T(8,128)}', space=vmem, size = 0x20000, scoped, tag = 'scratch operand']
  #allocation3 [shape = 'f32[1,1]{1,0:T(1,128)S(1)}', space=vmem, size = 0x200, scoped, tag = 'scoped memory for san_forward.1']
  %s0 = inlined_call_operand.vmem [shape: f32[98,512], index: 0, kind: input, shape index: {}]
  %s1 = inlined_call_operand.vmem [shape: s32[64,1], index: 1, kind: input, shape index: {}]
  %s2 = inlined_call_operand.vmem [shape: f32[50,32], index: 2, kind: input, shape index: {}]
  %s3 = inlined_call_operand.vmem [shape: f32[512,128], index: 3, kind: input, shape index: {}]
  %s4 = inlined_call_operand.vmem [shape: f32[1,128], index: 4, kind: input, shape index: {}]
  %s5 = inlined_call_operand.vmem [shape: f32[32,512], index: 5, kind: input, shape index: {}]
  %s6 = inlined_call_operand.vmem [shape: f32[128,512], index: 6, kind: input, shape index: {}]
  %s7 = inlined_call_operand.vmem [shape: f32[1,512], index: 7, kind: input, shape index: {}]
  %s8 = inlined_call_operand.vmem [shape: f32[128,64], index: 8, kind: input, shape index: {}]
  %s9 = inlined_call_operand.vmem [shape: f32[1,64], index: 9, kind: input, shape index: {}]
  %s10 = inlined_call_operand.vmem [shape: f32[128,64], index: 10, kind: input, shape index: {}]
  %s11 = inlined_call_operand.vmem [shape: f32[1,64], index: 11, kind: input, shape index: {}]
  %s12 = inlined_call_operand.vmem [shape: f32[1,64], index: 12, kind: input, shape index: {}]
  %s13 = inlined_call_operand.<no memory space> [shape: f32[1,1], index: 13, kind: input, shape index: {}]
  %s14 = inlined_call_operand.vmem [shape: f32[128,128], index: 14, kind: input, shape index: {}]
  %s15 = inlined_call_operand.vmem [shape: f32[1,128], index: 15, kind: input, shape index: {}]
  %s16 = inlined_call_operand.vmem [shape: f32[128,10], index: 16, kind: input, shape index: {}]
  %s17 = inlined_call_operand.vmem [shape: f32[1,10], index: 17, kind: input, shape index: {}]
  %s18 = inlined_call_operand.hbm [shape: f32[2,10], index: 18, kind: output, shape index: {}]
  %s19 = sld [smem:[#allocation0]]
  $region82: #{san_forward.1} parent=0
    _
  %s21 = ssub.s32 1, %s19
  %s22 = scalar_select 0, %s21, %s19
  %v23 = vstv %s13
  %24 = vst [vmem:[#allocation3] sm:$0x1] %v23
  $region1: #{san_forward.1} parent=0
    #allocation4 [shape = 'u8[1024]{0}', space=vmem, size = 0x400, scoped, tag = 'output window, operand 0, single buffered']
    #allocation5 [shape = 's32[1]{0}', space=sflag, size = 0x4, scoped, tag = 'scoped memory for san_forward.1']
    %25 = vsyncpa [#allocation5], 0
    // Predicated region
    $region2: #{san_forward.1} parent=1 // pred_check
      _
    $region3: #{san_forward.1} parent=1 // pred_check_branch
      %27 = sbr.rel (0) target = $region5
    $region4: #{san_forward.1} parent=1 // pred_region
      _
    $region5: #{san_forward.1} parent=1 // pred_fallthru
      _
    // Predicated region
    $region6: #{san_forward.1} parent=1 // pred_check
      _
    $region7: #{san_forward.1} parent=1 // pred_check_branch
      %29 = sbr.rel (0) target = $region9
    $region8: #{san_forward.1} parent=1 // pred_region
      _
    $region9: #{san_forward.1} parent=1 // pred_fallthru
      _
    // Predicated region
    $region10: #{san_forward.1} parent=1 // pred_check
      _
    $region11: #{san_forward.1} parent=1 // pred_check_branch
      %31 = sbr.rel (0) target = $region13
    $region12: #{san_forward.1} parent=1 // pred_region
      _
    $region13: #{san_forward.1} parent=1 // pred_fallthru
      _
    // Predicated region
    $region14: #{san_forward.1} parent=1 // pred_check
      _
    $region15: #{san_forward.1} parent=1 // pred_check_branch
      %33 = sbr.rel (0) target = $region17
    $region16: #{san_forward.1} parent=1 // pred_region
      _
    $region17: #{san_forward.1} parent=1 // pred_fallthru
      _
    // Predicated region
    $region18: #{san_forward.1} parent=1 // pred_check
      _
    $region19: #{san_forward.1} parent=1 // pred_check_branch
      %35 = sbr.rel (0) target = $region21
    $region20: #{san_forward.1} parent=1 // pred_region
      _
    $region21: #{san_forward.1} parent=1 // pred_fallthru
      _
    // Predicated region
    $region22: #{san_forward.1} parent=1 // pred_check
      _
    $region23: #{san_forward.1} parent=1 // pred_check_branch
      %37 = sbr.rel (0) target = $region25
    $region24: #{san_forward.1} parent=1 // pred_region
      _
    $region25: #{san_forward.1} parent=1 // pred_fallthru
      _
    // Predicated region
    $region26: #{san_forward.1} parent=1 // pred_check
      _
    $region27: #{san_forward.1} parent=1 // pred_check_branch
      %39 = sbr.rel (0) target = $region29
    $region28: #{san_forward.1} parent=1 // pred_region
      _
    $region29: #{san_forward.1} parent=1 // pred_fallthru
      _
    // Predicated region
    $region30: #{san_forward.1} parent=1 // pred_check
      _
    $region31: #{san_forward.1} parent=1 // pred_check_branch
      %41 = sbr.rel (0) target = $region33
    $region32: #{san_forward.1} parent=1 // pred_region
      _
    $region33: #{san_forward.1} parent=1 // pred_fallthru
      _
    // Predicated region
    $region34: #{san_forward.1} parent=1 // pred_check
      _
    $region35: #{san_forward.1} parent=1 // pred_check_branch
      %43 = sbr.rel (0) target = $region37
    $region36: #{san_forward.1} parent=1 // pred_region
      _
    $region37: #{san_forward.1} parent=1 // pred_fallthru
      _
    // Predicated region
    $region38: #{san_forward.1} parent=1 // pred_check
      _
    $region39: #{san_forward.1} parent=1 // pred_check_branch
      %45 = sbr.rel (0) target = $region41
    $region40: #{san_forward.1} parent=1 // pred_region
      _
    $region41: #{san_forward.1} parent=1 // pred_fallthru
      _
    // Predicated region
    $region42: #{san_forward.1} parent=1 // pred_check
      _
    $region43: #{san_forward.1} parent=1 // pred_check_branch
      %47 = sbr.rel (0) target = $region45
    $region44: #{san_forward.1} parent=1 // pred_region
      _
    $region45: #{san_forward.1} parent=1 // pred_fallthru
      _
    // Predicated region
    $region46: #{san_forward.1} parent=1 // pred_check
      _
    $region47: #{san_forward.1} parent=1 // pred_check_branch
      %49 = sbr.rel (0) target = $region49
    $region48: #{san_forward.1} parent=1 // pred_region
      _
    $region49: #{san_forward.1} parent=1 // pred_fallthru
      _
    // Predicated region
    $region50: #{san_forward.1} parent=1 // pred_check
      _
    $region51: #{san_forward.1} parent=1 // pred_check_branch
      %51 = sbr.rel (0) target = $region53
    $region52: #{san_forward.1} parent=1 // pred_region
      _
    $region53: #{san_forward.1} parent=1 // pred_fallthru
      _
    // Predicated region
    $region54: #{san_forward.1} parent=1 // pred_check
      _
    $region55: #{san_forward.1} parent=1 // pred_check_branch
      %53 = sbr.rel (0) target = $region57
    $region56: #{san_forward.1} parent=1 // pred_region
      _
    $region57: #{san_forward.1} parent=1 // pred_fallthru
      _
    // Predicated region
    $region58: #{san_forward.1} parent=1 // pred_check
      _
    $region59: #{san_forward.1} parent=1 // pred_check_branch
      %55 = sbr.rel (0) target = $region61
    $region60: #{san_forward.1} parent=1 // pred_region
      _
    $region61: #{san_forward.1} parent=1 // pred_fallthru
      _
    // Predicated region
    $region62: #{san_forward.1} parent=1 // pred_check
      _
    $region63: #{san_forward.1} parent=1 // pred_check_branch
      %57 = sbr.rel (0) target = $region65
    $region64: #{san_forward.1} parent=1 // pred_region
      _
    $region65: #{san_forward.1} parent=1 // pred_fallthru
      _
    // Predicated region
    $region66: #{san_forward.1} parent=1 // pred_check
      _
    $region67: #{san_forward.1} parent=1 // pred_check_branch
      %59 = sbr.rel (0) target = $region69
    $region68: #{san_forward.1} parent=1 // pred_region
      _
    $region69: #{san_forward.1} parent=1 // pred_fallthru
      _
    // Predicated region
    $region70: #{san_forward.1} parent=1 // pred_check
      _
    $region71: #{san_forward.1} parent=1 // pred_check_branch
      %61 = sbr.rel (0) target = $region73
    $region72: #{san_forward.1} parent=1 // pred_region
      _
    $region73: #{san_forward.1} parent=1 // pred_fallthru
      _
    %v63 = vld [vmem:[%s0] sm:$0xff]
    %v64 = vld [vmem:[%s0 + $0x8] sm:$0xff]
    %v65 = vld [vmem:[%s0 + $0x10] sm:$0xff]
    %v66 = vld [vmem:[%s0 + $0x18] sm:$0xff]
    %v67 = vld [vmem:[%s0 + $0x20] sm:$0xff]
    %v68 = vld [vmem:[%s0 + $0x28] sm:$0xff]
    %v69 = vld [vmem:[%s0 + $0x30] sm:$0xff]
    %v70 = vld [vmem:[%s0 + $0x38] sm:$0xff]
    %v71 = vld [vmem:[%s0 + $0x40] sm:$0xff]
    %v72 = vld [vmem:[%s0 + $0x48] sm:$0xff]
    %v73 = vld [vmem:[%s0 + $0x50] sm:$0xff]
    %v74 = vld [vmem:[%s0 + $0x58] sm:$0xff]
    %v75 = vld [vmem:[%s0 + $0x60] sm:$0xff]
    %v76 = vld [vmem:[%s0 + $0x68] sm:$0xff]
    %v77 = vld [vmem:[%s0 + $0x70] sm:$0xff]
    %v78 = vld [vmem:[%s0 + $0x78] sm:$0xff]
    %v79 = vld [vmem:[%s0 + $0x80] sm:$0xff]
    %v80 = vld [vmem:[%s0 + $0x88] sm:$0xff]
    %v81 = vld [vmem:[%s0 + $0x90] sm:$0xff]
    %v82 = vld [vmem:[%s0 + $0x98] sm:$0xff]
    %v83 = vld [vmem:[%s0 + $0xa0] sm:$0xff]
    %v84 = vld [vmem:[%s0 + $0xa8] sm:$0xff]
    %v85 = vld [vmem:[%s0 + $0xb0] sm:$0xff]
    %v86 = vld [vmem:[%s0 + $0xb8] sm:$0xff]
    %v87 = vld [vmem:[%s0 + $0xc0] sm:$0xff]
    %v88 = vld [vmem:[%s0 + $0xc8] sm:$0xff]
    %v89 = vld [vmem:[%s0 + $0xd0] sm:$0xff]
    %v90 = vld [vmem:[%s0 + $0xd8] sm:$0xff]
    %v91 = vld [vmem:[%s0 + $0xe0] sm:$0xff]
    %v92 = vld [vmem:[%s0 + $0xe8] sm:$0xff]
    %v93 = vld [vmem:[%s0 + $0xf0] sm:$0xff]
    %v94 = vld [vmem:[%s0 + $0xf8] sm:$0xff]
    %v95 = vld [vmem:[%s0 + $0x100] sm:$0xff]
    %v96 = vld [vmem:[%s0 + $0x108] sm:$0xff]
    %v97 = vld [vmem:[%s0 + $0x110] sm:$0xff]
    %v98 = vld [vmem:[%s0 + $0x118] sm:$0xff]
    %v99 = vld [vmem:[%s0 + $0x120] sm:$0xff]
    %v100 = vld [vmem:[%s0 + $0x128] sm:$0xff]
    %v101 = vld [vmem:[%s0 + $0x130] sm:$0xff]
    %v102 = vld [vmem:[%s0 + $0x138] sm:$0xff]
    %v103 = vld [vmem:[%s0 + $0x140] sm:$0xff]
    %v104 = vld [vmem:[%s0 + $0x148] sm:$0xff]
    %v105 = vld [vmem:[%s0 + $0x150] sm:$0xff]
    %v106 = vld [vmem:[%s0 + $0x158] sm:$0xff]
    %v107 = vld [vmem:[%s0 + $0x160] sm:$0xff]
    %v108 = vld [vmem:[%s0 + $0x168] sm:$0xff]
    %v109 = vld [vmem:[%s0 + $0x170] sm:$0xff]
    %v110 = vld [vmem:[%s0 + $0x178] sm:$0xff]
    %v111 = vld [vmem:[%s0 + $0x180] sm:$0x3]
    %v112 = vld [vmem:[%s0 + $0x188] sm:$0x3]
    %v113 = vld [vmem:[%s0 + $0x190] sm:$0x3]
    %v114 = vld [vmem:[%s0 + $0x198] sm:$0x3]
    %v115 = vpack.c.bf16 %v67, %v63
    %v116 = vpack.c.bf16 %v68, %v64
    %v117 = vpack.c.bf16 %v69, %v65
    %v118 = vpack.c.bf16 %v70, %v66
    %v119 = vpack.c.bf16 %v75, %v71
    %v120 = vpack.c.bf16 %v76, %v72
    %v121 = vpack.c.bf16 %v77, %v73
    %v122 = vpack.c.bf16 %v78, %v74
    %v123 = vpack.c.bf16 %v83, %v79
    %v124 = vpack.c.bf16 %v84, %v80
    %v125 = vpack.c.bf16 %v85, %v81
    %v126 = vpack.c.bf16 %v86, %v82
    %v127 = vpack.c.bf16 %v91, %v87
    %v128 = vpack.c.bf16 %v92, %v88
    %v129 = vpack.c.bf16 %v93, %v89
    %v130 = vpack.c.bf16 %v94, %v90
    %v131 = vpack.c.bf16 %v99, %v95
    %v132 = vpack.c.bf16 %v100, %v96
    %v133 = vpack.c.bf16 %v101, %v97
    %v134 = vpack.c.bf16 %v102, %v98
    %v135 = vpack.c.bf16 %v107, %v103
    %v136 = vpack.c.bf16 %v108, %v104
    %v137 = vpack.c.bf16 %v109, %v105
    %v138 = vpack.c.bf16 %v110, %v106
    %v139 = vpack.c.bf16 %v111, %v111
    %v140 = vpack.c.bf16 %v112, %v112
    %v141 = vpack.c.bf16 %v113, %v113
    %v142 = vpack.c.bf16 %v114, %v114
    %v143 = vld [vmem:[%s3] sm:$0xff]
    %v144 = vld [vmem:[%s3 + $0x8] sm:$0xff]
    %v145 = vld [vmem:[%s3 + $0x10] sm:$0xff]
    %v146 = vld [vmem:[%s3 + $0x18] sm:$0xff]
    %v147 = vld [vmem:[%s3 + $0x20] sm:$0xff]
    %v148 = vld [vmem:[%s3 + $0x28] sm:$0xff]
    %v149 = vld [vmem:[%s3 + $0x30] sm:$0xff]
    %v150 = vld [vmem:[%s3 + $0x38] sm:$0xff]
    %v151 = vld [vmem:[%s3 + $0x40] sm:$0xff]
    %v152 = vld [vmem:[%s3 + $0x48] sm:$0xff]
    %v153 = vld [vmem:[%s3 + $0x50] sm:$0xff]
    %v154 = vld [vmem:[%s3 + $0x58] sm:$0xff]
    %v155 = vld [vmem:[%s3 + $0x60] sm:$0xff]
    %v156 = vld [vmem:[%s3 + $0x68] sm:$0xff]
    %v157 = vld [vmem:[%s3 + $0x70] sm:$0xff]
    %v158 = vld [vmem:[%s3 + $0x78] sm:$0xff]
    %v159 = vld [vmem:[%s3 + $0x80] sm:$0xff]
    %v160 = vld [vmem:[%s3 + $0x88] sm:$0xff]
    %v161 = vld [vmem:[%s3 + $0x90] sm:$0xff]
    %v162 = vld [vmem:[%s3 + $0x98] sm:$0xff]
    %v163 = vld [vmem:[%s3 + $0xa0] sm:$0xff]
    %v164 = vld [vmem:[%s3 + $0xa8] sm:$0xff]
    %v165 = vld [vmem:[%s3 + $0xb0] sm:$0xff]
    %v166 = vld [vmem:[%s3 + $0xb8] sm:$0xff]
    %v167 = vld [vmem:[%s3 + $0xc0] sm:$0xff]
    %v168 = vld [vmem:[%s3 + $0xc8] sm:$0xff]
    %v169 = vld [vmem:[%s3 + $0xd0] sm:$0xff]
    %v170 = vld [vmem:[%s3 + $0xd8] sm:$0xff]
    %v171 = vld [vmem:[%s3 + $0xe0] sm:$0xff]
    %v172 = vld [vmem:[%s3 + $0xe8] sm:$0xff]
    %v173 = vld [vmem:[%s3 + $0xf0] sm:$0xff]
    %v174 = vld [vmem:[%s3 + $0xf8] sm:$0xff]
    %v175 = vld [vmem:[%s3 + $0x100] sm:$0xff]
    %v176 = vld [vmem:[%s3 + $0x108] sm:$0xff]
    %v177 = vld [vmem:[%s3 + $0x110] sm:$0xff]
    %v178 = vld [vmem:[%s3 + $0x118] sm:$0xff]
    %v179 = vld [vmem:[%s3 + $0x120] sm:$0xff]
    %v180 = vld [vmem:[%s3 + $0x128] sm:$0xff]
    %v181 = vld [vmem:[%s3 + $0x130] sm:$0xff]
    %v182 = vld [vmem:[%s3 + $0x138] sm:$0xff]
    %v183 = vld [vmem:[%s3 + $0x140] sm:$0xff]
    %v184 = vld [vmem:[%s3 + $0x148] sm:$0xff]
    %v185 = vld [vmem:[%s3 + $0x150] sm:$0xff]
    %v186 = vld [vmem:[%s3 + $0x158] sm:$0xff]
    %v187 = vld [vmem:[%s3 + $0x160] sm:$0xff]
    %v188 = vld [vmem:[%s3 + $0x168] sm:$0xff]
    %v189 = vld [vmem:[%s3 + $0x170] sm:$0xff]
    %v190 = vld [vmem:[%s3 + $0x178] sm:$0xff]
    %v191 = vld [vmem:[%s3 + $0x180] sm:$0xff]
    %v192 = vld [vmem:[%s3 + $0x188] sm:$0xff]
    %v193 = vld [vmem:[%s3 + $0x190] sm:$0xff]
    %v194 = vld [vmem:[%s3 + $0x198] sm:$0xff]
    %v195 = vld [vmem:[%s3 + $0x1a0] sm:$0xff]
    %v196 = vld [vmem:[%s3 + $0x1a8] sm:$0xff]
    %v197 = vld [vmem:[%s3 + $0x1b0] sm:$0xff]
    %v198 = vld [vmem:[%s3 + $0x1b8] sm:$0xff]
    %v199 = vld [vmem:[%s3 + $0x1c0] sm:$0xff]
    %v200 = vld [vmem:[%s3 + $0x1c8] sm:$0xff]
    %v201 = vld [vmem:[%s3 + $0x1d0] sm:$0xff]
    %v202 = vld [vmem:[%s3 + $0x1d8] sm:$0xff]
    %v203 = vld [vmem:[%s3 + $0x1e0] sm:$0xff]
    %v204 = vld [vmem:[%s3 + $0x1e8] sm:$0xff]
    %v205 = vld [vmem:[%s3 + $0x1f0] sm:$0xff]
    %v206 = vld [vmem:[%s3 + $0x1f8] sm:$0xff]
    %v207 = vpack.c.bf16 %v144, %v143
    %v208 = vpack.c.bf16 %v146, %v145
    %v209 = vpack.c.bf16 %v148, %v147
    %v210 = vpack.c.bf16 %v150, %v149
    %v211 = vpack.c.bf16 %v152, %v151
    %v212 = vpack.c.bf16 %v154, %v153
    %v213 = vpack.c.bf16 %v156, %v155
    %v214 = vpack.c.bf16 %v158, %v157
    %v215 = vpack.c.bf16 %v160, %v159
    %v216 = vpack.c.bf16 %v162, %v161
    %v217 = vpack.c.bf16 %v164, %v163
    %v218 = vpack.c.bf16 %v166, %v165
    %v219 = vpack.c.bf16 %v168, %v167
    %v220 = vpack.c.bf16 %v170, %v169
    %v221 = vpack.c.bf16 %v172, %v171
    %v222 = vpack.c.bf16 %v174, %v173
    %v223 = vpack.c.bf16 %v176, %v175
    %v224 = vpack.c.bf16 %v178, %v177
    %v225 = vpack.c.bf16 %v180, %v179
    %v226 = vpack.c.bf16 %v182, %v181
    %v227 = vpack.c.bf16 %v184, %v183
    %v228 = vpack.c.bf16 %v186, %v185
    %v229 = vpack.c.bf16 %v188, %v187
    %v230 = vpack.c.bf16 %v190, %v189
    %v231 = vpack.c.bf16 %v192, %v191
    %v232 = vpack.c.bf16 %v194, %v193
    %v233 = vpack.c.bf16 %v196, %v195
    %v234 = vpack.c.bf16 %v198, %v197
    %v235 = vpack.c.bf16 %v200, %v199
    %v236 = vpack.c.bf16 %v202, %v201
    %v237 = vpack.c.bf16 %v204, %v203
    %v238 = vpack.c.bf16 %v206, %v205
    %v239 = vld [vmem:[%s4] sm:$0x1]
    %v241 = vlaneseq
    %v242 = vshrl.u32 %v241, 7
    %v243 = vsub.s32 0, %v242
    %v244 = vrot.slane %v239, %v243
    %246 = vmatprep.subr.bf16.mxu0 0
    %247 = vmatpush1.bf16.msra.mxu0 %v207
    %248 = vmatprep.subr.bf16.mxu0 0
    %249 = vmatpush1.bf16.msra.mxu0 %v208
    %250 = vmatprep.subr.bf16.mxu0 0
    %251 = vmatpush1.bf16.msra.mxu0 %v209
    %252 = vmatprep.subr.bf16.mxu0 0
    %253 = vmatpush1.bf16.msra.mxu0 %v210
    %254 = vmatprep.subr.bf16.mxu0 0
    %255 = vmatpush1.bf16.msra.mxu0 %v211
    %256 = vmatprep.subr.bf16.mxu0 0
    %257 = vmatpush1.bf16.msra.mxu0 %v212
    %258 = vmatprep.subr.bf16.mxu0 0
    %259 = vmatpush1.bf16.msra.mxu0 %v213
    %260 = vmatprep.subr.bf16.mxu0 0
    %261 = vmatpush1.bf16.msra.mxu0 %v214
    %262 = vmatprep.subr.bf16.mxu0 0
    %263 = vmatpush1.bf16.msra.mxu0 %v215
    %264 = vmatprep.subr.bf16.mxu0 0
    %265 = vmatpush1.bf16.msra.mxu0 %v216
    %266 = vmatprep.subr.bf16.mxu0 0
    %267 = vmatpush1.bf16.msra.mxu0 %v217
    %268 = vmatprep.subr.bf16.mxu0 0
    %269 = vmatpush1.bf16.msra.mxu0 %v218
    %270 = vmatprep.subr.bf16.mxu0 0
    %271 = vmatpush1.bf16.msra.mxu0 %v219
    %272 = vmatprep.subr.bf16.mxu0 0
    %273 = vmatpush1.bf16.msra.mxu0 %v220
    %274 = vmatprep.subr.bf16.mxu0 0
    %275 = vmatpush1.bf16.msra.mxu0 %v221
    %276 = vmatprep.subr.bf16.mxu0 0
    %277 = vmatpush1.bf16.msra.mxu0 %v222
    %278 = vmatprep.mubr.bf16.mxu0 %v116
    %279 = vmatmul.mubr.bf16.gmra.mrb[0].mxu0 %v115
    %v280 = vpop.f32.mrb[0].mxu0
    %v281 = vadd.f32 %v244, %v280
    %v282 = vpop.f32.mrb[0].mxu0
    %v283 = vpop.f32.mrb[0].mxu0
    %v284 = vadd.f32 %v244, %v283
    %v285 = vpop.f32.mrb[0].mxu0
    %286 = vmatprep.mubr.bf16.mxu0 %v120
    %287 = vmatmul.mubr.bf16.gmra.mrb[0].mxu0 %v119
    %v288 = vpop.f32.mrb[0].mxu0
    %v289 = vadd.f32 %v244, %v288
    %v290 = vpop.f32.mrb[0].mxu0
    %v291 = vpop.f32.mrb[0].mxu0
    %v292 = vadd.f32 %v244, %v291
    %v293 = vpop.f32.mrb[0].mxu0
    %294 = vmatprep.mubr.bf16.mxu0 %v124
    %295 = vmatmul.mubr.bf16.gmra.mrb[0].mxu0 %v123
    %v296 = vpop.f32.mrb[0].mxu0
    %v297 = vadd.f32 %v244, %v296
    %v298 = vpop.f32.mrb[0].mxu0
    %v299 = vpop.f32.mrb[0].mxu0
    %v300 = vadd.f32 %v244, %v299
    %v301 = vpop.f32.mrb[0].mxu0
    %302 = vmatprep.mubr.bf16.mxu0 %v128
    %303 = vmatmul.mubr.bf16.gmra.mrb[0].mxu0 %v127
    %v304 = vpop.f32.mrb[0].mxu0
    %v305 = vadd.f32 %v244, %v304
    %v306 = vpop.f32.mrb[0].mxu0
    %v307 = vpop.f32.mrb[0].mxu0
    %v308 = vadd.f32 %v244, %v307
    %v309 = vpop.f32.mrb[0].mxu0
    %310 = vmatprep.mubr.bf16.mxu0 %v132
    %311 = vmatmul.mubr.bf16.gmra.mrb[0].mxu0 %v131
    %v312 = vpop.f32.mrb[0].mxu0
    %v313 = vadd.f32 %v244, %v312
    %v314 = vpop.f32.mrb[0].mxu0
    %v315 = vpop.f32.mrb[0].mxu0
    %v316 = vadd.f32 %v244, %v315
    %v317 = vpop.f32.mrb[0].mxu0
    %318 = vmatprep.mubr.bf16.mxu0 %v136
    %319 = vmatmul.mubr.bf16.gmra.mrb[0].mxu0 %v135
    %v320 = vpop.f32.mrb[0].mxu0
    %v321 = vadd.f32 %v244, %v320
    %v322 = vpop.f32.mrb[0].mxu0
    %v323 = vpop.f32.mrb[0].mxu0
    %v324 = vadd.f32 %v244, %v323
    %v325 = vpop.f32.mrb[0].mxu0
    %326 = vmatprep.mubr.bf16.mxu0 %v140
    %327 = vmatmul.mubr.bf16.gmra.mrb[0].mxu0 %v139
    %v328 = vpop.f32.mrb[0].mxu0
    %v329 = vadd.f32 %v244, %v328
    %v330 = vpop.f32.mrb[0].mxu0
    %v331 = vpop.f32.mrb[0].mxu0
    %v332 = vpop.f32.mrb[0].mxu0
    %333 = vdwg.mxu0
    %334 = vmatprep.subr.bf16.mxu0 0
    %335 = vmatpush1.bf16.msra.mxu0 %v223
    %336 = vmatprep.subr.bf16.mxu0 0
    %337 = vmatpush1.bf16.msra.mxu0 %v224
    %338 = vmatprep.subr.bf16.mxu0 0
    %339 = vmatpush1.bf16.msra.mxu0 %v225
    %340 = vmatprep.subr.bf16.mxu0 0
    %341 = vmatpush1.bf16.msra.mxu0 %v226
    %342 = vmatprep.subr.bf16.mxu0 0
    %343 = vmatpush1.bf16.msra.mxu0 %v227
    %344 = vmatprep.subr.bf16.mxu0 0
    %345 = vmatpush1.bf16.msra.mxu0 %v228
    %346 = vmatprep.subr.bf16.mxu0 0
    %347 = vmatpush1.bf16.msra.mxu0 %v229
    %348 = vmatprep.subr.bf16.mxu0 0
    %349 = vmatpush1.bf16.msra.mxu0 %v230
    %350 = vmatprep.subr.bf16.mxu0 0
    %351 = vmatpush1.bf16.msra.mxu0 %v231
    %352 = vmatprep.subr.bf16.mxu0 0
    %353 = vmatpush1.bf16.msra.mxu0 %v232
    %354 = vmatprep.subr.bf16.mxu0 0
    %355 = vmatpush1.bf16.msra.mxu0 %v233
    %356 = vmatprep.subr.bf16.mxu0 0
    %357 = vmatpush1.bf16.msra.mxu0 %v234
    %358 = vmatprep.subr.bf16.mxu0 0
    %359 = vmatpush1.bf16.msra.mxu0 %v235
    %360 = vmatprep.subr.bf16.mxu0 0
    %361 = vmatpush1.bf16.msra.mxu0 %v236
    %362 = vmatprep.subr.bf16.mxu0 0
    %363 = vmatpush1.bf16.msra.mxu0 %v237
    %364 = vmatprep.subr.bf16.mxu0 0
    %365 = vmatpush1.bf16.msra.mxu0 %v238
    %366 = vmatprep.mubr.bf16.mxu0 %v118
    %367 = vmatmul.mubr.bf16.gmra.mrb[0].mxu0 %v117
    %v368 = vpop.f32.mrb[0].mxu0
    %v369 = vadd.f32 %v281, %v368
    %v370 = vpop.f32.mrb[0].mxu0
    %v371 = vpop.f32.mrb[0].mxu0
    %v372 = vadd.f32 %v284, %v371
    %v373 = vpop.f32.mrb[0].mxu0
    %374 = vmatprep.mubr.bf16.mxu0 %v122
    %375 = vmatmul.mubr.bf16.gmra.mrb[0].mxu0 %v121
    %v376 = vpop.f32.mrb[0].mxu0
    %v377 = vadd.f32 %v289, %v376
    %v378 = vpop.f32.mrb[0].mxu0
    %v379 = vpop.f32.mrb[0].mxu0
    %v380 = vadd.f32 %v292, %v379
    %v381 = vpop.f32.mrb[0].mxu0
    %382 = vmatprep.mubr.bf16.mxu0 %v126
    %383 = vmatmul.mubr.bf16.gmra.mrb[0].mxu0 %v125
    %v384 = vpop.f32.mrb[0].mxu0
    %v385 = vadd.f32 %v297, %v384
    %v386 = vpop.f32.mrb[0].mxu0
    %v387 = vpop.f32.mrb[0].mxu0
    %v388 = vadd.f32 %v300, %v387
    %v389 = vpop.f32.mrb[0].mxu0
    %390 = vmatprep.mubr.bf16.mxu0 %v130
    %391 = vmatmul.mubr.bf16.gmra.mrb[0].mxu0 %v129
    %v392 = vpop.f32.mrb[0].mxu0
    %v393 = vadd.f32 %v305, %v392
    %v394 = vpop.f32.mrb[0].mxu0
    %v395 = vpop.f32.mrb[0].mxu0
    %v396 = vadd.f32 %v308, %v395
    %v397 = vpop.f32.mrb[0].mxu0
    %398 = vmatprep.mubr.bf16.mxu0 %v134
    %399 = vmatmul.mubr.bf16.gmra.mrb[0].mxu0 %v133
    %v400 = vpop.f32.mrb[0].mxu0
    %v401 = vadd.f32 %v313, %v400
    %v402 = vpop.f32.mrb[0].mxu0
    %v403 = vpop.f32.mrb[0].mxu0
    %v404 = vadd.f32 %v316, %v403
    %v405 = vpop.f32.mrb[0].mxu0
    %406 = vmatprep.mubr.bf16.mxu0 %v138
    %407 = vmatmul.mubr.bf16.gmra.mrb[0].mxu0 %v137
    %v408 = vpop.f32.mrb[0].mxu0
    %v409 = vadd.f32 %v321, %v408
    %v410 = vpop.f32.mrb[0].mxu0
    %v411 = vpop.f32.mrb[0].mxu0
    %v412 = vadd.f32 %v324, %v411
    %v413 = vpop.f32.mrb[0].mxu0
    %414 = vmatprep.mubr.bf16.mxu0 %v142
    %415 = vmatmul.mubr.bf16.gmra.mrb[0].mxu0 %v141
    %v416 = vpop.f32.mrb[0].mxu0
    %v417 = vadd.f32 %v329, %v416
    %v418 = vpop.f32.mrb[0].mxu0
    %v419 = vpop.f32.mrb[0].mxu0
    %v420 = vpop.f32.mrb[0].mxu0
    %421 = vdwg.mxu0
    %v422 = vtanh.pop %v369
    %v423 = vtanh.pop %v372
    %v424 = vtanh.pop %v377
    %v425 = vtanh.pop %v380
    %v426 = vtanh.pop %v385
    %v427 = vtanh.pop %v388
    %v428 = vtanh.pop %v393
    %v429 = vtanh.pop %v396
    %v430 = vtanh.pop %v401
    %v431 = vtanh.pop %v404
    %v432 = vtanh.pop %v409
    %v433 = vtanh.pop %v412
    %v434 = vtanh.pop %v417
    %v435 = vld [vmem:[%s1] sm:$0xff]
    %v436 = vld [vmem:[%s1 + $0x8] sm:$0xff]
    %v437 = vld [vmem:[%s1 + $0x10] sm:$0xff]
    %v438 = vld [vmem:[%s1 + $0x18] sm:$0xff]
    %v439 = vld [vmem:[%s1 + $0x20] sm:$0xff]
    %v440 = vld [vmem:[%s1 + $0x28] sm:$0xff]
    %v441 = vld [vmem:[%s1 + $0x30] sm:$0xff]
    %v442 = vld [vmem:[%s1 + $0x38] sm:$0xff]
    %v443 = vlaneseq
    %v444 = vand.u32 %v443, 127
    %445 = vset.pattern.permute.xlu0 0
    %446 = vperm.xlu0 %445, %v435
    %v447 = vpop.permute.xlu0 %446
    %448 = vset.pattern.permute.xlu0 0
    %449 = vperm.xlu0 %448, %v436
    %v450 = vpop.permute.xlu0 %449
    %451 = vset.pattern.permute.xlu0 0
    %452 = vperm.xlu0 %451, %v437
    %v453 = vpop.permute.xlu0 %452
    %454 = vset.pattern.permute.xlu0 0
    %455 = vperm.xlu0 %454, %v438
    %v456 = vpop.permute.xlu0 %455
    %457 = vset.pattern.permute.xlu0 0
    %458 = vperm.xlu0 %457, %v439
    %v459 = vpop.permute.xlu0 %458
    %460 = vset.pattern.permute.xlu0 0
    %461 = vperm.xlu0 %460, %v440
    %v462 = vpop.permute.xlu0 %461
    %463 = vset.pattern.permute.xlu0 0
    %464 = vperm.xlu0 %463, %v441
    %v465 = vpop.permute.xlu0 %464
    %466 = vset.pattern.permute.xlu0 0
    %467 = vperm.xlu0 %466, %v442
    %v468 = vpop.permute.xlu0 %467
    %vm469 = vcmp.eq.s32.totalorder %v444, %v447
    %vm470 = vcmp.eq.s32.totalorder %v444, %v450
    %vm471 = vcmp.eq.s32.totalorder %v444, %v453
    %vm472 = vcmp.eq.s32.totalorder %v444, %v456
    %vm473 = vcmp.eq.s32.totalorder %v444, %v459
    %vm474 = vcmp.eq.s32.totalorder %v444, %v462
    %vm475 = vcmp.eq.s32.totalorder %v444, %v465
    %vm476 = vcmp.eq.s32.totalorder %v444, %v468
    %v477 = vsel %vm469, 1.0, 0.0
    %v478 = vsel %vm470, 1.0, 0.0
    %v479 = vsel %vm471, 1.0, 0.0
    %v480 = vsel %vm472, 1.0, 0.0
    %v481 = vsel %vm473, 1.0, 0.0
    %v482 = vsel %vm474, 1.0, 0.0
    %v483 = vsel %vm475, 1.0, 0.0
    %v484 = vsel %vm476, 1.0, 0.0
    %v485 = vpack.c.bf16 %v478, %v477
    %v486 = vpack.c.bf16 %v480, %v479
    %v487 = vpack.c.bf16 %v482, %v481
    %v488 = vpack.c.bf16 %v484, %v483
    %v489 = vld [vmem:[%s2] sm:$0xff]
    %v490 = vld [vmem:[%s2 + $0x8] sm:$0xff]
    %v491 = vld [vmem:[%s2 + $0x10] sm:$0xff]
    %v492 = vld [vmem:[%s2 + $0x18] sm:$0xff]
    %v493 = vld [vmem:[%s2 + $0x20] sm:$0xff]
    %v494 = vld [vmem:[%s2 + $0x28] sm:$0xff]
    %v495 = vld [vmem:[%s2 + $0x30] sm:$0x3]
    %v496 = vpack.c.bf16 %v490, %v489
    %v497 = vpack.c.bf16 %v492, %v491
    %v498 = vpack.c.bf16 %v494, %v493
    %v499 = vpack.c.bf16 %v495, %v495
    %vm500 = vcmask 408576
    %v502 = vsel %vm500, %v485, 0
    %v505 = vsel %vm500, %v486, 0
    %v508 = vsel %vm500, %v487, 0
    %v511 = vsel %vm500, %v488, 0
    %vm513 = vcmask 1040384
    %v515 = vsel %vm513, %v499, 0
    %517 = vmatprep.subr.bf16.mxu0 0
    %518 = vmatpush1.bf16.msra.mxu0 %v496
    %519 = vmatprep.subr.bf16.mxu0 0
    %520 = vmatpush1.bf16.msra.mxu0 %v497
    %521 = vmatprep.subr.bf16.mxu0 0
    %522 = vmatpush1.bf16.msra.mxu0 %v498
    %523 = vmatprep.subr.bf16.mxu0 0
    %524 = vmatpush1.bf16.msra.mxu0 %v515
    %525 = vmatprep.subr.bf16.mxu0 0
    %526 = vmatpush1.bf16.msra.mxu0 0
    %527 = vmatprep.subr.bf16.mxu0 0
    %528 = vmatpush1.bf16.msra.mxu0 0
    %529 = vmatprep.subr.bf16.mxu0 0
    %530 = vmatpush1.bf16.msra.mxu0 0
    %531 = vmatprep.subr.bf16.mxu0 0
    %532 = vmatpush1.bf16.msra.mxu0 0
    %533 = vmatprep.subr.bf16.mxu0 0
    %534 = vmatpush1.bf16.msra.mxu0 0
    %535 = vmatprep.subr.bf16.mxu0 0
    %536 = vmatpush1.bf16.msra.mxu0 0
    %537 = vmatprep.subr.bf16.mxu0 0
    %538 = vmatpush1.bf16.msra.mxu0 0
    %539 = vmatprep.subr.bf16.mxu0 0
    %540 = vmatpush1.bf16.msra.mxu0 0
    %541 = vmatprep.subr.bf16.mxu0 0
    %542 = vmatpush1.bf16.msra.mxu0 0
    %543 = vmatprep.subr.bf16.mxu0 0
    %544 = vmatpush1.bf16.msra.mxu0 0
    %545 = vmatprep.subr.bf16.mxu0 0
    %546 = vmatpush1.bf16.msra.mxu0 0
    %547 = vmatprep.subr.bf16.mxu0 0
    %548 = vmatpush1.bf16.msra.mxu0 0
    %549 = vmatprep.mubr.bf16.mxu0 0
    %550 = vmatmul.mubr.bf16.gmra.mrb[0].mxu0 %v502
    %v551 = vpop.f32.mrb[0].mxu0
    %v552 = vadd.f32 0.0, %v551
    %v553 = vpop.f32.mrb[0].mxu0
    %v554 = vpop.f32.mrb[0].mxu0
    %v555 = vadd.f32 0.0, %v554
    %v556 = vpop.f32.mrb[0].mxu0
    %557 = vmatprep.mubr.bf16.mxu0 0
    %558 = vmatmul.mubr.bf16.gmra.mrb[0].mxu0 %v505
    %v559 = vpop.f32.mrb[0].mxu0
    %v560 = vadd.f32 0.0, %v559
    %v561 = vpop.f32.mrb[0].mxu0
    %v562 = vpop.f32.mrb[0].mxu0
    %v563 = vadd.f32 0.0, %v562
    %v564 = vpop.f32.mrb[0].mxu0
    %565 = vmatprep.mubr.bf16.mxu0 0
    %566 = vmatmul.mubr.bf16.gmra.mrb[0].mxu0 %v508
    %v567 = vpop.f32.mrb[0].mxu0
    %v568 = vadd.f32 0.0, %v567
    %v569 = vpop.f32.mrb[0].mxu0
    %v570 = vpop.f32.mrb[0].mxu0
    %v571 = vadd.f32 0.0, %v570
    %v572 = vpop.f32.mrb[0].mxu0
    %573 = vmatprep.mubr.bf16.mxu0 0
    %574 = vmatmul.mubr.bf16.gmra.mrb[0].mxu0 %v511
    %v575 = vpop.f32.mrb[0].mxu0
    %v576 = vadd.f32 0.0, %v575
    %v577 = vpop.f32.mrb[0].mxu0
    %v578 = vpop.f32.mrb[0].mxu0
    %v579 = vadd.f32 0.0, %v578
    %v580 = vpop.f32.mrb[0].mxu0
    %581 = vdwg.mxu0
    %v582 = vpack.c.bf16 %v555, %v552
    %v583 = vpack.c.bf16 %v563, %v560
    %v584 = vpack.c.bf16 %v571, %v568
    %v585 = vpack.c.bf16 %v579, %v576
    %v586 = vld [vmem:[%s5] sm:$0xff]
    %v587 = vld [vmem:[%s5 + $0x8] sm:$0xff]
    %v588 = vld [vmem:[%s5 + $0x10] sm:$0xff]
    %v589 = vld [vmem:[%s5 + $0x18] sm:$0xff]
    %v590 = vld [vmem:[%s5 + $0x20] sm:$0xff]
    %v591 = vld [vmem:[%s5 + $0x28] sm:$0xff]
    %v592 = vld [vmem:[%s5 + $0x30] sm:$0xff]
    %v593 = vld [vmem:[%s5 + $0x38] sm:$0xff]
    %v594 = vld [vmem:[%s5 + $0x40] sm:$0xff]
    %v595 = vld [vmem:[%s5 + $0x48] sm:$0xff]
    %v596 = vld [vmem:[%s5 + $0x50] sm:$0xff]
    %v597 = vld [vmem:[%s5 + $0x58] sm:$0xff]
    %v598 = vld [vmem:[%s5 + $0x60] sm:$0xff]
    %v599 = vld [vmem:[%s5 + $0x68] sm:$0xff]
    %v600 = vld [vmem:[%s5 + $0x70] sm:$0xff]
    %v601 = vld [vmem:[%s5 + $0x78] sm:$0xff]
    %v602 = vpack.c.bf16 %v590, %v586
    %v603 = vpack.c.bf16 %v591, %v587
    %v604 = vpack.c.bf16 %v592, %v588
    %v605 = vpack.c.bf16 %v593, %v589
    %v606 = vpack.c.bf16 %v598, %v594
    %v607 = vpack.c.bf16 %v599, %v595
    %v608 = vpack.c.bf16 %v600, %v596
    %v609 = vpack.c.bf16 %v601, %v597
    %v610 = vld [vmem:[%s7] sm:$0xf]
    %v612 = vlaneseq
    %v613 = vshrl.u32 %v612, 7
    %v614 = vsub.s32 0, %v613
    %v615 = vrot.slane %v610, %v614
    %v616 = vlaneseq
    %v617 = vshrl.u32 %v616, 7
    %v618 = vsub.s32 1, %v617
    %v619 = vrot.slane %v610, %v618
    %v620 = vlaneseq
    %v621 = vshrl.u32 %v620, 7
    %v622 = vsub.s32 2, %v621
    %v623 = vrot.slane %v610, %v622
    %v624 = vlaneseq
    %v625 = vshrl.u32 %v624, 7
    %v626 = vsub.s32 3, %v625
    %v627 = vrot.slane %v610, %v626
    %vm632 = vcmask 261120
    %v634 = vsel %vm632, %v582, 0
    %v637 = vsel %vm632, %v583, 0
    %v640 = vsel %vm632, %v584, 0
    %v643 = vsel %vm632, %v585, 0
    %645 = vmatprep.subr.bf16.mxu0 %v603
    %646 = vmatpush1.bf16.msra.mxu0 %v602
    %647 = vmatprep.subr.bf16.mxu0 %v607
    %648 = vmatpush1.bf16.msra.mxu0 %v606
    %649 = vmatprep.subr.bf16.mxu0 0
    %650 = vmatpush1.bf16.msra.mxu0 0
    %651 = vmatprep.subr.bf16.mxu0 0
    %652 = vmatpush1.bf16.msra.mxu0 0
    %653 = vmatprep.subr.bf16.mxu0 0
    %654 = vmatpush1.bf16.msra.mxu0 0
    %655 = vmatprep.subr.bf16.mxu0 0
    %656 = vmatpush1.bf16.msra.mxu0 0
    %657 = vmatprep.subr.bf16.mxu0 0
    %658 = vmatpush1.bf16.msra.mxu0 0
    %659 = vmatprep.subr.bf16.mxu0 0
    %660 = vmatpush1.bf16.msra.mxu0 0
    %661 = vmatprep.subr.bf16.mxu0 0
    %662 = vmatpush1.bf16.msra.mxu0 0
    %663 = vmatprep.subr.bf16.mxu0 0
    %664 = vmatpush1.bf16.msra.mxu0 0
    %665 = vmatprep.subr.bf16.mxu0 0
    %666 = vmatpush1.bf16.msra.mxu0 0
    %667 = vmatprep.subr.bf16.mxu0 0
    %668 = vmatpush1.bf16.msra.mxu0 0
    %669 = vmatprep.subr.bf16.mxu0 0
    %670 = vmatpush1.bf16.msra.mxu0 0
    %671 = vmatprep.subr.bf16.mxu0 0
    %672 = vmatpush1.bf16.msra.mxu0 0
    %673 = vmatprep.subr.bf16.mxu0 0
    %674 = vmatpush1.bf16.msra.mxu0 0
    %675 = vmatprep.subr.bf16.mxu0 0
    %676 = vmatpush1.bf16.msra.mxu0 0
    %677 = vmatprep.mubr.bf16.mxu0 0
    %678 = vmatmul.mubr.bf16.gmra.mrb[0].mxu0 %v634
    %v679 = vpop.f32.mrb[0].mxu0
    %v680 = vadd.f32 %v615, %v679
    %v681 = vpop.f32.mrb[0].mxu0
    %v682 = vadd.f32 %v619, %v681
    %v683 = vpop.f32.mrb[0].mxu0
    %v684 = vadd.f32 %v615, %v683
    %v685 = vpop.f32.mrb[0].mxu0
    %v686 = vadd.f32 %v619, %v685
    %687 = vmatprep.mubr.bf16.mxu0 0
    %688 = vmatmul.mubr.bf16.gmra.mrb[0].mxu0 %v637
    %v689 = vpop.f32.mrb[0].mxu0
    %v690 = vadd.f32 %v615, %v689
    %v691 = vpop.f32.mrb[0].mxu0
    %v692 = vadd.f32 %v619, %v691
    %v693 = vpop.f32.mrb[0].mxu0
    %v694 = vadd.f32 %v615, %v693
    %v695 = vpop.f32.mrb[0].mxu0
    %v696 = vadd.f32 %v619, %v695
    %697 = vmatprep.mubr.bf16.mxu0 0
    %698 = vmatmul.mubr.bf16.gmra.mrb[0].mxu0 %v640
    %v699 = vpop.f32.mrb[0].mxu0
    %v700 = vadd.f32 %v615, %v699
    %v701 = vpop.f32.mrb[0].mxu0
    %v702 = vadd.f32 %v619, %v701
    %v703 = vpop.f32.mrb[0].mxu0
    %v704 = vadd.f32 %v615, %v703
    %v705 = vpop.f32.mrb[0].mxu0
    %v706 = vadd.f32 %v619, %v705
    %707 = vmatprep.mubr.bf16.mxu0 0
    %708 = vmatmul.mubr.bf16.gmra.mrb[0].mxu0 %v643
    %v709 = vpop.f32.mrb[0].mxu0
    %v710 = vadd.f32 %v615, %v709
    %v711 = vpop.f32.mrb[0].mxu0
    %v712 = vadd.f32 %v619, %v711
    %v713 = vpop.f32.mrb[0].mxu0
    %v714 = vadd.f32 %v615, %v713
    %v715 = vpop.f32.mrb[0].mxu0
    %v716 = vadd.f32 %v619, %v715
    %717 = vdwg.mxu0
    %718 = vmatprep.subr.bf16.mxu0 %v605
    %719 = vmatpush1.bf16.msra.mxu0 %v604
    %720 = vmatprep.subr.bf16.mxu0 %v609
    %721 = vmatpush1.bf16.msra.mxu0 %v608
    %722 = vmatprep.subr.bf16.mxu0 0
    %723 = vmatpush1.bf16.msra.mxu0 0
    %724 = vmatprep.subr.bf16.mxu0 0
    %725 = vmatpush1.bf16.msra.mxu0 0
    %726 = vmatprep.subr.bf16.mxu0 0
    %727 = vmatpush1.bf16.msra.mxu0 0
    %728 = vmatprep.subr.bf16.mxu0 0
    %729 = vmatpush1.bf16.msra.mxu0 0
    %730 = vmatprep.subr.bf16.mxu0 0
    %731 = vmatpush1.bf16.msra.mxu0 0
    %732 = vmatprep.subr.bf16.mxu0 0
    %733 = vmatpush1.bf16.msra.mxu0 0
    %734 = vmatprep.subr.bf16.mxu0 0
    %735 = vmatpush1.bf16.msra.mxu0 0
    %736 = vmatprep.subr.bf16.mxu0 0
    %737 = vmatpush1.bf16.msra.mxu0 0
    %738 = vmatprep.subr.bf16.mxu0 0
    %739 = vmatpush1.bf16.msra.mxu0 0
    %740 = vmatprep.subr.bf16.mxu0 0
    %741 = vmatpush1.bf16.msra.mxu0 0
    %742 = vmatprep.subr.bf16.mxu0 0
    %743 = vmatpush1.bf16.msra.mxu0 0
    %744 = vmatprep.subr.bf16.mxu0 0
    %745 = vmatpush1.bf16.msra.mxu0 0
    %746 = vmatprep.subr.bf16.mxu0 0
    %747 = vmatpush1.bf16.msra.mxu0 0
    %748 = vmatprep.subr.bf16.mxu0 0
    %749 = vmatpush1.bf16.msra.mxu0 0
    %750 = vmatprep.mubr.bf16.mxu0 0
    %751 = vmatmul.mubr.bf16.gmra.mrb[0].mxu0 %v634
    %v752 = vpop.f32.mrb[0].mxu0
    %v753 = vadd.f32 %v623, %v752
    %v754 = vpop.f32.mrb[0].mxu0
    %v755 = vadd.f32 %v627, %v754
    %v756 = vpop.f32.mrb[0].mxu0
    %v757 = vadd.f32 %v623, %v756
    %v758 = vpop.f32.mrb[0].mxu0
    %v759 = vadd.f32 %v627, %v758
    %760 = vmatprep.mubr.bf16.mxu0 0
    %761 = vmatmul.mubr.bf16.gmra.mrb[0].mxu0 %v637
    %v762 = vpop.f32.mrb[0].mxu0
    %v763 = vadd.f32 %v623, %v762
    %v764 = vpop.f32.mrb[0].mxu0
    %v765 = vadd.f32 %v627, %v764
    %v766 = vpop.f32.mrb[0].mxu0
    %v767 = vadd.f32 %v623, %v766
    %v768 = vpop.f32.mrb[0].mxu0
    %v769 = vadd.f32 %v627, %v768
    %770 = vmatprep.mubr.bf16.mxu0 0
    %771 = vmatmul.mubr.bf16.gmra.mrb[0].mxu0 %v640
    %v772 = vpop.f32.mrb[0].mxu0
    %v773 = vadd.f32 %v623, %v772
    %v774 = vpop.f32.mrb[0].mxu0
    %v775 = vadd.f32 %v627, %v774
    %v776 = vpop.f32.mrb[0].mxu0
    %v777 = vadd.f32 %v623, %v776
    %v778 = vpop.f32.mrb[0].mxu0
    %v779 = vadd.f32 %v627, %v778
    %780 = vmatprep.mubr.bf16.mxu0 0
    %781 = vmatmul.mubr.bf16.gmra.mrb[0].mxu0 %v643
    %v782 = vpop.f32.mrb[0].mxu0
    %v783 = vadd.f32 %v623, %v782
    %v784 = vpop.f32.mrb[0].mxu0
    %v785 = vadd.f32 %v627, %v784
    %v786 = vpop.f32.mrb[0].mxu0
    %v787 = vadd.f32 %v623, %v786
    %v788 = vpop.f32.mrb[0].mxu0
    %v789 = vadd.f32 %v627, %v788
    %790 = vdwg.mxu0
    %791 = vst [vmem:[#allocation2] sm:$0xff] %v680
    %792 = vst [vmem:[#allocation2 + $0x8] sm:$0xff] %v682
    %793 = vst [vmem:[#allocation2 + $0x10] sm:$0xff] %v753
    %794 = vst [vmem:[#allocation2 + $0x18] sm:$0xff] %v755
    %795 = vst [vmem:[#allocation2 + $0x20] sm:$0xff] %v684
    %796 = vst [vmem:[#allocation2 + $0x28] sm:$0xff] %v686
    %797 = vst [vmem:[#allocation2 + $0x30] sm:$0xff] %v757
    %798 = vst [vmem:[#allocation2 + $0x38] sm:$0xff] %v759
    %799 = vst [vmem:[#allocation2 + $0x40] sm:$0xff] %v690
    %800 = vst [vmem:[#allocation2 + $0x48] sm:$0xff] %v692
    %801 = vst [vmem:[#allocation2 + $0x50] sm:$0xff] %v763
    %802 = vst [vmem:[#allocation2 + $0x58] sm:$0xff] %v765
    %803 = vst [vmem:[#allocation2 + $0x60] sm:$0xff] %v694
    %804 = vst [vmem:[#allocation2 + $0x68] sm:$0xff] %v696
    %805 = vst [vmem:[#allocation2 + $0x70] sm:$0xff] %v767
    %806 = vst [vmem:[#allocation2 + $0x78] sm:$0xff] %v769
    %807 = vst [vmem:[#allocation2 + $0x80] sm:$0xff] %v700
    %808 = vst [vmem:[#allocation2 + $0x88] sm:$0xff] %v702
    %809 = vst [vmem:[#allocation2 + $0x90] sm:$0xff] %v773
    %810 = vst [vmem:[#allocation2 + $0x98] sm:$0xff] %v775
    %811 = vst [vmem:[#allocation2 + $0xa0] sm:$0xff] %v704
    %812 = vst [vmem:[#allocation2 + $0xa8] sm:$0xff] %v706
    %813 = vst [vmem:[#allocation2 + $0xb0] sm:$0xff] %v777
    %814 = vst [vmem:[#allocation2 + $0xb8] sm:$0xff] %v779
    %815 = vst [vmem:[#allocation2 + $0xc0] sm:$0xff] %v710
    %816 = vst [vmem:[#allocation2 + $0xc8] sm:$0xff] %v712
    %817 = vst [vmem:[#allocation2 + $0xd0] sm:$0xff] %v783
    %818 = vst [vmem:[#allocation2 + $0xd8] sm:$0xff] %v785
    %819 = vst [vmem:[#allocation2 + $0xe0] sm:$0xff] %v714
    %820 = vst [vmem:[#allocation2 + $0xe8] sm:$0xff] %v716
    %821 = vst [vmem:[#allocation2 + $0xf0] sm:$0xff] %v787
    %822 = vst [vmem:[#allocation2 + $0xf8] sm:$0xff] %v789
    %v823 = vld [vmem:[%s6] sm:$0xff]
    %v824 = vld [vmem:[%s6 + $0x8] sm:$0xff]
    %v825 = vld [vmem:[%s6 + $0x10] sm:$0xff]
    %v826 = vld [vmem:[%s6 + $0x18] sm:$0xff]
    %v827 = vld [vmem:[%s6 + $0x20] sm:$0xff]
    %v828 = vld [vmem:[%s6 + $0x28] sm:$0xff]
    %v829 = vld [vmem:[%s6 + $0x30] sm:$0xff]
    %v830 = vld [vmem:[%s6 + $0x38] sm:$0xff]
    %v831 = vld [vmem:[%s6 + $0x40] sm:$0xff]
    %v832 = vld [vmem:[%s6 + $0x48] sm:$0xff]
    %v833 = vld [vmem:[%s6 + $0x50] sm:$0xff]
    %v834 = vld [vmem:[%s6 + $0x58] sm:$0xff]
    %v835 = vld [vmem:[%s6 + $0x60] sm:$0xff]
    %v836 = vld [vmem:[%s6 + $0x68] sm:$0xff]
    %v837 = vld [vmem:[%s6 + $0x70] sm:$0xff]
    %v838 = vld [vmem:[%s6 + $0x78] sm:$0xff]
    %v839 = vld [vmem:[%s6 + $0x80] sm:$0xff]
    %v840 = vld [vmem:[%s6 + $0x88] sm:$0xff]
    %v841 = vld [vmem:[%s6 + $0x90] sm:$0xff]
    %v842 = vld [vmem:[%s6 + $0x98] sm:$0xff]
    %v843 = vld [vmem:[%s6 + $0xa0] sm:$0xff]
    %v844 = vld [vmem:[%s6 + $0xa8] sm:$0xff]
    %v845 = vld [vmem:[%s6 + $0xb0] sm:$0xff]
    %v846 = vld [vmem:[%s6 + $0xb8] sm:$0xff]
    %v847 = vld [vmem:[%s6 + $0xc0] sm:$0xff]
    %v848 = vld [vmem:[%s6 + $0xc8] sm:$0xff]
    %v849 = vld [vmem:[%s6 + $0xd0] sm:$0xff]
    %v850 = vld [vmem:[%s6 + $0xd8] sm:$0xff]
    %v851 = vld [vmem:[%s6 + $0xe0] sm:$0xff]
    %v852 = vld [vmem:[%s6 + $0xe8] sm:$0xff]
    %v853 = vld [vmem:[%s6 + $0xf0] sm:$0xff]
    %v854 = vld [vmem:[%s6 + $0xf8] sm:$0xff]
    %v855 = vld [vmem:[%s6 + $0x100] sm:$0xff]
    %v856 = vld [vmem:[%s6 + $0x108] sm:$0xff]
    %v857 = vld [vmem:[%s6 + $0x110] sm:$0xff]
    %v858 = vld [vmem:[%s6 + $0x118] sm:$0xff]
    %v859 = vld [vmem:[%s6 + $0x120] sm:$0xff]
    %v860 = vld [vmem:[%s6 + $0x128] sm:$0xff]
    %v861 = vld [vmem:[%s6 + $0x130] sm:$0xff]
    %v862 = vld [vmem:[%s6 + $0x138] sm:$0xff]
    %v863 = vld [vmem:[%s6 + $0x140] sm:$0xff]
    %v864 = vld [vmem:[%s6 + $0x148] sm:$0xff]
    %v865 = vld [vmem:[%s6 + $0x150] sm:$0xff]
    %v866 = vld [vmem:[%s6 + $0x158] sm:$0xff]
    %v867 = vld [vmem:[%s6 + $0x160] sm:$0xff]
    %v868 = vld [vmem:[%s6 + $0x168] sm:$0xff]
    %v869 = vld [vmem:[%s6 + $0x170] sm:$0xff]
    %v870 = vld [vmem:[%s6 + $0x178] sm:$0xff]
    %v871 = vld [vmem:[%s6 + $0x180] sm:$0xff]
    %v872 = vld [vmem:[%s6 + $0x188] sm:$0xff]
    %v873 = vld [vmem:[%s6 + $0x190] sm:$0xff]
    %v874 = vld [vmem:[%s6 + $0x198] sm:$0xff]
    %v875 = vld [vmem:[%s6 + $0x1a0] sm:$0xff]
    %v876 = vld [vmem:[%s6 + $0x1a8] sm:$0xff]
    %v877 = vld [vmem:[%s6 + $0x1b0] sm:$0xff]
    %v878 = vld [vmem:[%s6 + $0x1b8] sm:$0xff]
    %v879 = vld [vmem:[%s6 + $0x1c0] sm:$0xff]
    %v880 = vld [vmem:[%s6 + $0x1c8] sm:$0xff]
    %v881 = vld [vmem:[%s6 + $0x1d0] sm:$0xff]
    %v882 = vld [vmem:[%s6 + $0x1d8] sm:$0xff]
    %v883 = vld [vmem:[%s6 + $0x1e0] sm:$0xff]
    %v884 = vld [vmem:[%s6 + $0x1e8] sm:$0xff]
    %v885 = vld [vmem:[%s6 + $0x1f0] sm:$0xff]
    %v886 = vld [vmem:[%s6 + $0x1f8] sm:$0xff]
    %v887 = vpack.c.bf16 %v827, %v823
    %v888 = vpack.c.bf16 %v828, %v824
    %v889 = vpack.c.bf16 %v829, %v825
    %v890 = vpack.c.bf16 %v830, %v826
    %v891 = vpack.c.bf16 %v835, %v831
    %v892 = vpack.c.bf16 %v836, %v832
    %v893 = vpack.c.bf16 %v837, %v833
    %v894 = vpack.c.bf16 %v838, %v834
    %v895 = vpack.c.bf16 %v843, %v839
    %v896 = vpack.c.bf16 %v844, %v840
    %v897 = vpack.c.bf16 %v845, %v841
    %v898 = vpack.c.bf16 %v846, %v842
    %v899 = vpack.c.bf16 %v851, %v847
    %v900 = vpack.c.bf16 %v852, %v848
    %v901 = vpack.c.bf16 %v853, %v849
    %v902 = vpack.c.bf16 %v854, %v850
    %v903 = vpack.c.bf16 %v859, %v855
    %v904 = vpack.c.bf16 %v860, %v856
    %v905 = vpack.c.bf16 %v861, %v857
    %v906 = vpack.c.bf16 %v862, %v858
    %v907 = vpack.c.bf16 %v867, %v863
    %v908 = vpack.c.bf16 %v868, %v864
    %v909 = vpack.c.bf16 %v869, %v865
    %v910 = vpack.c.bf16 %v870, %v866
    %v911 = vpack.c.bf16 %v875, %v871
    %v912 = vpack.c.bf16 %v876, %v872
    %v913 = vpack.c.bf16 %v877, %v873
    %v914 = vpack.c.bf16 %v878, %v874
    %v915 = vpack.c.bf16 %v883, %v879
    %v916 = vpack.c.bf16 %v884, %v880
    %v917 = vpack.c.bf16 %v885, %v881
    %v918 = vpack.c.bf16 %v886, %v882
    %s919 = smul.u32 0, 4
    %s920 = smul.addr %s919, 8
    %s921 = scalar_lea.vmem [#allocation2], %s920
    %v922 = vld [vmem:[%s921] sm:$0xff]
    %v923 = vld [vmem:[%s921 + $0x8] sm:$0xff]
    %v924 = vld [vmem:[%s921 + $0x10] sm:$0xff]
    %v925 = vld [vmem:[%s921 + $0x18] sm:$0xff]
    %926 = vmatprep.subr.bf16.mxu0 %v888
    %927 = vmatpush1.bf16.msra.mxu0 %v887
    %928 = vmatprep.subr.bf16.mxu0 %v892
    %929 = vmatpush1.bf16.msra.mxu0 %v891
    %930 = vmatprep.subr.bf16.mxu0 %v896
    %931 = vmatpush1.bf16.msra.mxu0 %v895
    %932 = vmatprep.subr.bf16.mxu0 %v900
    %933 = vmatpush1.bf16.msra.mxu0 %v899
    %934 = vmatprep.subr.bf16.mxu0 %v904
    %935 = vmatpush1.bf16.msra.mxu0 %v903
    %936 = vmatprep.subr.bf16.mxu0 %v908
    %937 = vmatpush1.bf16.msra.mxu0 %v907
    %938 = vmatprep.subr.bf16.mxu0 %v912
    %939 = vmatpush1.bf16.msra.mxu0 %v911
    %940 = vmatprep.subr.bf16.mxu0 %v916
    %941 = vmatpush1.bf16.msra.mxu0 %v915
    %942 = vmatprep.subr.bf16.mxu0 0
    %943 = vmatpush1.bf16.msra.mxu0 0
    %944 = vmatprep.subr.bf16.mxu0 0
    %945 = vmatpush1.bf16.msra.mxu0 0
    %946 = vmatprep.subr.bf16.mxu0 0
    %947 = vmatpush1.bf16.msra.mxu0 0
    %948 = vmatprep.subr.bf16.mxu0 0
    %949 = vmatpush1.bf16.msra.mxu0 0
    %950 = vmatprep.subr.bf16.mxu0 0
    %951 = vmatpush1.bf16.msra.mxu0 0
    %952 = vmatprep.subr.bf16.mxu0 0
    %953 = vmatpush1.bf16.msra.mxu0 0
    %954 = vmatprep.subr.bf16.mxu0 0
    %955 = vmatpush1.bf16.msra.mxu0 0
    %956 = vmatprep.subr.bf16.mxu0 0
    %957 = vmatpush1.bf16.msra.mxu0 0
    %958 = vmatprep.mubr.bf16.mxu0 0
    %959 = vmatmul.mubr.bf16.gmra.mrb[0].mxu0 0
    %v960 = vpop.f32.mrb[0].mxu0
    %v961 = vadd.f32 0.0, %v960
    %v962 = vpop.f32.mrb[0].mxu0
    %v963 = vadd.f32 0.0, %v962
    %v964 = vpop.f32.mrb[0].mxu0
    %v965 = vpop.f32.mrb[0].mxu0
    %966 = vdwg.mxu0
    %967 = vmatprep.subr.bf16.mxu0 %v890
    %968 = vmatpush1.bf16.msra.mxu0 %v889
    %969 = vmatprep.subr.bf16.mxu0 %v894
    %970 = vmatpush1.bf16.msra.mxu0 %v893
    %971 = vmatprep.subr.bf16.mxu0 %v898
    %972 = vmatpush1.bf16.msra.mxu0 %v897
    %973 = vmatprep.subr.bf16.mxu0 %v902
    %974 = vmatpush1.bf16.msra.mxu0 %v901
    %975 = vmatprep.subr.bf16.mxu0 %v906
    %976 = vmatpush1.bf16.msra.mxu0 %v905
    %977 = vmatprep.subr.bf16.mxu0 %v910
    %978 = vmatpush1.bf16.msra.mxu0 %v909
    %979 = vmatprep.subr.bf16.mxu0 %v914
    %980 = vmatpush1.bf16.msra.mxu0 %v913
    %981 = vmatprep.subr.bf16.mxu0 %v918
    %982 = vmatpush1.bf16.msra.mxu0 %v917
    %983 = vmatprep.subr.bf16.mxu0 0
    %984 = vmatpush1.bf16.msra.mxu0 0
    %985 = vmatprep.subr.bf16.mxu0 0
    %986 = vmatpush1.bf16.msra.mxu0 0
    %987 = vmatprep.subr.bf16.mxu0 0
    %988 = vmatpush1.bf16.msra.mxu0 0
    %989 = vmatprep.subr.bf16.mxu0 0
    %990 = vmatpush1.bf16.msra.mxu0 0
    %991 = vmatprep.subr.bf16.mxu0 0
    %992 = vmatpush1.bf16.msra.mxu0 0
    %993 = vmatprep.subr.bf16.mxu0 0
    %994 = vmatpush1.bf16.msra.mxu0 0
    %995 = vmatprep.subr.bf16.mxu0 0
    %996 = vmatpush1.bf16.msra.mxu0 0
    %997 = vmatprep.subr.bf16.mxu0 0
    %998 = vmatpush1.bf16.msra.mxu0 0
    %999 = vmatprep.mubr.bf16.mxu0 0
    %1000 = vmatmul.mubr.bf16.gmra.mrb[0].mxu0 0
    %v1001 = vpop.f32.mrb[0].mxu0
    %v1002 = vadd.f32 0.0, %v1001
    %v1003 = vpop.f32.mrb[0].mxu0
    %v1004 = vadd.f32 0.0, %v1003
    %v1005 = vpop.f32.mrb[0].mxu0
    %v1006 = vpop.f32.mrb[0].mxu0
    %1007 = vdwg.mxu0
    %v1008 = vadd.f32 %v922, %v961
    %v1009 = vadd.f32 %v923, %v963
    %v1010 = vadd.f32 %v924, %v1002
    %v1011 = vadd.f32 %v925, %v1004
    %v1012 = vxor.u32 %v1008, 2147483648
    %v1013 = vmul.f32 %v1012, 1.442695
    %v1014 = vpow.pop %v1013
    %v1015 = vadd.f32 %v1014, 1.0
    %v1016 = vrcp.pop %v1015
    %v1017 = vmul.f32 1.0, %v1016
    %v1018 = vxor.u32 %v1009, 2147483648
    %v1019 = vmul.f32 %v1018, 1.442695
    %v1020 = vpow.pop %v1019
    %v1021 = vadd.f32 %v1020, 1.0
    %v1022 = vrcp.pop %v1021
    %v1023 = vmul.f32 1.0, %v1022
    %v1024 = vtanh.pop %v1010
    %v1025 = vxor.u32 %v1011, 2147483648
    %v1026 = vmul.f32 %v1025, 1.442695
    %v1027 = vpow.pop %v1026
    %v1028 = vadd.f32 %v1027, 1.0
    %v1029 = vrcp.pop %v1028
    %v1030 = vmul.f32 1.0, %v1029
    %v1031 = vmul.f32 %v1023, 0.0
    %v1032 = vmul.f32 %v1017, %v1024
    %v1033 = vadd.f32 %v1031, %v1032
    %v1034 = vtanh.pop %v1033
    %v1035 = vmul.f32 %v1030, %v1034
    %s1036 = smul.u32 1, 4
    %s1037 = smul.addr %s1036, 8
    %s1038 = scalar_lea.vmem [#allocation2], %s1037
    %v1039 = vld [vmem:[%s1038] sm:$0xff]
    %v1040 = vld [vmem:[%s1038 + $0x8] sm:$0xff]
    %v1041 = vld [vmem:[%s1038 + $0x10] sm:$0xff]
    %v1042 = vld [vmem:[%s1038 + $0x18] sm:$0xff]
    %v1043 = vpack.c.bf16 %v1035, %v1035
    %1044 = vmatprep.subr.bf16.mxu0 %v888
    %1045 = vmatpush1.bf16.msra.mxu0 %v887
    %1046 = vmatprep.subr.bf16.mxu0 %v892
    %1047 = vmatpush1.bf16.msra.mxu0 %v891
    %1048 = vmatprep.subr.bf16.mxu0 %v896
    %1049 = vmatpush1.bf16.msra.mxu0 %v895
    %1050 = vmatprep.subr.bf16.mxu0 %v900
    %1051 = vmatpush1.bf16.msra.mxu0 %v899
    %1052 = vmatprep.subr.bf16.mxu0 %v904
    %1053 = vmatpush1.bf16.msra.mxu0 %v903
    %1054 = vmatprep.subr.bf16.mxu0 %v908
    %1055 = vmatpush1.bf16.msra.mxu0 %v907
    %1056 = vmatprep.subr.bf16.mxu0 %v912
    %1057 = vmatpush1.bf16.msra.mxu0 %v911
    %1058 = vmatprep.subr.bf16.mxu0 %v916
    %1059 = vmatpush1.bf16.msra.mxu0 %v915
    %1060 = vmatprep.subr.bf16.mxu0 0
    %1061 = vmatpush1.bf16.msra.mxu0 0
    %1062 = vmatprep.subr.bf16.mxu0 0
    %1063 = vmatpush1.bf16.msra.mxu0 0
    %1064 = vmatprep.subr.bf16.mxu0 0
    %1065 = vmatpush1.bf16.msra.mxu0 0
    %1066 = vmatprep.subr.bf16.mxu0 0
    %1067 = vmatpush1.bf16.msra.mxu0 0
    %1068 = vmatprep.subr.bf16.mxu0 0
    %1069 = vmatpush1.bf16.msra.mxu0 0
    %1070 = vmatprep.subr.bf16.mxu0 0
    %1071 = vmatpush1.bf16.msra.mxu0 0
    %1072 = vmatprep.subr.bf16.mxu0 0
    %1073 = vmatpush1.bf16.msra.mxu0 0
    %1074 = vmatprep.subr.bf16.mxu0 0
    %1075 = vmatpush1.bf16.msra.mxu0 0
    %1076 = vmatprep.mubr.bf16.mxu0 0
    %1077 = vmatmul.mubr.bf16.gmra.mrb[0].mxu0 %v1043
    %v1078 = vpop.f32.mrb[0].mxu0
    %v1079 = vadd.f32 0.0, %v1078
    %v1080 = vpop.f32.mrb[0].mxu0
    %v1081 = vadd.f32 0.0, %v1080
    %v1082 = vpop.f32.mrb[0].mxu0
    %v1083 = vpop.f32.mrb[0].mxu0
    %1084 = vdwg.mxu0
    %1085 = vmatprep.subr.bf16.mxu0 %v890
    %1086 = vmatpush1.bf16.msra.mxu0 %v889
    %1087 = vmatprep.subr.bf16.mxu0 %v894
    %1088 = vmatpush1.bf16.msra.mxu0 %v893
    %1089 = vmatprep.subr.bf16.mxu0 %v898
    %1090 = vmatpush1.bf16.msra.mxu0 %v897
    %1091 = vmatprep.subr.bf16.mxu0 %v902
    %1092 = vmatpush1.bf16.msra.mxu0 %v901
    %1093 = vmatprep.subr.bf16.mxu0 %v906
    %1094 = vmatpush1.bf16.msra.mxu0 %v905
    %1095 = vmatprep.subr.bf16.mxu0 %v910
    %1096 = vmatpush1.bf16.msra.mxu0 %v909
    %1097 = vmatprep.subr.bf16.mxu0 %v914
    %1098 = vmatpush1.bf16.msra.mxu0 %v913
    %1099 = vmatprep.subr.bf16.mxu0 %v918
    %1100 = vmatpush1.bf16.msra.mxu0 %v917
    %1101 = vmatprep.subr.bf16.mxu0 0
    %1102 = vmatpush1.bf16.msra.mxu0 0
    %1103 = vmatprep.subr.bf16.mxu0 0
    %1104 = vmatpush1.bf16.msra.mxu0 0
    %1105 = vmatprep.subr.bf16.mxu0 0
    %1106 = vmatpush1.bf16.msra.mxu0 0
    %1107 = vmatprep.subr.bf16.mxu0 0
    %1108 = vmatpush1.bf16.msra.mxu0 0
    %1109 = vmatprep.subr.bf16.mxu0 0
    %1110 = vmatpush1.bf16.msra.mxu0 0
    %1111 = vmatprep.subr.bf16.mxu0 0
    %1112 = vmatpush1.bf16.msra.mxu0 0
    %1113 = vmatprep.subr.bf16.mxu0 0
    %1114 = vmatpush1.bf16.msra.mxu0 0
    %1115 = vmatprep.subr.bf16.mxu0 0
    %1116 = vmatpush1.bf16.msra.mxu0 0
    %1117 = vmatprep.mubr.bf16.mxu0 0
    %1118 = vmatmul.mubr.bf16.gmra.mrb[0].mxu0 %v1043
    %v1119 = vpop.f32.mrb[0].mxu0
    %v1120 = vadd.f32 0.0, %v1119
    %v1121 = vpop.f32.mrb[0].mxu0
    %v1122 = vadd.f32 0.0, %v1121
    %v1123 = vpop.f32.mrb[0].mxu0
    %v1124 = vpop.f32.mrb[0].mxu0
    %1125 = vdwg.mxu0
    %v1126 = vadd.f32 %v1039, %v1079
    %v1127 = vadd.f32 %v1040, %v1081
    %v1128 = vadd.f32 %v1041, %v1120
    %v1129 = vadd.f32 %v1042, %v1122
    %v1130 = vxor.u32 %v1126, 2147483648
    %v1131 = vmul.f32 %v1130, 1.442695
    %v1132 = vpow.pop %v1131
    %v1133 = vadd.f32 %v1132, 1.0
    %v1134 = vrcp.pop %v1133
    %v1135 = vmul.f32 1.0, %v1134
    %v1136 = vxor.u32 %v1127, 2147483648
    %v1137 = vmul.f32 %v1136, 1.442695
    %v1138 = vpow.pop %v1137
    %v1139 = vadd.f32 %v1138, 1.0
    %v1140 = vrcp.pop %v1139
    %v1141 = vmul.f32 1.0, %v1140
    %v1142 = vtanh.pop %v1128
    %v1143 = vxor.u32 %v1129, 2147483648
    %v1144 = vmul.f32 %v1143, 1.442695
    %v1145 = vpow.pop %v1144
    %v1146 = vadd.f32 %v1145, 1.0
    %v1147 = vrcp.pop %v1146
    %v1148 = vmul.f32 1.0, %v1147
    %v1149 = vmul.f32 %v1141, %v1033
    %v1150 = vmul.f32 %v1135, %v1142
    %v1151 = vadd.f32 %v1149, %v1150
    %v1152 = vtanh.pop %v1151
    %v1153 = vmul.f32 %v1148, %v1152
    %s1154 = smul.u32 2, 4
    %s1155 = smul.addr %s1154, 8
    %s1156 = scalar_lea.vmem [#allocation2], %s1155
    %v1157 = vld [vmem:[%s1156] sm:$0xff]
    %v1158 = vld [vmem:[%s1156 + $0x8] sm:$0xff]
    %v1159 = vld [vmem:[%s1156 + $0x10] sm:$0xff]
    %v1160 = vld [vmem:[%s1156 + $0x18] sm:$0xff]
    %v1161 = vpack.c.bf16 %v1153, %v1153
    %1162 = vmatprep.subr.bf16.mxu0 %v888
    %1163 = vmatpush1.bf16.msra.mxu0 %v887
    %1164 = vmatprep.subr.bf16.mxu0 %v892
    %1165 = vmatpush1.bf16.msra.mxu0 %v891
    %1166 = vmatprep.subr.bf16.mxu0 %v896
    %1167 = vmatpush1.bf16.msra.mxu0 %v895
    %1168 = vmatprep.subr.bf16.mxu0 %v900
    %1169 = vmatpush1.bf16.msra.mxu0 %v899
    %1170 = vmatprep.subr.bf16.mxu0 %v904
    %1171 = vmatpush1.bf16.msra.mxu0 %v903
    %1172 = vmatprep.subr.bf16.mxu0 %v908
    %1173 = vmatpush1.bf16.msra.mxu0 %v907
    %1174 = vmatprep.subr.bf16.mxu0 %v912
    %1175 = vmatpush1.bf16.msra.mxu0 %v911
    %1176 = vmatprep.subr.bf16.mxu0 %v916
    %1177 = vmatpush1.bf16.msra.mxu0 %v915
    %1178 = vmatprep.subr.bf16.mxu0 0
    %1179 = vmatpush1.bf16.msra.mxu0 0
    %1180 = vmatprep.subr.bf16.mxu0 0
    %1181 = vmatpush1.bf16.msra.mxu0 0
    %1182 = vmatprep.subr.bf16.mxu0 0
    %1183 = vmatpush1.bf16.msra.mxu0 0
    %1184 = vmatprep.subr.bf16.mxu0 0
    %1185 = vmatpush1.bf16.msra.mxu0 0
    %1186 = vmatprep.subr.bf16.mxu0 0
    %1187 = vmatpush1.bf16.msra.mxu0 0
    %1188 = vmatprep.subr.bf16.mxu0 0
    %1189 = vmatpush1.bf16.msra.mxu0 0
    %1190 = vmatprep.subr.bf16.mxu0 0
    %1191 = vmatpush1.bf16.msra.mxu0 0
    %1192 = vmatprep.subr.bf16.mxu0 0
    %1193 = vmatpush1.bf16.msra.mxu0 0
    %1194 = vmatprep.mubr.bf16.mxu0 0
    %1195 = vmatmul.mubr.bf16.gmra.mrb[0].mxu0 %v1161
    %v1196 = vpop.f32.mrb[0].mxu0
    %v1197 = vadd.f32 0.0, %v1196
    %v1198 = vpop.f32.mrb[0].mxu0
    %v1199 = vadd.f32 0.0, %v1198
    %v1200 = vpop.f32.mrb[0].mxu0
    %v1201 = vpop.f32.mrb[0].mxu0
    %1202 = vdwg.mxu0
    %1203 = vmatprep.subr.bf16.mxu0 %v890
    %1204 = vmatpush1.bf16.msra.mxu0 %v889
    %1205 = vmatprep.subr.bf16.mxu0 %v894
    %1206 = vmatpush1.bf16.msra.mxu0 %v893
    %1207 = vmatprep.subr.bf16.mxu0 %v898
    %1208 = vmatpush1.bf16.msra.mxu0 %v897
    %1209 = vmatprep.subr.bf16.mxu0 %v902
    %1210 = vmatpush1.bf16.msra.mxu0 %v901
    %1211 = vmatprep.subr.bf16.mxu0 %v906
    %1212 = vmatpush1.bf16.msra.mxu0 %v905
    %1213 = vmatprep.subr.bf16.mxu0 %v910
    %1214 = vmatpush1.bf16.msra.mxu0 %v909
    %1215 = vmatprep.subr.bf16.mxu0 %v914
    %1216 = vmatpush1.bf16.msra.mxu0 %v913
    %1217 = vmatprep.subr.bf16.mxu0 %v918
    %1218 = vmatpush1.bf16.msra.mxu0 %v917
    %1219 = vmatprep.subr.bf16.mxu0 0
    %1220 = vmatpush1.bf16.msra.mxu0 0
    %1221 = vmatprep.subr.bf16.mxu0 0
    %1222 = vmatpush1.bf16.msra.mxu0 0
    %1223 = vmatprep.subr.bf16.mxu0 0
    %1224 = vmatpush1.bf16.msra.mxu0 0
    %1225 = vmatprep.subr.bf16.mxu0 0
    %1226 = vmatpush1.bf16.msra.mxu0 0
    %1227 = vmatprep.subr.bf16.mxu0 0
    %1228 = vmatpush1.bf16.msra.mxu0 0
    %1229 = vmatprep.subr.bf16.mxu0 0
    %1230 = vmatpush1.bf16.msra.mxu0 0
    %1231 = vmatprep.subr.bf16.mxu0 0
    %1232 = vmatpush1.bf16.msra.mxu0 0
    %1233 = vmatprep.subr.bf16.mxu0 0
    %1234 = vmatpush1.bf16.msra.mxu0 0
    %1235 = vmatprep.mubr.bf16.mxu0 0
    %1236 = vmatmul.mubr.bf16.gmra.mrb[0].mxu0 %v1161
    %v1237 = vpop.f32.mrb[0].mxu0
    %v1238 = vadd.f32 0.0, %v1237
    %v1239 = vpop.f32.mrb[0].mxu0
    %v1240 = vadd.f32 0.0, %v1239
    %v1241 = vpop.f32.mrb[0].mxu0
    %v1242 = vpop.f32.mrb[0].mxu0
    %1243 = vdwg.mxu0
    %v1244 = vadd.f32 %v1157, %v1197
    %v1245 = vadd.f32 %v1158, %v1199
    %v1246 = vadd.f32 %v1159, %v1238
    %v1247 = vadd.f32 %v1160, %v1240
    %v1248 = vxor.u32 %v1244, 2147483648
    %v1249 = vmul.f32 %v1248, 1.442695
    %v1250 = vpow.pop %v1249
    %v1251 = vadd.f32 %v1250, 1.0
    %v1252 = vrcp.pop %v1251
    %v1253 = vmul.f32 1.0, %v1252
    %v1254 = vxor.u32 %v1245, 2147483648
    %v1255 = vmul.f32 %v1254, 1.442695
    %v1256 = vpow.pop %v1255
    %v1257 = vadd.f32 %v1256, 1.0
    %v1258 = vrcp.pop %v1257
    %v1259 = vmul.f32 1.0, %v1258
    %v1260 = vtanh.pop %v1246
    %v1261 = vxor.u32 %v1247, 2147483648
    %v1262 = vmul.f32 %v1261, 1.442695
    %v1263 = vpow.pop %v1262
    %v1264 = vadd.f32 %v1263, 1.0
    %v1265 = vrcp.pop %v1264
    %v1266 = vmul.f32 1.0, %v1265
    %v1267 = vmul.f32 %v1259, %v1151
    %v1268 = vmul.f32 %v1253, %v1260
    %v1269 = vadd.f32 %v1267, %v1268
    %v1270 = vtanh.pop %v1269
    %v1271 = vmul.f32 %v1266, %v1270
    %s1272 = smul.u32 3, 4
    %s1273 = smul.addr %s1272, 8
    %s1274 = scalar_lea.vmem [#allocation2], %s1273
    %v1275 = vld [vmem:[%s1274] sm:$0xff]
    %v1276 = vld [vmem:[%s1274 + $0x8] sm:$0xff]
    %v1277 = vld [vmem:[%s1274 + $0x10] sm:$0xff]
    %v1278 = vld [vmem:[%s1274 + $0x18] sm:$0xff]
    %v1279 = vpack.c.bf16 %v1271, %v1271
    %1280 = vmatprep.subr.bf16.mxu0 %v888
    %1281 = vmatpush1.bf16.msra.mxu0 %v887
    %1282 = vmatprep.subr.bf16.mxu0 %v892
    %1283 = vmatpush1.bf16.msra.mxu0 %v891
    %1284 = vmatprep.subr.bf16.mxu0 %v896
    %1285 = vmatpush1.bf16.msra.mxu0 %v895
    %1286 = vmatprep.subr.bf16.mxu0 %v900
    %1287 = vmatpush1.bf16.msra.mxu0 %v899
    %1288 = vmatprep.subr.bf16.mxu0 %v904
    %1289 = vmatpush1.bf16.msra.mxu0 %v903
    %1290 = vmatprep.subr.bf16.mxu0 %v908
    %1291 = vmatpush1.bf16.msra.mxu0 %v907
    %1292 = vmatprep.subr.bf16.mxu0 %v912
    %1293 = vmatpush1.bf16.msra.mxu0 %v911
    %1294 = vmatprep.subr.bf16.mxu0 %v916
    %1295 = vmatpush1.bf16.msra.mxu0 %v915
    %1296 = vmatprep.subr.bf16.mxu0 0
    %1297 = vmatpush1.bf16.msra.mxu0 0
    %1298 = vmatprep.subr.bf16.mxu0 0
    %1299 = vmatpush1.bf16.msra.mxu0 0
    %1300 = vmatprep.subr.bf16.mxu0 0
    %1301 = vmatpush1.bf16.msra.mxu0 0
    %1302 = vmatprep.subr.bf16.mxu0 0
    %1303 = vmatpush1.bf16.msra.mxu0 0
    %1304 = vmatprep.subr.bf16.mxu0 0
    %1305 = vmatpush1.bf16.msra.mxu0 0
    %1306 = vmatprep.subr.bf16.mxu0 0
    %1307 = vmatpush1.bf16.msra.mxu0 0
    %1308 = vmatprep.subr.bf16.mxu0 0
    %1309 = vmatpush1.bf16.msra.mxu0 0
    %1310 = vmatprep.subr.bf16.mxu0 0
    %1311 = vmatpush1.bf16.msra.mxu0 0
    %1312 = vmatprep.mubr.bf16.mxu0 0
    %1313 = vmatmul.mubr.bf16.gmra.mrb[0].mxu0 %v1279
    %v1314 = vpop.f32.mrb[0].mxu0
    %v1315 = vadd.f32 0.0, %v1314
    %v1316 = vpop.f32.mrb[0].mxu0
    %v1317 = vadd.f32 0.0, %v1316
    %v1318 = vpop.f32.mrb[0].mxu0
    %v1319 = vpop.f32.mrb[0].mxu0
    %1320 = vdwg.mxu0
    %1321 = vmatprep.subr.bf16.mxu0 %v890
    %1322 = vmatpush1.bf16.msra.mxu0 %v889
    %1323 = vmatprep.subr.bf16.mxu0 %v894
    %1324 = vmatpush1.bf16.msra.mxu0 %v893
    %1325 = vmatprep.subr.bf16.mxu0 %v898
    %1326 = vmatpush1.bf16.msra.mxu0 %v897
    %1327 = vmatprep.subr.bf16.mxu0 %v902
    %1328 = vmatpush1.bf16.msra.mxu0 %v901
    %1329 = vmatprep.subr.bf16.mxu0 %v906
    %1330 = vmatpush1.bf16.msra.mxu0 %v905
    %1331 = vmatprep.subr.bf16.mxu0 %v910
    %1332 = vmatpush1.bf16.msra.mxu0 %v909
    %1333 = vmatprep.subr.bf16.mxu0 %v914
    %1334 = vmatpush1.bf16.msra.mxu0 %v913
    %1335 = vmatprep.subr.bf16.mxu0 %v918
    %1336 = vmatpush1.bf16.msra.mxu0 %v917
    %1337 = vmatprep.subr.bf16.mxu0 0
    %1338 = vmatpush1.bf16.msra.mxu0 0
    %1339 = vmatprep.subr.bf16.mxu0 0
    %1340 = vmatpush1.bf16.msra.mxu0 0
    %1341 = vmatprep.subr.bf16.mxu0 0
    %1342 = vmatpush1.bf16.msra.mxu0 0
    %1343 = vmatprep.subr.bf16.mxu0 0
    %1344 = vmatpush1.bf16.msra.mxu0 0
    %1345 = vmatprep.subr.bf16.mxu0 0
    %1346 = vmatpush1.bf16.msra.mxu0 0
    %1347 = vmatprep.subr.bf16.mxu0 0
    %1348 = vmatpush1.bf16.msra.mxu0 0
    %1349 = vmatprep.subr.bf16.mxu0 0
    %1350 = vmatpush1.bf16.msra.mxu0 0
    %1351 = vmatprep.subr.bf16.mxu0 0
    %1352 = vmatpush1.bf16.msra.mxu0 0
    %1353 = vmatprep.mubr.bf16.mxu0 0
    %1354 = vmatmul.mubr.bf16.gmra.mrb[0].mxu0 %v1279
    %v1355 = vpop.f32.mrb[0].mxu0
    %v1356 = vadd.f32 0.0, %v1355
    %v1357 = vpop.f32.mrb[0].mxu0
    %v1358 = vadd.f32 0.0, %v1357
    %v1359 = vpop.f32.mrb[0].mxu0
    %v1360 = vpop.f32.mrb[0].mxu0
    %1361 = vdwg.mxu0
    %v1362 = vadd.f32 %v1275, %v1315
    %v1363 = vadd.f32 %v1276, %v1317
    %v1364 = vadd.f32 %v1277, %v1356
    %v1365 = vadd.f32 %v1278, %v1358
    %v1366 = vxor.u32 %v1362, 2147483648
    %v1367 = vmul.f32 %v1366, 1.442695
    %v1368 = vpow.pop %v1367
    %v1369 = vadd.f32 %v1368, 1.0
    %v1370 = vrcp.pop %v1369
    %v1371 = vmul.f32 1.0, %v1370
    %v1372 = vxor.u32 %v1363, 2147483648
    %v1373 = vmul.f32 %v1372, 1.442695
    %v1374 = vpow.pop %v1373
    %v1375 = vadd.f32 %v1374, 1.0
    %v1376 = vrcp.pop %v1375
    %v1377 = vmul.f32 1.0, %v1376
    %v1378 = vtanh.pop %v1364
    %v1379 = vxor.u32 %v1365, 2147483648
    %v1380 = vmul.f32 %v1379, 1.442695
    %v1381 = vpow.pop %v1380
    %v1382 = vadd.f32 %v1381, 1.0
    %v1383 = vrcp.pop %v1382
    %v1384 = vmul.f32 1.0, %v1383
    %v1385 = vmul.f32 %v1377, %v1269
    %v1386 = vmul.f32 %v1371, %v1378
    %v1387 = vadd.f32 %v1385, %v1386
    %v1388 = vtanh.pop %v1387
    %v1389 = vmul.f32 %v1384, %v1388
    %s1390 = smul.u32 4, 4
    %s1391 = smul.addr %s1390, 8
    %s1392 = scalar_lea.vmem [#allocation2], %s1391
    %v1393 = vld [vmem:[%s1392] sm:$0xff]
    %v1394 = vld [vmem:[%s1392 + $0x8] sm:$0xff]
    %v1395 = vld [vmem:[%s1392 + $0x10] sm:$0xff]
    %v1396 = vld [vmem:[%s1392 + $0x18] sm:$0xff]
    %v1397 = vpack.c.bf16 %v1389, %v1389
    %1398 = vmatprep.subr.bf16.mxu0 %v888
    %1399 = vmatpush1.bf16.msra.mxu0 %v887
    %1400 = vmatprep.subr.bf16.mxu0 %v892
    %1401 = vmatpush1.bf16.msra.mxu0 %v891
    %1402 = vmatprep.subr.bf16.mxu0 %v896
    %1403 = vmatpush1.bf16.msra.mxu0 %v895
    %1404 = vmatprep.subr.bf16.mxu0 %v900
    %1405 = vmatpush1.bf16.msra.mxu0 %v899
    %1406 = vmatprep.subr.bf16.mxu0 %v904
    %1407 = vmatpush1.bf16.msra.mxu0 %v903
    %1408 = vmatprep.subr.bf16.mxu0 %v908
    %1409 = vmatpush1.bf16.msra.mxu0 %v907
    %1410 = vmatprep.subr.bf16.mxu0 %v912
    %1411 = vmatpush1.bf16.msra.mxu0 %v911
    %1412 = vmatprep.subr.bf16.mxu0 %v916
    %1413 = vmatpush1.bf16.msra.mxu0 %v915
    %1414 = vmatprep.subr.bf16.mxu0 0
    %1415 = vmatpush1.bf16.msra.mxu0 0
    %1416 = vmatprep.subr.bf16.mxu0 0
    %1417 = vmatpush1.bf16.msra.mxu0 0
    %1418 = vmatprep.subr.bf16.mxu0 0
    %1419 = vmatpush1.bf16.msra.mxu0 0
    %1420 = vmatprep.subr.bf16.mxu0 0
    %1421 = vmatpush1.bf16.msra.mxu0 0
    %1422 = vmatprep.subr.bf16.mxu0 0
    %1423 = vmatpush1.bf16.msra.mxu0 0
    %1424 = vmatprep.subr.bf16.mxu0 0
    %1425 = vmatpush1.bf16.msra.mxu0 0
    %1426 = vmatprep.subr.bf16.mxu0 0
    %1427 = vmatpush1.bf16.msra.mxu0 0
    %1428 = vmatprep.subr.bf16.mxu0 0
    %1429 = vmatpush1.bf16.msra.mxu0 0
    %1430 = vmatprep.mubr.bf16.mxu0 0
    %1431 = vmatmul.mubr.bf16.gmra.mrb[0].mxu0 %v1397
    %v1432 = vpop.f32.mrb[0].mxu0
    %v1433 = vadd.f32 0.0, %v1432
    %v1434 = vpop.f32.mrb[0].mxu0
    %v1435 = vadd.f32 0.0, %v1434
    %v1436 = vpop.f32.mrb[0].mxu0
    %v1437 = vpop.f32.mrb[0].mxu0
    %1438 = vdwg.mxu0
    %1439 = vmatprep.subr.bf16.mxu0 %v890
    %1440 = vmatpush1.bf16.msra.mxu0 %v889
    %1441 = vmatprep.subr.bf16.mxu0 %v894
    %1442 = vmatpush1.bf16.msra.mxu0 %v893
    %1443 = vmatprep.subr.bf16.mxu0 %v898
    %1444 = vmatpush1.bf16.msra.mxu0 %v897
    %1445 = vmatprep.subr.bf16.mxu0 %v902
    %1446 = vmatpush1.bf16.msra.mxu0 %v901
    %1447 = vmatprep.subr.bf16.mxu0 %v906
    %1448 = vmatpush1.bf16.msra.mxu0 %v905
    %1449 = vmatprep.subr.bf16.mxu0 %v910
    %1450 = vmatpush1.bf16.msra.mxu0 %v909
    %1451 = vmatprep.subr.bf16.mxu0 %v914
    %1452 = vmatpush1.bf16.msra.mxu0 %v913
    %1453 = vmatprep.subr.bf16.mxu0 %v918
    %1454 = vmatpush1.bf16.msra.mxu0 %v917
    %1455 = vmatprep.subr.bf16.mxu0 0
    %1456 = vmatpush1.bf16.msra.mxu0 0
    %1457 = vmatprep.subr.bf16.mxu0 0
    %1458 = vmatpush1.bf16.msra.mxu0 0
    %1459 = vmatprep.subr.bf16.mxu0 0
    %1460 = vmatpush1.bf16.msra.mxu0 0
    %1461 = vmatprep.subr.bf16.mxu0 0
    %1462 = vmatpush1.bf16.msra.mxu0 0
    %1463 = vmatprep.subr.bf16.mxu0 0
    %1464 = vmatpush1.bf16.msra.mxu0 0
    %1465 = vmatprep.subr.bf16.mxu0 0
    %1466 = vmatpush1.bf16.msra.mxu0 0
    %1467 = vmatprep.subr.bf16.mxu0 0
    %1468 = vmatpush1.bf16.msra.mxu0 0
    %1469 = vmatprep.subr.bf16.mxu0 0
    %1470 = vmatpush1.bf16.msra.mxu0 0
    %1471 = vmatprep.mubr.bf16.mxu0 0
    %1472 = vmatmul.mubr.bf16.gmra.mrb[0].mxu0 %v1397
    %v1473 = vpop.f32.mrb[0].mxu0
    %v1474 = vadd.f32 0.0, %v1473
    %v1475 = vpop.f32.mrb[0].mxu0
    %v1476 = vadd.f32 0.0, %v1475
    %v1477 = vpop.f32.mrb[0].mxu0
    %v1478 = vpop.f32.mrb[0].mxu0
    %1479 = vdwg.mxu0
    %v1480 = vadd.f32 %v1393, %v1433
    %v1481 = vadd.f32 %v1394, %v1435
    %v1482 = vadd.f32 %v1395, %v1474
    %v1483 = vadd.f32 %v1396, %v1476
    %v1484 = vxor.u32 %v1480, 2147483648
    %v1485 = vmul.f32 %v1484, 1.442695
    %v1486 = vpow.pop %v1485
    %v1487 = vadd.f32 %v1486, 1.0
    %v1488 = vrcp.pop %v1487
    %v1489 = vmul.f32 1.0, %v1488
    %v1490 = vxor.u32 %v1481, 2147483648
    %v1491 = vmul.f32 %v1490, 1.442695
    %v1492 = vpow.pop %v1491
    %v1493 = vadd.f32 %v1492, 1.0
    %v1494 = vrcp.pop %v1493
    %v1495 = vmul.f32 1.0, %v1494
    %v1496 = vtanh.pop %v1482
    %v1497 = vxor.u32 %v1483, 2147483648
    %v1498 = vmul.f32 %v1497, 1.442695
    %v1499 = vpow.pop %v1498
    %v1500 = vadd.f32 %v1499, 1.0
    %v1501 = vrcp.pop %v1500
    %v1502 = vmul.f32 1.0, %v1501
    %v1503 = vmul.f32 %v1495, %v1387
    %v1504 = vmul.f32 %v1489, %v1496
    %v1505 = vadd.f32 %v1503, %v1504
    %v1506 = vtanh.pop %v1505
    %v1507 = vmul.f32 %v1502, %v1506
    %s1508 = smul.u32 5, 4
    %s1509 = smul.addr %s1508, 8
    %s1510 = scalar_lea.vmem [#allocation2], %s1509
    %v1511 = vld [vmem:[%s1510] sm:$0xff]
    %v1512 = vld [vmem:[%s1510 + $0x8] sm:$0xff]
    %v1513 = vld [vmem:[%s1510 + $0x10] sm:$0xff]
    %v1514 = vld [vmem:[%s1510 + $0x18] sm:$0xff]
    %v1515 = vpack.c.bf16 %v1507, %v1507
    %1516 = vmatprep.subr.bf16.mxu0 %v888
    %1517 = vmatpush1.bf16.msra.mxu0 %v887
    %1518 = vmatprep.subr.bf16.mxu0 %v892
    %1519 = vmatpush1.bf16.msra.mxu0 %v891
    %1520 = vmatprep.subr.bf16.mxu0 %v896
    %1521 = vmatpush1.bf16.msra.mxu0 %v895
    %1522 = vmatprep.subr.bf16.mxu0 %v900
    %1523 = vmatpush1.bf16.msra.mxu0 %v899
    %1524 = vmatprep.subr.bf16.mxu0 %v904
    %1525 = vmatpush1.bf16.msra.mxu0 %v903
    %1526 = vmatprep.subr.bf16.mxu0 %v908
    %1527 = vmatpush1.bf16.msra.mxu0 %v907
    %1528 = vmatprep.subr.bf16.mxu0 %v912
    %1529 = vmatpush1.bf16.msra.mxu0 %v911
    %1530 = vmatprep.subr.bf16.mxu0 %v916
    %1531 = vmatpush1.bf16.msra.mxu0 %v915
    %1532 = vmatprep.subr.bf16.mxu0 0
    %1533 = vmatpush1.bf16.msra.mxu0 0
    %1534 = vmatprep.subr.bf16.mxu0 0
    %1535 = vmatpush1.bf16.msra.mxu0 0
    %1536 = vmatprep.subr.bf16.mxu0 0
    %1537 = vmatpush1.bf16.msra.mxu0 0
    %1538 = vmatprep.subr.bf16.mxu0 0
    %1539 = vmatpush1.bf16.msra.mxu0 0
    %1540 = vmatprep.subr.bf16.mxu0 0
    %1541 = vmatpush1.bf16.msra.mxu0 0
    %1542 = vmatprep.subr.bf16.mxu0 0
    %1543 = vmatpush1.bf16.msra.mxu0 0
    %1544 = vmatprep.subr.bf16.mxu0 0
    %1545 = vmatpush1.bf16.msra.mxu0 0
    %1546 = vmatprep.subr.bf16.mxu0 0
    %1547 = vmatpush1.bf16.msra.mxu0 0
    %1548 = vmatprep.mubr.bf16.mxu0 0
    %1549 = vmatmul.mubr.bf16.gmra.mrb[0].mxu0 %v1515
    %v1550 = vpop.f32.mrb[0].mxu0
    %v1551 = vadd.f32 0.0, %v1550
    %v1552 = vpop.f32.mrb[0].mxu0
    %v1553 = vadd.f32 0.0, %v1552
    %v1554 = vpop.f32.mrb[0].mxu0
    %v1555 = vpop.f32.mrb[0].mxu0
    %1556 = vdwg.mxu0
    %1557 = vmatprep.subr.bf16.mxu0 %v890
    %1558 = vmatpush1.bf16.msra.mxu0 %v889
    %1559 = vmatprep.subr.bf16.mxu0 %v894
    %1560 = vmatpush1.bf16.msra.mxu0 %v893
    %1561 = vmatprep.subr.bf16.mxu0 %v898
    %1562 = vmatpush1.bf16.msra.mxu0 %v897
    %1563 = vmatprep.subr.bf16.mxu0 %v902
    %1564 = vmatpush1.bf16.msra.mxu0 %v901
    %1565 = vmatprep.subr.bf16.mxu0 %v906
    %1566 = vmatpush1.bf16.msra.mxu0 %v905
    %1567 = vmatprep.subr.bf16.mxu0 %v910
    %1568 = vmatpush1.bf16.msra.mxu0 %v909
    %1569 = vmatprep.subr.bf16.mxu0 %v914
    %1570 = vmatpush1.bf16.msra.mxu0 %v913
    %1571 = vmatprep.subr.bf16.mxu0 %v918
    %1572 = vmatpush1.bf16.msra.mxu0 %v917
    %1573 = vmatprep.subr.bf16.mxu0 0
    %1574 = vmatpush1.bf16.msra.mxu0 0
    %1575 = vmatprep.subr.bf16.mxu0 0
    %1576 = vmatpush1.bf16.msra.mxu0 0
    %1577 = vmatprep.subr.bf16.mxu0 0
    %1578 = vmatpush1.bf16.msra.mxu0 0
    %1579 = vmatprep.subr.bf16.mxu0 0
    %1580 = vmatpush1.bf16.msra.mxu0 0
    %1581 = vmatprep.subr.bf16.mxu0 0
    %1582 = vmatpush1.bf16.msra.mxu0 0
    %1583 = vmatprep.subr.bf16.mxu0 0
    %1584 = vmatpush1.bf16.msra.mxu0 0
    %1585 = vmatprep.subr.bf16.mxu0 0
    %1586 = vmatpush1.bf16.msra.mxu0 0
    %1587 = vmatprep.subr.bf16.mxu0 0
    %1588 = vmatpush1.bf16.msra.mxu0 0
    %1589 = vmatprep.mubr.bf16.mxu0 0
    %1590 = vmatmul.mubr.bf16.gmra.mrb[0].mxu0 %v1515
    %v1591 = vpop.f32.mrb[0].mxu0
    %v1592 = vadd.f32 0.0, %v1591
    %v1593 = vpop.f32.mrb[0].mxu0
    %v1594 = vadd.f32 0.0, %v1593
    %v1595 = vpop.f32.mrb[0].mxu0
    %v1596 = vpop.f32.mrb[0].mxu0
    %1597 = vdwg.mxu0
    %v1598 = vadd.f32 %v1511, %v1551
    %v1599 = vadd.f32 %v1512, %v1553
    %v1600 = vadd.f32 %v1513, %v1592
    %v1601 = vadd.f32 %v1514, %v1594
    %v1602 = vxor.u32 %v1598, 2147483648
    %v1603 = vmul.f32 %v1602, 1.442695
    %v1604 = vpow.pop %v1603
    %v1605 = vadd.f32 %v1604, 1.0
    %v1606 = vrcp.pop %v1605
    %v1607 = vmul.f32 1.0, %v1606
    %v1608 = vxor.u32 %v1599, 2147483648
    %v1609 = vmul.f32 %v1608, 1.442695
    %v1610 = vpow.pop %v1609
    %v1611 = vadd.f32 %v1610, 1.0
    %v1612 = vrcp.pop %v1611
    %v1613 = vmul.f32 1.0, %v1612
    %v1614 = vtanh.pop %v1600
    %v1615 = vxor.u32 %v1601, 2147483648
    %v1616 = vmul.f32 %v1615, 1.442695
    %v1617 = vpow.pop %v1616
    %v1618 = vadd.f32 %v1617, 1.0
    %v1619 = vrcp.pop %v1618
    %v1620 = vmul.f32 1.0, %v1619
    %v1621 = vmul.f32 %v1613, %v1505
    %v1622 = vmul.f32 %v1607, %v1614
    %v1623 = vadd.f32 %v1621, %v1622
    %v1624 = vtanh.pop %v1623
    %v1625 = vmul.f32 %v1620, %v1624
    %s1626 = smul.u32 6, 4
    %s1627 = smul.addr %s1626, 8
    %s1628 = scalar_lea.vmem [#allocation2], %s1627
    %v1629 = vld [vmem:[%s1628] sm:$0xff]
    %v1630 = vld [vmem:[%s1628 + $0x8] sm:$0xff]
    %v1631 = vld [vmem:[%s1628 + $0x10] sm:$0xff]
    %v1632 = vld [vmem:[%s1628 + $0x18] sm:$0xff]
    %v1633 = vpack.c.bf16 %v1625, %v1625
    %1634 = vmatprep.subr.bf16.mxu0 %v888
    %1635 = vmatpush1.bf16.msra.mxu0 %v887
    %1636 = vmatprep.subr.bf16.mxu0 %v892
    %1637 = vmatpush1.bf16.msra.mxu0 %v891
    %1638 = vmatprep.subr.bf16.mxu0 %v896
    %1639 = vmatpush1.bf16.msra.mxu0 %v895
    %1640 = vmatprep.subr.bf16.mxu0 %v900
    %1641 = vmatpush1.bf16.msra.mxu0 %v899
    %1642 = vmatprep.subr.bf16.mxu0 %v904
    %1643 = vmatpush1.bf16.msra.mxu0 %v903
    %1644 = vmatprep.subr.bf16.mxu0 %v908
    %1645 = vmatpush1.bf16.msra.mxu0 %v907
    %1646 = vmatprep.subr.bf16.mxu0 %v912
    %1647 = vmatpush1.bf16.msra.mxu0 %v911
    %1648 = vmatprep.subr.bf16.mxu0 %v916
    %1649 = vmatpush1.bf16.msra.mxu0 %v915
    %1650 = vmatprep.subr.bf16.mxu0 0
    %1651 = vmatpush1.bf16.msra.mxu0 0
    %1652 = vmatprep.subr.bf16.mxu0 0
    %1653 = vmatpush1.bf16.msra.mxu0 0
    %1654 = vmatprep.subr.bf16.mxu0 0
    %1655 = vmatpush1.bf16.msra.mxu0 0
    %1656 = vmatprep.subr.bf16.mxu0 0
    %1657 = vmatpush1.bf16.msra.mxu0 0
    %1658 = vmatprep.subr.bf16.mxu0 0
    %1659 = vmatpush1.bf16.msra.mxu0 0
    %1660 = vmatprep.subr.bf16.mxu0 0
    %1661 = vmatpush1.bf16.msra.mxu0 0
    %1662 = vmatprep.subr.bf16.mxu0 0
    %1663 = vmatpush1.bf16.msra.mxu0 0
    %1664 = vmatprep.subr.bf16.mxu0 0
    %1665 = vmatpush1.bf16.msra.mxu0 0
    %1666 = vmatprep.mubr.bf16.mxu0 0
    %1667 = vmatmul.mubr.bf16.gmra.mrb[0].mxu0 %v1633
    %v1668 = vpop.f32.mrb[0].mxu0
    %v1669 = vadd.f32 0.0, %v1668
    %v1670 = vpop.f32.mrb[0].mxu0
    %v1671 = vadd.f32 0.0, %v1670
    %v1672 = vpop.f32.mrb[0].mxu0
    %v1673 = vpop.f32.mrb[0].mxu0
    %1674 = vdwg.mxu0
    %1675 = vmatprep.subr.bf16.mxu0 %v890
    %1676 = vmatpush1.bf16.msra.mxu0 %v889
    %1677 = vmatprep.subr.bf16.mxu0 %v894
    %1678 = vmatpush1.bf16.msra.mxu0 %v893
    %1679 = vmatprep.subr.bf16.mxu0 %v898
    %1680 = vmatpush1.bf16.msra.mxu0 %v897
    %1681 = vmatprep.subr.bf16.mxu0 %v902
    %1682 = vmatpush1.bf16.msra.mxu0 %v901
    %1683 = vmatprep.subr.bf16.mxu0 %v906
    %1684 = vmatpush1.bf16.msra.mxu0 %v905
    %1685 = vmatprep.subr.bf16.mxu0 %v910
    %1686 = vmatpush1.bf16.msra.mxu0 %v909
    %1687 = vmatprep.subr.bf16.mxu0 %v914
    %1688 = vmatpush1.bf16.msra.mxu0 %v913
    %1689 = vmatprep.subr.bf16.mxu0 %v918
    %1690 = vmatpush1.bf16.msra.mxu0 %v917
    %1691 = vmatprep.subr.bf16.mxu0 0
    %1692 = vmatpush1.bf16.msra.mxu0 0
    %1693 = vmatprep.subr.bf16.mxu0 0
    %1694 = vmatpush1.bf16.msra.mxu0 0
    %1695 = vmatprep.subr.bf16.mxu0 0
    %1696 = vmatpush1.bf16.msra.mxu0 0
    %1697 = vmatprep.subr.bf16.mxu0 0
    %1698 = vmatpush1.bf16.msra.mxu0 0
    %1699 = vmatprep.subr.bf16.mxu0 0
    %1700 = vmatpush1.bf16.msra.mxu0 0
    %1701 = vmatprep.subr.bf16.mxu0 0
    %1702 = vmatpush1.bf16.msra.mxu0 0
    %1703 = vmatprep.subr.bf16.mxu0 0
    %1704 = vmatpush1.bf16.msra.mxu0 0
    %1705 = vmatprep.subr.bf16.mxu0 0
    %1706 = vmatpush1.bf16.msra.mxu0 0
    %1707 = vmatprep.mubr.bf16.mxu0 0
    %1708 = vmatmul.mubr.bf16.gmra.mrb[0].mxu0 %v1633
    %v1709 = vpop.f32.mrb[0].mxu0
    %v1710 = vadd.f32 0.0, %v1709
    %v1711 = vpop.f32.mrb[0].mxu0
    %v1712 = vadd.f32 0.0, %v1711
    %v1713 = vpop.f32.mrb[0].mxu0
    %v1714 = vpop.f32.mrb[0].mxu0
    %1715 = vdwg.mxu0
    %v1716 = vadd.f32 %v1629, %v1669
    %v1717 = vadd.f32 %v1630, %v1671
    %v1718 = vadd.f32 %v1631, %v1710
    %v1719 = vadd.f32 %v1632, %v1712
    %v1720 = vxor.u32 %v1716, 2147483648
    %v1721 = vmul.f32 %v1720, 1.442695
    %v1722 = vpow.pop %v1721
    %v1723 = vadd.f32 %v1722, 1.0
    %v1724 = vrcp.pop %v1723
    %v1725 = vmul.f32 1.0, %v1724
    %v1726 = vxor.u32 %v1717, 2147483648
    %v1727 = vmul.f32 %v1726, 1.442695
    %v1728 = vpow.pop %v1727
    %v1729 = vadd.f32 %v1728, 1.0
    %v1730 = vrcp.pop %v1729
    %v1731 = vmul.f32 1.0, %v1730
    %v1732 = vtanh.pop %v1718
    %v1733 = vxor.u32 %v1719, 2147483648
    %v1734 = vmul.f32 %v1733, 1.442695
    %v1735 = vpow.pop %v1734
    %v1736 = vadd.f32 %v1735, 1.0
    %v1737 = vrcp.pop %v1736
    %v1738 = vmul.f32 1.0, %v1737
    %v1739 = vmul.f32 %v1731, %v1623
    %v1740 = vmul.f32 %v1725, %v1732
    %v1741 = vadd.f32 %v1739, %v1740
    %v1742 = vtanh.pop %v1741
    %v1743 = vmul.f32 %v1738, %v1742
    %s1744 = smul.u32 7, 4
    %s1745 = smul.addr %s1744, 8
    %s1746 = scalar_lea.vmem [#allocation2], %s1745
    %v1747 = vld [vmem:[%s1746] sm:$0xff]
    %v1748 = vld [vmem:[%s1746 + $0x8] sm:$0xff]
    %v1749 = vld [vmem:[%s1746 + $0x10] sm:$0xff]
    %v1750 = vld [vmem:[%s1746 + $0x18] sm:$0xff]
    %v1751 = vpack.c.bf16 %v1743, %v1743
    %1752 = vmatprep.subr.bf16.mxu0 %v888
    %1753 = vmatpush1.bf16.msra.mxu0 %v887
    %1754 = vmatprep.subr.bf16.mxu0 %v892
    %1755 = vmatpush1.bf16.msra.mxu0 %v891
    %1756 = vmatprep.subr.bf16.mxu0 %v896
    %1757 = vmatpush1.bf16.msra.mxu0 %v895
    %1758 = vmatprep.subr.bf16.mxu0 %v900
    %1759 = vmatpush1.bf16.msra.mxu0 %v899
    %1760 = vmatprep.subr.bf16.mxu0 %v904
    %1761 = vmatpush1.bf16.msra.mxu0 %v903
    %1762 = vmatprep.subr.bf16.mxu0 %v908
    %1763 = vmatpush1.bf16.msra.mxu0 %v907
    %1764 = vmatprep.subr.bf16.mxu0 %v912
    %1765 = vmatpush1.bf16.msra.mxu0 %v911
    %1766 = vmatprep.subr.bf16.mxu0 %v916
    %1767 = vmatpush1.bf16.msra.mxu0 %v915
    %1768 = vmatprep.subr.bf16.mxu0 0
    %1769 = vmatpush1.bf16.msra.mxu0 0
    %1770 = vmatprep.subr.bf16.mxu0 0
    %1771 = vmatpush1.bf16.msra.mxu0 0
    %1772 = vmatprep.subr.bf16.mxu0 0
    %1773 = vmatpush1.bf16.msra.mxu0 0
    %1774 = vmatprep.subr.bf16.mxu0 0
    %1775 = vmatpush1.bf16.msra.mxu0 0
    %1776 = vmatprep.subr.bf16.mxu0 0
    %1777 = vmatpush1.bf16.msra.mxu0 0
    %1778 = vmatprep.subr.bf16.mxu0 0
    %1779 = vmatpush1.bf16.msra.mxu0 0
    %1780 = vmatprep.subr.bf16.mxu0 0
    %1781 = vmatpush1.bf16.msra.mxu0 0
    %1782 = vmatprep.subr.bf16.mxu0 0
    %1783 = vmatpush1.bf16.msra.mxu0 0
    %1784 = vmatprep.mubr.bf16.mxu0 0
    %1785 = vmatmul.mubr.bf16.gmra.mrb[0].mxu0 %v1751
    %v1786 = vpop.f32.mrb[0].mxu0
    %v1787 = vadd.f32 0.0, %v1786
    %v1788 = vpop.f32.mrb[0].mxu0
    %v1789 = vadd.f32 0.0, %v1788
    %v1790 = vpop.f32.mrb[0].mxu0
    %v1791 = vpop.f32.mrb[0].mxu0
    %1792 = vdwg.mxu0
    %1793 = vmatprep.subr.bf16.mxu0 %v890
    %1794 = vmatpush1.bf16.msra.mxu0 %v889
    %1795 = vmatprep.subr.bf16.mxu0 %v894
    %1796 = vmatpush1.bf16.msra.mxu0 %v893
    %1797 = vmatprep.subr.bf16.mxu0 %v898
    %1798 = vmatpush1.bf16.msra.mxu0 %v897
    %1799 = vmatprep.subr.bf16.mxu0 %v902
    %1800 = vmatpush1.bf16.msra.mxu0 %v901
    %1801 = vmatprep.subr.bf16.mxu0 %v906
    %1802 = vmatpush1.bf16.msra.mxu0 %v905
    %1803 = vmatprep.subr.bf16.mxu0 %v910
    %1804 = vmatpush1.bf16.msra.mxu0 %v909
    %1805 = vmatprep.subr.bf16.mxu0 %v914
    %1806 = vmatpush1.bf16.msra.mxu0 %v913
    %1807 = vmatprep.subr.bf16.mxu0 %v918
    %1808 = vmatpush1.bf16.msra.mxu0 %v917
    %1809 = vmatprep.subr.bf16.mxu0 0
    %1810 = vmatpush1.bf16.msra.mxu0 0
    %1811 = vmatprep.subr.bf16.mxu0 0
    %1812 = vmatpush1.bf16.msra.mxu0 0
    %1813 = vmatprep.subr.bf16.mxu0 0
    %1814 = vmatpush1.bf16.msra.mxu0 0
    %1815 = vmatprep.subr.bf16.mxu0 0
    %1816 = vmatpush1.bf16.msra.mxu0 0
    %1817 = vmatprep.subr.bf16.mxu0 0
    %1818 = vmatpush1.bf16.msra.mxu0 0
    %1819 = vmatprep.subr.bf16.mxu0 0
    %1820 = vmatpush1.bf16.msra.mxu0 0
    %1821 = vmatprep.subr.bf16.mxu0 0
    %1822 = vmatpush1.bf16.msra.mxu0 0
    %1823 = vmatprep.subr.bf16.mxu0 0
    %1824 = vmatpush1.bf16.msra.mxu0 0
    %1825 = vmatprep.mubr.bf16.mxu0 0
    %1826 = vmatmul.mubr.bf16.gmra.mrb[0].mxu0 %v1751
    %v1827 = vpop.f32.mrb[0].mxu0
    %v1828 = vadd.f32 0.0, %v1827
    %v1829 = vpop.f32.mrb[0].mxu0
    %v1830 = vadd.f32 0.0, %v1829
    %v1831 = vpop.f32.mrb[0].mxu0
    %v1832 = vpop.f32.mrb[0].mxu0
    %1833 = vdwg.mxu0
    %v1834 = vadd.f32 %v1747, %v1787
    %v1835 = vadd.f32 %v1748, %v1789
    %v1836 = vadd.f32 %v1749, %v1828
    %v1837 = vadd.f32 %v1750, %v1830
    %v1838 = vxor.u32 %v1834, 2147483648
    %v1839 = vmul.f32 %v1838, 1.442695
    %v1840 = vpow.pop %v1839
    %v1841 = vadd.f32 %v1840, 1.0
    %v1842 = vrcp.pop %v1841
    %v1843 = vmul.f32 1.0, %v1842
    %v1844 = vxor.u32 %v1835, 2147483648
    %v1845 = vmul.f32 %v1844, 1.442695
    %v1846 = vpow.pop %v1845
    %v1847 = vadd.f32 %v1846, 1.0
    %v1848 = vrcp.pop %v1847
    %v1849 = vmul.f32 1.0, %v1848
    %v1850 = vtanh.pop %v1836
    %v1851 = vxor.u32 %v1837, 2147483648
    %v1852 = vmul.f32 %v1851, 1.442695
    %v1853 = vpow.pop %v1852
    %v1854 = vadd.f32 %v1853, 1.0
    %v1855 = vrcp.pop %v1854
    %v1856 = vmul.f32 1.0, %v1855
    %v1857 = vmul.f32 %v1849, %v1741
    %v1858 = vmul.f32 %v1843, %v1850
    %v1859 = vadd.f32 %v1857, %v1858
    %v1860 = vtanh.pop %v1859
    %v1861 = vmul.f32 %v1856, %v1860
    %v1862 = vlaneseq
    %v1863 = vshrl.u32 %v1862, 7
    %v1864 = vmul.u32 %v1863, 49
    %vm1865 = vcmp.ge.s32.totalorder %v444, %v1864
    %v1866 = vadd.s32 %v1863, 1
    %v1867 = vmul.u32 %v1866, 49
    %vm1868 = vcmp.lt.s32.totalorder %v444, %v1867
    %vm1869 = vmand %vm1865, %vm1868
    %v1870 = vsel %vm1869, 1.0, 0.0
    %v1871 = vadd.s32 %v1863, 8
    %v1872 = vadd.s32 %v1863, 16
    %v1873 = vadd.s32 %v1863, 24
    %v1874 = vadd.s32 %v1863, 32
    %v1875 = vadd.s32 %v1863, 40
    %v1876 = vadd.s32 %v1863, 48
    %v1877 = vadd.s32 %v1863, 56
    %v1878 = vadd.s32 %v1863, 64
    %v1879 = vadd.s32 %v1863, 72
    %v1880 = vadd.s32 %v1863, 80
    %v1881 = vadd.s32 %v1863, 88
    %v1882 = vadd.s32 %v1863, 96
    %v1883 = vmul.u32 %v444, 49
    %vm1884 = vcmp.ge.s32.totalorder %v1863, %v1883
    %vm1885 = vcmp.ge.s32.totalorder %v1871, %v1883
    %vm1886 = vcmp.ge.s32.totalorder %v1872, %v1883
    %vm1887 = vcmp.ge.s32.totalorder %v1873, %v1883
    %vm1888 = vcmp.ge.s32.totalorder %v1874, %v1883
    %vm1889 = vcmp.ge.s32.totalorder %v1875, %v1883
    %vm1890 = vcmp.ge.s32.totalorder %v1876, %v1883
    %vm1891 = vcmp.ge.s32.totalorder %v1877, %v1883
    %vm1892 = vcmp.ge.s32.totalorder %v1878, %v1883
    %vm1893 = vcmp.ge.s32.totalorder %v1879, %v1883
    %vm1894 = vcmp.ge.s32.totalorder %v1880, %v1883
    %vm1895 = vcmp.ge.s32.totalorder %v1881, %v1883
    %vm1896 = vcmp.ge.s32.totalorder %v1882, %v1883
    %v1897 = vadd.s32 %v444, 1
    %v1898 = vmul.u32 %v1897, 49
    %vm1899 = vcmp.lt.s32.totalorder %v1863, %v1898
    %vm1900 = vcmp.lt.s32.totalorder %v1871, %v1898
    %vm1901 = vcmp.lt.s32.totalorder %v1872, %v1898
    %vm1902 = vcmp.lt.s32.totalorder %v1873, %v1898
    %vm1903 = vcmp.lt.s32.totalorder %v1874, %v1898
    %vm1904 = vcmp.lt.s32.totalorder %v1875, %v1898
    %vm1905 = vcmp.lt.s32.totalorder %v1876, %v1898
    %vm1906 = vcmp.lt.s32.totalorder %v1877, %v1898
    %vm1907 = vcmp.lt.s32.totalorder %v1878, %v1898
    %vm1908 = vcmp.lt.s32.totalorder %v1879, %v1898
    %vm1909 = vcmp.lt.s32.totalorder %v1880, %v1898
    %vm1910 = vcmp.lt.s32.totalorder %v1881, %v1898
    %vm1911 = vcmp.lt.s32.totalorder %v1882, %v1898
    %vm1912 = vmand %vm1884, %vm1899
    %vm1913 = vmand %vm1885, %vm1900
    %vm1914 = vmand %vm1886, %vm1901
    %vm1915 = vmand %vm1887, %vm1902
    %vm1916 = vmand %vm1888, %vm1903
    %vm1917 = vmand %vm1889, %vm1904
    %vm1918 = vmand %vm1890, %vm1905
    %vm1919 = vmand %vm1891, %vm1906
    %vm1920 = vmand %vm1892, %vm1907
    %vm1921 = vmand %vm1893, %vm1908
    %vm1922 = vmand %vm1894, %vm1909
    %vm1923 = vmand %vm1895, %vm1910
    %vm1924 = vmand %vm1896, %vm1911
    %v1925 = vsel %vm1912, 1.0, 0.0
    %v1926 = vsel %vm1913, 1.0, 0.0
    %v1927 = vsel %vm1914, 1.0, 0.0
    %v1928 = vsel %vm1915, 1.0, 0.0
    %v1929 = vsel %vm1916, 1.0, 0.0
    %v1930 = vsel %vm1917, 1.0, 0.0
    %v1931 = vsel %vm1918, 1.0, 0.0
    %v1932 = vsel %vm1919, 1.0, 0.0
    %v1933 = vsel %vm1920, 1.0, 0.0
    %v1934 = vsel %vm1921, 1.0, 0.0
    %v1935 = vsel %vm1922, 1.0, 0.0
    %v1936 = vsel %vm1923, 1.0, 0.0
    %v1937 = vsel %vm1924, 1.0, 0.0
    %v1938 = vld [vmem:[%s8] sm:$0xff]
    %v1939 = vld [vmem:[%s8 + $0x8] sm:$0xff]
    %v1940 = vld [vmem:[%s8 + $0x10] sm:$0xff]
    %v1941 = vld [vmem:[%s8 + $0x18] sm:$0xff]
    %v1942 = vld [vmem:[%s8 + $0x20] sm:$0xff]
    %v1943 = vld [vmem:[%s8 + $0x28] sm:$0xff]
    %v1944 = vld [vmem:[%s8 + $0x30] sm:$0xff]
    %v1945 = vld [vmem:[%s8 + $0x38] sm:$0xff]
    %v1946 = vld [vmem:[%s8 + $0x40] sm:$0xff]
    %v1947 = vld [vmem:[%s8 + $0x48] sm:$0xff]
    %v1948 = vld [vmem:[%s8 + $0x50] sm:$0xff]
    %v1949 = vld [vmem:[%s8 + $0x58] sm:$0xff]
    %v1950 = vld [vmem:[%s8 + $0x60] sm:$0xff]
    %v1951 = vld [vmem:[%s8 + $0x68] sm:$0xff]
    %v1952 = vld [vmem:[%s8 + $0x70] sm:$0xff]
    %v1953 = vld [vmem:[%s8 + $0x78] sm:$0xff]
    %v1954 = vpack.c.bf16 %v1939, %v1938
    %v1955 = vpack.c.bf16 %v1941, %v1940
    %v1956 = vpack.c.bf16 %v1943, %v1942
    %v1957 = vpack.c.bf16 %v1945, %v1944
    %v1958 = vpack.c.bf16 %v1947, %v1946
    %v1959 = vpack.c.bf16 %v1949, %v1948
    %v1960 = vpack.c.bf16 %v1951, %v1950
    %v1961 = vpack.c.bf16 %v1953, %v1952
    %v1962 = vld [vmem:[%s10] sm:$0xff]
    %v1963 = vld [vmem:[%s10 + $0x8] sm:$0xff]
    %v1964 = vld [vmem:[%s10 + $0x10] sm:$0xff]
    %v1965 = vld [vmem:[%s10 + $0x18] sm:$0xff]
    %v1966 = vld [vmem:[%s10 + $0x20] sm:$0xff]
    %v1967 = vld [vmem:[%s10 + $0x28] sm:$0xff]
    %v1968 = vld [vmem:[%s10 + $0x30] sm:$0xff]
    %v1969 = vld [vmem:[%s10 + $0x38] sm:$0xff]
    %v1970 = vld [vmem:[%s10 + $0x40] sm:$0xff]
    %v1971 = vld [vmem:[%s10 + $0x48] sm:$0xff]
    %v1972 = vld [vmem:[%s10 + $0x50] sm:$0xff]
    %v1973 = vld [vmem:[%s10 + $0x58] sm:$0xff]
    %v1974 = vld [vmem:[%s10 + $0x60] sm:$0xff]
    %v1975 = vld [vmem:[%s10 + $0x68] sm:$0xff]
    %v1976 = vld [vmem:[%s10 + $0x70] sm:$0xff]
    %v1977 = vld [vmem:[%s10 + $0x78] sm:$0xff]
    %v1978 = vpack.c.bf16 %v1963, %v1962
    %v1979 = vpack.c.bf16 %v1965, %v1964
    %v1980 = vpack.c.bf16 %v1967, %v1966
    %v1981 = vpack.c.bf16 %v1969, %v1968
    %v1982 = vpack.c.bf16 %v1971, %v1970
    %v1983 = vpack.c.bf16 %v1973, %v1972
    %v1984 = vpack.c.bf16 %v1975, %v1974
    %v1985 = vpack.c.bf16 %v1977, %v1976
    %v1986 = vld [vmem:[%s12] sm:$0x1]
    %v1987 = vpack.c.bf16 %v423, %v422
    %v1988 = vpack.c.bf16 %v425, %v424
    %v1989 = vpack.c.bf16 %v427, %v426
    %v1990 = vpack.c.bf16 %v429, %v428
    %v1991 = vpack.c.bf16 %v431, %v430
    %v1992 = vpack.c.bf16 %v433, %v432
    %v1993 = vpack.c.bf16 %v434, %v434
    %v1994 = vld [vmem:[%s9] sm:$0x1]
    %v1996 = vlaneseq
    %v1997 = vshrl.u32 %v1996, 7
    %v1998 = vsub.s32 0, %v1997
    %v1999 = vrot.slane %v1994, %v1998
    %2001 = vmatprep.subr.bf16.mxu0 0
    %2002 = vmatpush1.bf16.msra.mxu0 %v1954
    %2003 = vmatprep.subr.bf16.mxu0 0
    %2004 = vmatpush1.bf16.msra.mxu0 %v1955
    %2005 = vmatprep.subr.bf16.mxu0 0
    %2006 = vmatpush1.bf16.msra.mxu0 %v1956
    %2007 = vmatprep.subr.bf16.mxu0 0
    %2008 = vmatpush1.bf16.msra.mxu0 %v1957
    %2009 = vmatprep.subr.bf16.mxu0 0
    %2010 = vmatpush1.bf16.msra.mxu0 %v1958
    %2011 = vmatprep.subr.bf16.mxu0 0
    %2012 = vmatpush1.bf16.msra.mxu0 %v1959
    %2013 = vmatprep.subr.bf16.mxu0 0
    %2014 = vmatpush1.bf16.msra.mxu0 %v1960
    %2015 = vmatprep.subr.bf16.mxu0 0
    %2016 = vmatpush1.bf16.msra.mxu0 %v1961
    %2017 = vmatprep.subr.bf16.mxu0 0
    %2018 = vmatpush1.bf16.msra.mxu0 0
    %2019 = vmatprep.subr.bf16.mxu0 0
    %2020 = vmatpush1.bf16.msra.mxu0 0
    %2021 = vmatprep.subr.bf16.mxu0 0
    %2022 = vmatpush1.bf16.msra.mxu0 0
    %2023 = vmatprep.subr.bf16.mxu0 0
    %2024 = vmatpush1.bf16.msra.mxu0 0
    %2025 = vmatprep.subr.bf16.mxu0 0
    %2026 = vmatpush1.bf16.msra.mxu0 0
    %2027 = vmatprep.subr.bf16.mxu0 0
    %2028 = vmatpush1.bf16.msra.mxu0 0
    %2029 = vmatprep.subr.bf16.mxu0 0
    %2030 = vmatpush1.bf16.msra.mxu0 0
    %2031 = vmatprep.subr.bf16.mxu0 0
    %2032 = vmatpush1.bf16.msra.mxu0 0
    %2033 = vmatprep.mubr.bf16.mxu0 0
    %2034 = vmatmul.mubr.bf16.gmra.mrb[0].mxu0 %v1987
    %v2035 = vpop.f32.mrb[0].mxu0
    %v2036 = vadd.f32 %v1999, %v2035
    %v2037 = vpop.f32.mrb[0].mxu0
    %v2038 = vpop.f32.mrb[0].mxu0
    %v2039 = vadd.f32 %v1999, %v2038
    %v2040 = vpop.f32.mrb[0].mxu0
    %2041 = vmatprep.mubr.bf16.mxu0 0
    %2042 = vmatmul.mubr.bf16.gmra.mrb[0].mxu0 %v1988
    %v2043 = vpop.f32.mrb[0].mxu0
    %v2044 = vadd.f32 %v1999, %v2043
    %v2045 = vpop.f32.mrb[0].mxu0
    %v2046 = vpop.f32.mrb[0].mxu0
    %v2047 = vadd.f32 %v1999, %v2046
    %v2048 = vpop.f32.mrb[0].mxu0
    %2049 = vmatprep.mubr.bf16.mxu0 0
    %2050 = vmatmul.mubr.bf16.gmra.mrb[0].mxu0 %v1989
    %v2051 = vpop.f32.mrb[0].mxu0
    %v2052 = vadd.f32 %v1999, %v2051
    %v2053 = vpop.f32.mrb[0].mxu0
    %v2054 = vpop.f32.mrb[0].mxu0
    %v2055 = vadd.f32 %v1999, %v2054
    %v2056 = vpop.f32.mrb[0].mxu0
    %2057 = vmatprep.mubr.bf16.mxu0 0
    %2058 = vmatmul.mubr.bf16.gmra.mrb[0].mxu0 %v1990
    %v2059 = vpop.f32.mrb[0].mxu0
    %v2060 = vadd.f32 %v1999, %v2059
    %v2061 = vpop.f32.mrb[0].mxu0
    %v2062 = vpop.f32.mrb[0].mxu0
    %v2063 = vadd.f32 %v1999, %v2062
    %v2064 = vpop.f32.mrb[0].mxu0
    %2065 = vmatprep.mubr.bf16.mxu0 0
    %2066 = vmatmul.mubr.bf16.gmra.mrb[0].mxu0 %v1991
    %v2067 = vpop.f32.mrb[0].mxu0
    %v2068 = vadd.f32 %v1999, %v2067
    %v2069 = vpop.f32.mrb[0].mxu0
    %v2070 = vpop.f32.mrb[0].mxu0
    %v2071 = vadd.f32 %v1999, %v2070
    %v2072 = vpop.f32.mrb[0].mxu0
    %2073 = vmatprep.mubr.bf16.mxu0 0
    %2074 = vmatmul.mubr.bf16.gmra.mrb[0].mxu0 %v1992
    %v2075 = vpop.f32.mrb[0].mxu0
    %v2076 = vadd.f32 %v1999, %v2075
    %v2077 = vpop.f32.mrb[0].mxu0
    %v2078 = vpop.f32.mrb[0].mxu0
    %v2079 = vadd.f32 %v1999, %v2078
    %v2080 = vpop.f32.mrb[0].mxu0
    %2081 = vmatprep.mubr.bf16.mxu0 0
    %2082 = vmatmul.mubr.bf16.gmra.mrb[0].mxu0 %v1993
    %v2083 = vpop.f32.mrb[0].mxu0
    %v2084 = vadd.f32 %v1999, %v2083
    %v2085 = vpop.f32.mrb[0].mxu0
    %v2086 = vpop.f32.mrb[0].mxu0
    %v2087 = vpop.f32.mrb[0].mxu0
    %2088 = vdwg.mxu0
    %v2089 = vpack.c.bf16 %v1861, %v1861
    %v2090 = vld [vmem:[%s11] sm:$0x1]
    %v2092 = vlaneseq
    %v2093 = vshrl.u32 %v2092, 7
    %v2094 = vsub.s32 0, %v2093
    %v2095 = vrot.slane %v2090, %v2094
    %2097 = vmatprep.subr.bf16.mxu0 0
    %2098 = vmatpush1.bf16.msra.mxu0 %v1978
    %2099 = vmatprep.subr.bf16.mxu0 0
    %2100 = vmatpush1.bf16.msra.mxu0 %v1979
    %2101 = vmatprep.subr.bf16.mxu0 0
    %2102 = vmatpush1.bf16.msra.mxu0 %v1980
    %2103 = vmatprep.subr.bf16.mxu0 0
    %2104 = vmatpush1.bf16.msra.mxu0 %v1981
    %2105 = vmatprep.subr.bf16.mxu0 0
    %2106 = vmatpush1.bf16.msra.mxu0 %v1982
    %2107 = vmatprep.subr.bf16.mxu0 0
    %2108 = vmatpush1.bf16.msra.mxu0 %v1983
    %2109 = vmatprep.subr.bf16.mxu0 0
    %2110 = vmatpush1.bf16.msra.mxu0 %v1984
    %2111 = vmatprep.subr.bf16.mxu0 0
    %2112 = vmatpush1.bf16.msra.mxu0 %v1985
    %2113 = vmatprep.subr.bf16.mxu0 0
    %2114 = vmatpush1.bf16.msra.mxu0 0
    %2115 = vmatprep.subr.bf16.mxu0 0
    %2116 = vmatpush1.bf16.msra.mxu0 0
    %2117 = vmatprep.subr.bf16.mxu0 0
    %2118 = vmatpush1.bf16.msra.mxu0 0
    %2119 = vmatprep.subr.bf16.mxu0 0
    %2120 = vmatpush1.bf16.msra.mxu0 0
    %2121 = vmatprep.subr.bf16.mxu0 0
    %2122 = vmatpush1.bf16.msra.mxu0 0
    %2123 = vmatprep.subr.bf16.mxu0 0
    %2124 = vmatpush1.bf16.msra.mxu0 0
    %2125 = vmatprep.subr.bf16.mxu0 0
    %2126 = vmatpush1.bf16.msra.mxu0 0
    %2127 = vmatprep.subr.bf16.mxu0 0
    %2128 = vmatpush1.bf16.msra.mxu0 0
    %2129 = vmatprep.mubr.bf16.mxu0 0
    %2130 = vmatmul.mubr.bf16.gmra.mrb[0].mxu0 %v2089
    %v2131 = vpop.f32.mrb[0].mxu0
    %v2132 = vadd.f32 %v2095, %v2131
    %v2133 = vpop.f32.mrb[0].mxu0
    %v2134 = vpop.f32.mrb[0].mxu0
    %v2135 = vpop.f32.mrb[0].mxu0
    %2136 = vdwg.mxu0
    %vm2137 = vcmask 15360
    %v2139 = vsel %vm2137, %v1925, 0
    %v2142 = vsel %vm2137, %v1926, 0
    %v2145 = vsel %vm2137, %v1927, 0
    %v2148 = vsel %vm2137, %v1928, 0
    %v2151 = vsel %vm2137, %v1929, 0
    %v2154 = vsel %vm2137, %v1930, 0
    %v2157 = vsel %vm2137, %v1931, 0
    %v2160 = vsel %vm2137, %v1932, 0
    %v2163 = vsel %vm2137, %v1933, 0
    %v2166 = vsel %vm2137, %v1934, 0
    %v2169 = vsel %vm2137, %v1935, 0
    %v2172 = vsel %vm2137, %v1936, 0
    %v2175 = vsel %vm2137, %v1937, 0
    %vm2177 = vcmask 1041408
    %v2179 = vsel %vm2177, %v2132, 0
    %2181 = vmatprep.subr.mxu0 0.0
    %2182 = vmatpush1.msra.mxu0 %v2179
    %2183 = vmatprep.subr.mxu0 0.0
    %2184 = vmatpush1.msra.mxu0 0.0
    %2185 = vmatprep.subr.mxu0 0.0
    %2186 = vmatpush1.msra.mxu0 0.0
    %2187 = vmatprep.subr.mxu0 0.0
    %2188 = vmatpush1.msra.mxu0 0.0
    %2189 = vmatprep.subr.mxu0 0.0
    %2190 = vmatpush1.msra.mxu0 0.0
    %2191 = vmatprep.subr.mxu0 0.0
    %2192 = vmatpush1.msra.mxu0 0.0
    %2193 = vmatprep.subr.mxu0 0.0
    %2194 = vmatpush1.msra.mxu0 0.0
    %2195 = vmatprep.subr.mxu0 0.0
    %2196 = vmatpush1.msra.mxu0 0.0
    %2197 = vmatprep.subr.mxu0 0.0
    %2198 = vmatpush1.msra.mxu0 0.0
    %2199 = vmatprep.subr.mxu0 0.0
    %2200 = vmatpush1.msra.mxu0 0.0
    %2201 = vmatprep.subr.mxu0 0.0
    %2202 = vmatpush1.msra.mxu0 0.0
    %2203 = vmatprep.subr.mxu0 0.0
    %2204 = vmatpush1.msra.mxu0 0.0
    %2205 = vmatprep.subr.mxu0 0.0
    %2206 = vmatpush1.msra.mxu0 0.0
    %2207 = vmatprep.subr.mxu0 0.0
    %2208 = vmatpush1.msra.mxu0 0.0
    %2209 = vmatprep.subr.mxu0 0.0
    %2210 = vmatpush1.msra.mxu0 0.0
    %2211 = vmatprep.subr.mxu0 0.0
    %2212 = vmatpush1.msra.mxu0 0.0
    %2213 = vmatprep.subr.mxu0 0.0
    %2214 = vmatpush1.msra.mxu0 0.0
    %2215 = vmatprep.subr.mxu0 0.0
    %2216 = vmatpush1.msra.mxu0 0.0
    %2217 = vmatprep.subr.mxu0 0.0
    %2218 = vmatpush1.msra.mxu0 0.0
    %2219 = vmatprep.subr.mxu0 0.0
    %2220 = vmatpush1.msra.mxu0 0.0
    %2221 = vmatprep.subr.mxu0 0.0
    %2222 = vmatpush1.msra.mxu0 0.0
    %2223 = vmatprep.subr.mxu0 0.0
    %2224 = vmatpush1.msra.mxu0 0.0
    %2225 = vmatprep.subr.mxu0 0.0
    %2226 = vmatpush1.msra.mxu0 0.0
    %2227 = vmatprep.subr.mxu0 0.0
    %2228 = vmatpush1.msra.mxu0 0.0
    %2229 = vmatprep.subr.mxu0 0.0
    %2230 = vmatpush1.msra.mxu0 0.0
    %2231 = vmatprep.subr.mxu0 0.0
    %2232 = vmatpush1.msra.mxu0 0.0
    %2233 = vmatprep.subr.mxu0 0.0
    %2234 = vmatpush1.msra.mxu0 0.0
    %2235 = vmatprep.subr.mxu0 0.0
    %2236 = vmatpush1.msra.mxu0 0.0
    %2237 = vmatprep.subr.mxu0 0.0
    %2238 = vmatpush1.msra.mxu0 0.0
    %2239 = vmatprep.subr.mxu0 0.0
    %2240 = vmatpush1.msra.mxu0 0.0
    %2241 = vmatprep.subr.mxu0 0.0
    %2242 = vmatpush1.msra.mxu0 0.0
    %2243 = vmatprep.subr.mxu0 0.0
    %2244 = vmatpush1.msra.mxu0 0.0
    %2245 = vmatprep.mubr.f32.mxu0 0.0
    %2246 = vmatmul.mubr.f32.gmra.mrb[0].mxu0 %v2139
    %v2247 = vpop.f32.mrb[0].mxu0
    %v2248 = vadd.f32 0.0, %v2247
    %v2249 = vpop.f32.mrb[0].mxu0
    %2250 = vmatprep.mubr.f32.mxu0 0.0
    %2251 = vmatmul.mubr.f32.gmra.mrb[0].mxu0 %v2142
    %v2252 = vpop.f32.mrb[0].mxu0
    %v2253 = vadd.f32 0.0, %v2252
    %v2254 = vpop.f32.mrb[0].mxu0
    %2255 = vmatprep.mubr.f32.mxu0 0.0
    %2256 = vmatmul.mubr.f32.gmra.mrb[0].mxu0 %v2145
    %v2257 = vpop.f32.mrb[0].mxu0
    %v2258 = vadd.f32 0.0, %v2257
    %v2259 = vpop.f32.mrb[0].mxu0
    %2260 = vmatprep.mubr.f32.mxu0 0.0
    %2261 = vmatmul.mubr.f32.gmra.mrb[0].mxu0 %v2148
    %v2262 = vpop.f32.mrb[0].mxu0
    %v2263 = vadd.f32 0.0, %v2262
    %v2264 = vpop.f32.mrb[0].mxu0
    %2265 = vmatprep.mubr.f32.mxu0 0.0
    %2266 = vmatmul.mubr.f32.gmra.mrb[0].mxu0 %v2151
    %v2267 = vpop.f32.mrb[0].mxu0
    %v2268 = vadd.f32 0.0, %v2267
    %v2269 = vpop.f32.mrb[0].mxu0
    %2270 = vmatprep.mubr.f32.mxu0 0.0
    %2271 = vmatmul.mubr.f32.gmra.mrb[0].mxu0 %v2154
    %v2272 = vpop.f32.mrb[0].mxu0
    %v2273 = vadd.f32 0.0, %v2272
    %v2274 = vpop.f32.mrb[0].mxu0
    %2275 = vmatprep.mubr.f32.mxu0 0.0
    %2276 = vmatmul.mubr.f32.gmra.mrb[0].mxu0 %v2157
    %v2277 = vpop.f32.mrb[0].mxu0
    %v2278 = vadd.f32 0.0, %v2277
    %v2279 = vpop.f32.mrb[0].mxu0
    %2280 = vmatprep.mubr.f32.mxu0 0.0
    %2281 = vmatmul.mubr.f32.gmra.mrb[0].mxu0 %v2160
    %v2282 = vpop.f32.mrb[0].mxu0
    %v2283 = vadd.f32 0.0, %v2282
    %v2284 = vpop.f32.mrb[0].mxu0
    %2285 = vmatprep.mubr.f32.mxu0 0.0
    %2286 = vmatmul.mubr.f32.gmra.mrb[0].mxu0 %v2163
    %v2287 = vpop.f32.mrb[0].mxu0
    %v2288 = vadd.f32 0.0, %v2287
    %v2289 = vpop.f32.mrb[0].mxu0
    %2290 = vmatprep.mubr.f32.mxu0 0.0
    %2291 = vmatmul.mubr.f32.gmra.mrb[0].mxu0 %v2166
    %v2292 = vpop.f32.mrb[0].mxu0
    %v2293 = vadd.f32 0.0, %v2292
    %v2294 = vpop.f32.mrb[0].mxu0
    %2295 = vmatprep.mubr.f32.mxu0 0.0
    %2296 = vmatmul.mubr.f32.gmra.mrb[0].mxu0 %v2169
    %v2297 = vpop.f32.mrb[0].mxu0
    %v2298 = vadd.f32 0.0, %v2297
    %v2299 = vpop.f32.mrb[0].mxu0
    %2300 = vmatprep.mubr.f32.mxu0 0.0
    %2301 = vmatmul.mubr.f32.gmra.mrb[0].mxu0 %v2172
    %v2302 = vpop.f32.mrb[0].mxu0
    %v2303 = vadd.f32 0.0, %v2302
    %v2304 = vpop.f32.mrb[0].mxu0
    %2305 = vmatprep.mubr.f32.mxu0 0.0
    %2306 = vmatmul.mubr.f32.gmra.mrb[0].mxu0 %v2175
    %v2307 = vpop.f32.mrb[0].mxu0
    %v2308 = vadd.f32 0.0, %v2307
    %v2309 = vpop.f32.mrb[0].mxu0
    %2310 = vdwg.mxu0
    %v2311 = vadd.f32 %v2036, %v2248
    %v2312 = vadd.f32 %v2039, %v2253
    %v2313 = vadd.f32 %v2044, %v2258
    %v2314 = vadd.f32 %v2047, %v2263
    %v2315 = vadd.f32 %v2052, %v2268
    %v2316 = vadd.f32 %v2055, %v2273
    %v2317 = vadd.f32 %v2060, %v2278
    %v2318 = vadd.f32 %v2063, %v2283
    %v2319 = vadd.f32 %v2068, %v2288
    %v2320 = vadd.f32 %v2071, %v2293
    %v2321 = vadd.f32 %v2076, %v2298
    %v2322 = vadd.f32 %v2079, %v2303
    %v2323 = vadd.f32 %v2084, %v2308
    %v2324 = vtanh.pop %v2311
    %v2325 = vtanh.pop %v2312
    %v2326 = vtanh.pop %v2313
    %v2327 = vtanh.pop %v2314
    %v2328 = vtanh.pop %v2315
    %v2329 = vtanh.pop %v2316
    %v2330 = vtanh.pop %v2317
    %v2331 = vtanh.pop %v2318
    %v2332 = vtanh.pop %v2319
    %v2333 = vtanh.pop %v2320
    %v2334 = vtanh.pop %v2321
    %v2335 = vtanh.pop %v2322
    %v2336 = vtanh.pop %v2323
    %v2337 = vld [vmem:[#allocation3] sm:$0x1]
    %2339 = vset.pattern.permute.xlu0 0
    %2340 = vperm.xlu0 %2339, %v2337
    %v2341 = vpop.permute.xlu0 %2340
    %v2343 = vlaneseq
    %v2344 = vshrl.u32 %v2343, 7
    %v2345 = vsub.s32 0, %v2344
    %v2346 = vrot.slane %v2341, %v2345
    %vm2347 = vcmask 523264
    %v2349 = vsel %vm2347, %v1986, 0
    %v2352 = vsel %vm2347, %v2324, 0
    %v2355 = vsel %vm2347, %v2325, 0
    %v2358 = vsel %vm2347, %v2326, 0
    %v2361 = vsel %vm2347, %v2327, 0
    %v2364 = vsel %vm2347, %v2328, 0
    %v2367 = vsel %vm2347, %v2329, 0
    %v2370 = vsel %vm2347, %v2330, 0
    %v2373 = vsel %vm2347, %v2331, 0
    %v2376 = vsel %vm2347, %v2332, 0
    %v2379 = vsel %vm2347, %v2333, 0
    %v2382 = vsel %vm2347, %v2334, 0
    %v2385 = vsel %vm2347, %v2335, 0
    %v2388 = vsel %vm2347, %v2336, 0
    %2390 = vmatprep.subr.mxu0 0.0
    %2391 = vmatpush1.xpose.msra.mxu0 %v2352
    %2392 = vmatprep.subr.mxu0 0.0
    %2393 = vmatpush1.xpose.msra.mxu0 %v2355
    %2394 = vmatprep.subr.mxu0 0.0
    %2395 = vmatpush1.xpose.msra.mxu0 %v2358
    %2396 = vmatprep.subr.mxu0 0.0
    %2397 = vmatpush1.xpose.msra.mxu0 %v2361
    %2398 = vmatprep.subr.mxu0 0.0
    %2399 = vmatpush1.xpose.msra.mxu0 %v2364
    %2400 = vmatprep.subr.mxu0 0.0
    %2401 = vmatpush1.xpose.msra.mxu0 %v2367
    %2402 = vmatprep.subr.mxu0 0.0
    %2403 = vmatpush1.xpose.msra.mxu0 %v2370
    %2404 = vmatprep.subr.mxu0 0.0
    %2405 = vmatpush1.xpose.msra.mxu0 %v2373
    %2406 = vmatprep.subr.mxu0 0.0
    %2407 = vmatpush1.xpose.msra.mxu0 %v2376
    %2408 = vmatprep.subr.mxu0 0.0
    %2409 = vmatpush1.xpose.msra.mxu0 %v2379
    %2410 = vmatprep.subr.mxu0 0.0
    %2411 = vmatpush1.xpose.msra.mxu0 %v2382
    %2412 = vmatprep.subr.mxu0 0.0
    %2413 = vmatpush1.xpose.msra.mxu0 %v2385
    %2414 = vmatprep.subr.mxu0 0.0
    %2415 = vmatpush1.xpose.msra.mxu0 %v2388
    %2416 = vmatprep.subr.mxu0 0.0
    %2417 = vmatpush1.xpose.msra.mxu0 0.0
    %2418 = vmatprep.subr.mxu0 0.0
    %2419 = vmatpush1.xpose.msra.mxu0 0.0
    %2420 = vmatprep.subr.mxu0 0.0
    %2421 = vmatpush1.xpose.msra.mxu0 0.0
    %2422 = vmatprep.subr.mxu0 0.0
    %2423 = vmatpush1.xpose.msra.mxu0 0.0
    %2424 = vmatprep.subr.mxu0 0.0
    %2425 = vmatpush1.xpose.msra.mxu0 0.0
    %2426 = vmatprep.subr.mxu0 0.0
    %2427 = vmatpush1.xpose.msra.mxu0 0.0
    %2428 = vmatprep.subr.mxu0 0.0
    %2429 = vmatpush1.xpose.msra.mxu0 0.0
    %2430 = vmatprep.subr.mxu0 0.0
    %2431 = vmatpush1.xpose.msra.mxu0 0.0
    %2432 = vmatprep.subr.mxu0 0.0
    %2433 = vmatpush1.xpose.msra.mxu0 0.0
    %2434 = vmatprep.subr.mxu0 0.0
    %2435 = vmatpush1.xpose.msra.mxu0 0.0
    %2436 = vmatprep.subr.mxu0 0.0
    %2437 = vmatpush1.xpose.msra.mxu0 0.0
    %2438 = vmatprep.subr.mxu0 0.0
    %2439 = vmatpush1.xpose.msra.mxu0 0.0
    %2440 = vmatprep.subr.mxu0 0.0
    %2441 = vmatpush1.xpose.msra.mxu0 0.0
    %2442 = vmatprep.subr.mxu0 0.0
    %2443 = vmatpush1.xpose.msra.mxu0 0.0
    %2444 = vmatprep.subr.mxu0 0.0
    %2445 = vmatpush1.xpose.msra.mxu0 0.0
    %2446 = vmatprep.subr.mxu0 0.0
    %2447 = vmatpush1.xpose.msra.mxu0 0.0
    %2448 = vmatprep.subr.mxu0 0.0
    %2449 = vmatpush1.xpose.msra.mxu0 0.0
    %2450 = vmatprep.subr.mxu0 0.0
    %2451 = vmatpush1.xpose.msra.mxu0 0.0
    %2452 = vmatprep.subr.mxu0 0.0
    %2453 = vmatpush1.xpose.msra.mxu0 0.0
    %2454 = vmatprep.mubr.f32.mxu0 0.0
    %2455 = vmatmul.mubr.f32.gmra.mrb[0].mxu0 %v2349
    %v2456 = vpop.f32.mrb[0].mxu0
    %v2457 = vadd.f32 %v2346, %v2456
    %v2458 = vpop.f32.mrb[0].mxu0
    %2459 = vdwg.mxu0
    %vm2460 = vcmask 794624
    %v2461 = vsel %vm2460, %v2457, -inf
    %2462 = vmax.xlane.f32.xlu0 %v2461
    %v2463 = vpop.xlane.xlu0 %2462
    %v2464 = vrot.slane %v2463, 4
    %v2465 = vmax.f32 %v2463, %v2464
    %v2466 = vrot.slane %v2465, 2
    %v2467 = vmax.f32 %v2465, %v2466
    %v2468 = vrot.slane %v2467, 1
    %v2469 = vmax.f32 %v2467, %v2468
    %s2470 = vtos %v2469
    %v2471 = vstv %s2470
    %v2472 = vsub.f32 %v2457, %v2471
    %v2473 = vmul.f32 %v2472, 1.442695
    %v2474 = vpow.pop %v2473
    %vm2475 = vcmask 801792
    %v2477 = vsel %vm2475, %v2474, 0
    %v2479 = vsel %vm2177, %v1937, 0
    %2481 = vmatprep.subr.mxu0 0.0
    %2482 = vmatpush1.msra.mxu0 %v1925
    %2483 = vmatprep.subr.mxu0 0.0
    %2484 = vmatpush1.msra.mxu0 %v1926
    %2485 = vmatprep.subr.mxu0 0.0
    %2486 = vmatpush1.msra.mxu0 %v1927
    %2487 = vmatprep.subr.mxu0 0.0
    %2488 = vmatpush1.msra.mxu0 %v1928
    %2489 = vmatprep.subr.mxu0 0.0
    %2490 = vmatpush1.msra.mxu0 %v1929
    %2491 = vmatprep.subr.mxu0 0.0
    %2492 = vmatpush1.msra.mxu0 %v1930
    %2493 = vmatprep.subr.mxu0 0.0
    %2494 = vmatpush1.msra.mxu0 %v1931
    %2495 = vmatprep.subr.mxu0 0.0
    %2496 = vmatpush1.msra.mxu0 %v1932
    %2497 = vmatprep.subr.mxu0 0.0
    %2498 = vmatpush1.msra.mxu0 %v1933
    %2499 = vmatprep.subr.mxu0 0.0
    %2500 = vmatpush1.msra.mxu0 %v1934
    %2501 = vmatprep.subr.mxu0 0.0
    %2502 = vmatpush1.msra.mxu0 %v1935
    %2503 = vmatprep.subr.mxu0 0.0
    %2504 = vmatpush1.msra.mxu0 %v1936
    %2505 = vmatprep.subr.mxu0 0.0
    %2506 = vmatpush1.msra.mxu0 %v2479
    %2507 = vmatprep.subr.mxu0 0.0
    %2508 = vmatpush1.msra.mxu0 0.0
    %2509 = vmatprep.subr.mxu0 0.0
    %2510 = vmatpush1.msra.mxu0 0.0
    %2511 = vmatprep.subr.mxu0 0.0
    %2512 = vmatpush1.msra.mxu0 0.0
    %2513 = vmatprep.subr.mxu0 0.0
    %2514 = vmatpush1.msra.mxu0 0.0
    %2515 = vmatprep.subr.mxu0 0.0
    %2516 = vmatpush1.msra.mxu0 0.0
    %2517 = vmatprep.subr.mxu0 0.0
    %2518 = vmatpush1.msra.mxu0 0.0
    %2519 = vmatprep.subr.mxu0 0.0
    %2520 = vmatpush1.msra.mxu0 0.0
    %2521 = vmatprep.subr.mxu0 0.0
    %2522 = vmatpush1.msra.mxu0 0.0
    %2523 = vmatprep.subr.mxu0 0.0
    %2524 = vmatpush1.msra.mxu0 0.0
    %2525 = vmatprep.subr.mxu0 0.0
    %2526 = vmatpush1.msra.mxu0 0.0
    %2527 = vmatprep.subr.mxu0 0.0
    %2528 = vmatpush1.msra.mxu0 0.0
    %2529 = vmatprep.subr.mxu0 0.0
    %2530 = vmatpush1.msra.mxu0 0.0
    %2531 = vmatprep.subr.mxu0 0.0
    %2532 = vmatpush1.msra.mxu0 0.0
    %2533 = vmatprep.subr.mxu0 0.0
    %2534 = vmatpush1.msra.mxu0 0.0
    %2535 = vmatprep.subr.mxu0 0.0
    %2536 = vmatpush1.msra.mxu0 0.0
    %2537 = vmatprep.subr.mxu0 0.0
    %2538 = vmatpush1.msra.mxu0 0.0
    %2539 = vmatprep.subr.mxu0 0.0
    %2540 = vmatpush1.msra.mxu0 0.0
    %2541 = vmatprep.subr.mxu0 0.0
    %2542 = vmatpush1.msra.mxu0 0.0
    %2543 = vmatprep.subr.mxu0 0.0
    %2544 = vmatpush1.msra.mxu0 0.0
    %2545 = vmatprep.mubr.f32.mxu0 0.0
    %2546 = vmatmul.mubr.f32.gmra.mrb[0].mxu0 %v2477
    %v2547 = vpop.f32.mrb[0].mxu0
    %v2548 = vadd.f32 0.0, %v2547
    %v2549 = vpop.f32.mrb[0].mxu0
    %2550 = vdwg.mxu0
    %v2552 = vsel %vm2137, %v2548, 0
    %v2555 = vsel %vm2177, %v1870, 0
    %2557 = vmatprep.subr.mxu0 0.0
    %2558 = vmatpush1.msra.mxu0 %v2555
    %2559 = vmatprep.subr.mxu0 0.0
    %2560 = vmatpush1.msra.mxu0 0.0
    %2561 = vmatprep.subr.mxu0 0.0
    %2562 = vmatpush1.msra.mxu0 0.0
    %2563 = vmatprep.subr.mxu0 0.0
    %2564 = vmatpush1.msra.mxu0 0.0
    %2565 = vmatprep.subr.mxu0 0.0
    %2566 = vmatpush1.msra.mxu0 0.0
    %2567 = vmatprep.subr.mxu0 0.0
    %2568 = vmatpush1.msra.mxu0 0.0
    %2569 = vmatprep.subr.mxu0 0.0
    %2570 = vmatpush1.msra.mxu0 0.0
    %2571 = vmatprep.subr.mxu0 0.0
    %2572 = vmatpush1.msra.mxu0 0.0
    %2573 = vmatprep.subr.mxu0 0.0
    %2574 = vmatpush1.msra.mxu0 0.0
    %2575 = vmatprep.subr.mxu0 0.0
    %2576 = vmatpush1.msra.mxu0 0.0
    %2577 = vmatprep.subr.mxu0 0.0
    %2578 = vmatpush1.msra.mxu0 0.0
    %2579 = vmatprep.subr.mxu0 0.0
    %2580 = vmatpush1.msra.mxu0 0.0
    %2581 = vmatprep.subr.mxu0 0.0
    %2582 = vmatpush1.msra.mxu0 0.0
    %2583 = vmatprep.subr.mxu0 0.0
    %2584 = vmatpush1.msra.mxu0 0.0
    %2585 = vmatprep.subr.mxu0 0.0
    %2586 = vmatpush1.msra.mxu0 0.0
    %2587 = vmatprep.subr.mxu0 0.0
    %2588 = vmatpush1.msra.mxu0 0.0
    %2589 = vmatprep.subr.mxu0 0.0
    %2590 = vmatpush1.msra.mxu0 0.0
    %2591 = vmatprep.subr.mxu0 0.0
    %2592 = vmatpush1.msra.mxu0 0.0
    %2593 = vmatprep.subr.mxu0 0.0
    %2594 = vmatpush1.msra.mxu0 0.0
    %2595 = vmatprep.subr.mxu0 0.0
    %2596 = vmatpush1.msra.mxu0 0.0
    %2597 = vmatprep.subr.mxu0 0.0
    %2598 = vmatpush1.msra.mxu0 0.0
    %2599 = vmatprep.subr.mxu0 0.0
    %2600 = vmatpush1.msra.mxu0 0.0
    %2601 = vmatprep.subr.mxu0 0.0
    %2602 = vmatpush1.msra.mxu0 0.0
    %2603 = vmatprep.subr.mxu0 0.0
    %2604 = vmatpush1.msra.mxu0 0.0
    %2605 = vmatprep.subr.mxu0 0.0
    %2606 = vmatpush1.msra.mxu0 0.0
    %2607 = vmatprep.subr.mxu0 0.0
    %2608 = vmatpush1.msra.mxu0 0.0
    %2609 = vmatprep.subr.mxu0 0.0
    %2610 = vmatpush1.msra.mxu0 0.0
    %2611 = vmatprep.subr.mxu0 0.0
    %2612 = vmatpush1.msra.mxu0 0.0
    %2613 = vmatprep.subr.mxu0 0.0
    %2614 = vmatpush1.msra.mxu0 0.0
    %2615 = vmatprep.subr.mxu0 0.0
    %2616 = vmatpush1.msra.mxu0 0.0
    %2617 = vmatprep.subr.mxu0 0.0
    %2618 = vmatpush1.msra.mxu0 0.0
    %2619 = vmatprep.subr.mxu0 0.0
    %2620 = vmatpush1.msra.mxu0 0.0
    %2621 = vmatprep.mubr.f32.mxu0 0.0
    %2622 = vmatmul.mubr.f32.gmra.mrb[0].mxu0 %v2552
    %v2623 = vpop.f32.mrb[0].mxu0
    %v2624 = vadd.f32 0.0, %v2623
    %v2625 = vpop.f32.mrb[0].mxu0
    %2626 = vdwg.mxu0
    %v2627 = vrcp.pop %v2624
    %v2628 = vmul.f32 %v2474, %v2627
    %v2629 = vlaneseq
    %v2630 = vshrl.u32 %v2629, 7
    %v2631 = vsub.s32 0, %v2630
    %v2632 = vrot.slane %v2628, %v2631
    %v2633 = vmul.f32 %v1870, %v2632
    %v2635 = vsel %vm2475, %v2633, 0
    %v2638 = vsel %vm2177, %v434, 0
    %2640 = vmatprep.subr.mxu0 0.0
    %2641 = vmatpush1.msra.mxu0 %v422
    %2642 = vmatprep.subr.mxu0 0.0
    %2643 = vmatpush1.msra.mxu0 %v423
    %2644 = vmatprep.subr.mxu0 0.0
    %2645 = vmatpush1.msra.mxu0 %v424
    %2646 = vmatprep.subr.mxu0 0.0
    %2647 = vmatpush1.msra.mxu0 %v425
    %2648 = vmatprep.subr.mxu0 0.0
    %2649 = vmatpush1.msra.mxu0 %v426
    %2650 = vmatprep.subr.mxu0 0.0
    %2651 = vmatpush1.msra.mxu0 %v427
    %2652 = vmatprep.subr.mxu0 0.0
    %2653 = vmatpush1.msra.mxu0 %v428
    %2654 = vmatprep.subr.mxu0 0.0
    %2655 = vmatpush1.msra.mxu0 %v429
    %2656 = vmatprep.subr.mxu0 0.0
    %2657 = vmatpush1.msra.mxu0 %v430
    %2658 = vmatprep.subr.mxu0 0.0
    %2659 = vmatpush1.msra.mxu0 %v431
    %2660 = vmatprep.subr.mxu0 0.0
    %2661 = vmatpush1.msra.mxu0 %v432
    %2662 = vmatprep.subr.mxu0 0.0
    %2663 = vmatpush1.msra.mxu0 %v433
    %2664 = vmatprep.subr.mxu0 0.0
    %2665 = vmatpush1.msra.mxu0 %v2638
    %2666 = vmatprep.subr.mxu0 0.0
    %2667 = vmatpush1.msra.mxu0 0.0
    %2668 = vmatprep.subr.mxu0 0.0
    %2669 = vmatpush1.msra.mxu0 0.0
    %2670 = vmatprep.subr.mxu0 0.0
    %2671 = vmatpush1.msra.mxu0 0.0
    %2672 = vmatprep.subr.mxu0 0.0
    %2673 = vmatpush1.msra.mxu0 0.0
    %2674 = vmatprep.subr.mxu0 0.0
    %2675 = vmatpush1.msra.mxu0 0.0
    %2676 = vmatprep.subr.mxu0 0.0
    %2677 = vmatpush1.msra.mxu0 0.0
    %2678 = vmatprep.subr.mxu0 0.0
    %2679 = vmatpush1.msra.mxu0 0.0
    %2680 = vmatprep.subr.mxu0 0.0
    %2681 = vmatpush1.msra.mxu0 0.0
    %2682 = vmatprep.subr.mxu0 0.0
    %2683 = vmatpush1.msra.mxu0 0.0
    %2684 = vmatprep.subr.mxu0 0.0
    %2685 = vmatpush1.msra.mxu0 0.0
    %2686 = vmatprep.subr.mxu0 0.0
    %2687 = vmatpush1.msra.mxu0 0.0
    %2688 = vmatprep.subr.mxu0 0.0
    %2689 = vmatpush1.msra.mxu0 0.0
    %2690 = vmatprep.subr.mxu0 0.0
    %2691 = vmatpush1.msra.mxu0 0.0
    %2692 = vmatprep.subr.mxu0 0.0
    %2693 = vmatpush1.msra.mxu0 0.0
    %2694 = vmatprep.subr.mxu0 0.0
    %2695 = vmatpush1.msra.mxu0 0.0
    %2696 = vmatprep.subr.mxu0 0.0
    %2697 = vmatpush1.msra.mxu0 0.0
    %2698 = vmatprep.subr.mxu0 0.0
    %2699 = vmatpush1.msra.mxu0 0.0
    %2700 = vmatprep.subr.mxu0 0.0
    %2701 = vmatpush1.msra.mxu0 0.0
    %2702 = vmatprep.subr.mxu0 0.0
    %2703 = vmatpush1.msra.mxu0 0.0
    %2704 = vmatprep.mubr.f32.mxu0 0.0
    %2705 = vmatmul.mubr.f32.gmra.mrb[0].mxu0 %v2635
    %v2706 = vpop.f32.mrb[0].mxu0
    %v2707 = vadd.f32 %v1861, %v2706
    %v2708 = vpop.f32.mrb[0].mxu0
    %2709 = vdwg.mxu0
    %v2710 = vpack.c.bf16 %v2707, %v2707
    %v2711 = vld [vmem:[%s14] sm:$0xff]
    %v2712 = vld [vmem:[%s14 + $0x8] sm:$0xff]
    %v2713 = vld [vmem:[%s14 + $0x10] sm:$0xff]
    %v2714 = vld [vmem:[%s14 + $0x18] sm:$0xff]
    %v2715 = vld [vmem:[%s14 + $0x20] sm:$0xff]
    %v2716 = vld [vmem:[%s14 + $0x28] sm:$0xff]
    %v2717 = vld [vmem:[%s14 + $0x30] sm:$0xff]
    %v2718 = vld [vmem:[%s14 + $0x38] sm:$0xff]
    %v2719 = vld [vmem:[%s14 + $0x40] sm:$0xff]
    %v2720 = vld [vmem:[%s14 + $0x48] sm:$0xff]
    %v2721 = vld [vmem:[%s14 + $0x50] sm:$0xff]
    %v2722 = vld [vmem:[%s14 + $0x58] sm:$0xff]
    %v2723 = vld [vmem:[%s14 + $0x60] sm:$0xff]
    %v2724 = vld [vmem:[%s14 + $0x68] sm:$0xff]
    %v2725 = vld [vmem:[%s14 + $0x70] sm:$0xff]
    %v2726 = vld [vmem:[%s14 + $0x78] sm:$0xff]
    %v2727 = vpack.c.bf16 %v2712, %v2711
    %v2728 = vpack.c.bf16 %v2714, %v2713
    %v2729 = vpack.c.bf16 %v2716, %v2715
    %v2730 = vpack.c.bf16 %v2718, %v2717
    %v2731 = vpack.c.bf16 %v2720, %v2719
    %v2732 = vpack.c.bf16 %v2722, %v2721
    %v2733 = vpack.c.bf16 %v2724, %v2723
    %v2734 = vpack.c.bf16 %v2726, %v2725
    %v2735 = vld [vmem:[%s15] sm:$0x1]
    %v2737 = vlaneseq
    %v2738 = vshrl.u32 %v2737, 7
    %v2739 = vsub.s32 0, %v2738
    %v2740 = vrot.slane %v2735, %v2739
    %2742 = vmatprep.subr.bf16.mxu0 0
    %2743 = vmatpush1.bf16.msra.mxu0 %v2727
    %2744 = vmatprep.subr.bf16.mxu0 0
    %2745 = vmatpush1.bf16.msra.mxu0 %v2728
    %2746 = vmatprep.subr.bf16.mxu0 0
    %2747 = vmatpush1.bf16.msra.mxu0 %v2729
    %2748 = vmatprep.subr.bf16.mxu0 0
    %2749 = vmatpush1.bf16.msra.mxu0 %v2730
    %2750 = vmatprep.subr.bf16.mxu0 0
    %2751 = vmatpush1.bf16.msra.mxu0 %v2731
    %2752 = vmatprep.subr.bf16.mxu0 0
    %2753 = vmatpush1.bf16.msra.mxu0 %v2732
    %2754 = vmatprep.subr.bf16.mxu0 0
    %2755 = vmatpush1.bf16.msra.mxu0 %v2733
    %2756 = vmatprep.subr.bf16.mxu0 0
    %2757 = vmatpush1.bf16.msra.mxu0 %v2734
    %2758 = vmatprep.subr.bf16.mxu0 0
    %2759 = vmatpush1.bf16.msra.mxu0 0
    %2760 = vmatprep.subr.bf16.mxu0 0
    %2761 = vmatpush1.bf16.msra.mxu0 0
    %2762 = vmatprep.subr.bf16.mxu0 0
    %2763 = vmatpush1.bf16.msra.mxu0 0
    %2764 = vmatprep.subr.bf16.mxu0 0
    %2765 = vmatpush1.bf16.msra.mxu0 0
    %2766 = vmatprep.subr.bf16.mxu0 0
    %2767 = vmatpush1.bf16.msra.mxu0 0
    %2768 = vmatprep.subr.bf16.mxu0 0
    %2769 = vmatpush1.bf16.msra.mxu0 0
    %2770 = vmatprep.subr.bf16.mxu0 0
    %2771 = vmatpush1.bf16.msra.mxu0 0
    %2772 = vmatprep.subr.bf16.mxu0 0
    %2773 = vmatpush1.bf16.msra.mxu0 0
    %2774 = vmatprep.mubr.bf16.mxu0 0
    %2775 = vmatmul.mubr.bf16.gmra.mrb[0].mxu0 %v2710
    %v2776 = vpop.f32.mrb[0].mxu0
    %v2777 = vadd.f32 %v2740, %v2776
    %v2778 = vpop.f32.mrb[0].mxu0
    %v2779 = vpop.f32.mrb[0].mxu0
    %v2780 = vpop.f32.mrb[0].mxu0
    %2781 = vdwg.mxu0
    %v2782 = vmax.f32 %v2777, 0.0
    %v2783 = vpack.c.bf16 %v2782, %v2782
    %v2784 = vld [vmem:[%s16] sm:$0xff]
    %v2785 = vld [vmem:[%s16 + $0x8] sm:$0xff]
    %v2786 = vld [vmem:[%s16 + $0x10] sm:$0xff]
    %v2787 = vld [vmem:[%s16 + $0x18] sm:$0xff]
    %v2788 = vld [vmem:[%s16 + $0x20] sm:$0xff]
    %v2789 = vld [vmem:[%s16 + $0x28] sm:$0xff]
    %v2790 = vld [vmem:[%s16 + $0x30] sm:$0xff]
    %v2791 = vld [vmem:[%s16 + $0x38] sm:$0xff]
    %v2792 = vld [vmem:[%s16 + $0x40] sm:$0xff]
    %v2793 = vld [vmem:[%s16 + $0x48] sm:$0xff]
    %v2794 = vld [vmem:[%s16 + $0x50] sm:$0xff]
    %v2795 = vld [vmem:[%s16 + $0x58] sm:$0xff]
    %v2796 = vld [vmem:[%s16 + $0x60] sm:$0xff]
    %v2797 = vld [vmem:[%s16 + $0x68] sm:$0xff]
    %v2798 = vld [vmem:[%s16 + $0x70] sm:$0xff]
    %v2799 = vld [vmem:[%s16 + $0x78] sm:$0xff]
    %v2800 = vpack.c.bf16 %v2785, %v2784
    %v2801 = vpack.c.bf16 %v2787, %v2786
    %v2802 = vpack.c.bf16 %v2789, %v2788
    %v2803 = vpack.c.bf16 %v2791, %v2790
    %v2804 = vpack.c.bf16 %v2793, %v2792
    %v2805 = vpack.c.bf16 %v2795, %v2794
    %v2806 = vpack.c.bf16 %v2797, %v2796
    %v2807 = vpack.c.bf16 %v2799, %v2798
    %v2808 = vld [vmem:[%s17] sm:$0x1]
    %v2810 = vlaneseq
    %v2811 = vshrl.u32 %v2810, 7
    %v2812 = vsub.s32 0, %v2811
    %v2813 = vrot.slane %v2808, %v2812
    %2815 = vmatprep.subr.bf16.mxu0 0
    %2816 = vmatpush1.bf16.msra.mxu0 %v2800
    %2817 = vmatprep.subr.bf16.mxu0 0
    %2818 = vmatpush1.bf16.msra.mxu0 %v2801
    %2819 = vmatprep.subr.bf16.mxu0 0
    %2820 = vmatpush1.bf16.msra.mxu0 %v2802
    %2821 = vmatprep.subr.bf16.mxu0 0
    %2822 = vmatpush1.bf16.msra.mxu0 %v2803
    %2823 = vmatprep.subr.bf16.mxu0 0
    %2824 = vmatpush1.bf16.msra.mxu0 %v2804
    %2825 = vmatprep.subr.bf16.mxu0 0
    %2826 = vmatpush1.bf16.msra.mxu0 %v2805
    %2827 = vmatprep.subr.bf16.mxu0 0
    %2828 = vmatpush1.bf16.msra.mxu0 %v2806
    %2829 = vmatprep.subr.bf16.mxu0 0
    %2830 = vmatpush1.bf16.msra.mxu0 %v2807
    %2831 = vmatprep.subr.bf16.mxu0 0
    %2832 = vmatpush1.bf16.msra.mxu0 0
    %2833 = vmatprep.subr.bf16.mxu0 0
    %2834 = vmatpush1.bf16.msra.mxu0 0
    %2835 = vmatprep.subr.bf16.mxu0 0
    %2836 = vmatpush1.bf16.msra.mxu0 0
    %2837 = vmatprep.subr.bf16.mxu0 0
    %2838 = vmatpush1.bf16.msra.mxu0 0
    %2839 = vmatprep.subr.bf16.mxu0 0
    %2840 = vmatpush1.bf16.msra.mxu0 0
    %2841 = vmatprep.subr.bf16.mxu0 0
    %2842 = vmatpush1.bf16.msra.mxu0 0
    %2843 = vmatprep.subr.bf16.mxu0 0
    %2844 = vmatpush1.bf16.msra.mxu0 0
    %2845 = vmatprep.subr.bf16.mxu0 0
    %2846 = vmatpush1.bf16.msra.mxu0 0
    %2847 = vmatprep.mubr.bf16.mxu0 0
    %2848 = vmatmul.mubr.bf16.gmra.mrb[0].mxu0 %v2783
    %v2849 = vpop.f32.mrb[0].mxu0
    %v2850 = vadd.f32 %v2813, %v2849
    %v2851 = vpop.f32.mrb[0].mxu0
    %v2852 = vpop.f32.mrb[0].mxu0
    %v2853 = vpop.f32.mrb[0].mxu0
    %2854 = vdwg.mxu0
    %vm2855 = vcmask 74752
    %2856 = vst.msk [vmem:[#allocation4] sm:$0x3] %vm2855, %v2850
    // Predicated region
    $region74: #{san_forward.1} parent=1 // pred_check
      _
    $region75: #{san_forward.1} parent=1 // pred_check_branch
      %2858 = sbr.rel (0) target = $region77
    $region76: #{san_forward.1} parent=1 // pred_region
      %s2860 = ssub.s32 32, 32
      %2861 = vsyncadd [#allocation5], %s2860
      %s2863 = sshll.u32 [#allocation4], 4
      %s2864 = int_to_ptr.vmem [resolvable:$true] %s2863
      %2866 = dma.vmem_to_hbm [thread:$0]  %s2864, 32, %s18, [#allocation5]
    $region77: #{san_forward.1} parent=1 // pred_fallthru
      _
    // Predicated region
    $region78: #{san_forward.1} parent=1 // pred_check
      _
    $region79: #{san_forward.1} parent=1 // pred_check_branch
      %2868 = sbr.rel (0) target = $region81
    $region80: #{san_forward.1} parent=1 // pred_region
      %2869 = dma.done [#allocation5], 32
    $region81: #{san_forward.1} parent=1 // pred_fallthru
      _
    %2870 = vsyncpa [#allocation5], 1

</llo_original>
